<compile_context>
chip_gen: v6e
topology: v6e:2x2x1
jax: 0.10.0
libtpu: 0.0.40
codegen_flags: <defaults>
</compile_context>

<pallas_src>
import functools

import numpy as np
import jax
import jax.numpy as jnp
from jax import lax
from jax.experimental import pallas as pl
from jax.experimental.pallas import tpu as pltpu

EPS = 1e-5  # nn.BatchNorm2d default eps


def _bn_scale_shift(acc, gamma, beta, count):
    """Training-mode BatchNorm (biased variance) folded to per-column scale/shift."""
    inv = 1.0 / count
    s = jnp.sum(acc, axis=0, keepdims=True)
    ss = jnp.sum(acc * acc, axis=0, keepdims=True)
    mean = s * inv
    var = ss * inv - mean * mean          # biased variance (PyTorch training BN)
    scale = lax.rsqrt(var + EPS) * gamma
    shift = beta - mean * scale
    return scale, shift


def _contextnet_kernel(pat_ref, w1b_ref, w2_ref, s3_ref, w3_ref, bn_ref,
                       o_ref, g_ref, *, m1, m2, m3, c2, c3):
    """Fully fused ContextNet forward (4 matmuls total).

    pat_ref: [m2+m1, 81] bf16  rows [0,m2): per-tap conv1 patches for layer-2
                               positions; rows [m2,m2+m1): conv1 patches at all
                               layer-1 positions, replicated into all 9 tap blocks.
    w1b_ref: [81, 9*c1]  bf16  block-diagonal conv1 weight (block t = W1 [9,c1]).
    w2_ref:  [9*c1, c2]  bf16  conv2 weight, tap-major rows.
    s3_ref:  [9*m3, m2]  bf16  one-hot row-gather for layer 3 (stride-2 3x3 taps).
    w3_ref:  [9*c2, c3]  bf16  conv3 weight, tap-major rows.
    bn_ref:  [8, 9*c1]   f32   rows: gamma1/beta1 (tiled x9), gamma2/beta2, gamma3/beta3.
    o_ref:   [m3, c3]    f32   lane-dense output.
    g_ref:   [m3, 9*c2]  bf16  scratch: tap-major packed layer-3 input.
    """
    # ---- Layer 1 + layer-2 tap inputs: ONE block-diagonal matmul ----
    big = jnp.dot(pat_ref[...], w1b_ref[...], preferred_element_type=jnp.float32)
    a2 = big[0:m2, :]            # [m2, 9*c1] per-tap conv1 pre-activations
    acc1 = big[m2:m2 + m1, :]    # [m1, 9*c1] conv1 pre-activations (column-tiled x9)
    # BN1 stats: every column block is an exact copy of acc1, and gamma1/beta1
    # are pre-tiled host-side, so scale/shift come out already [1, 9*c1].
    sc1, sh1 = _bn_scale_shift(acc1, bn_ref[0:1, :], bn_ref[1:2, :], m1)
    z2 = jnp.maximum(a2 * sc1 + sh1, 0.0).astype(jnp.bfloat16)       # [m2, 9*c1]

    # ---- Layer 2: one deep-K matmul (K = 9*c1) ----
    acc2 = jnp.dot(z2, w2_ref[...], preferred_element_type=jnp.float32)   # [m2, c2]
    sc2, sh2 = _bn_scale_shift(acc2, bn_ref[2:3, 0:c2], bn_ref[3:4, 0:c2], m2)
    y2 = jnp.maximum(acc2 * sc2 + sh2, 0.0).astype(jnp.bfloat16)          # [m2, c2]

    # ---- Layer 3: one-hot gather (exact), pack tap-major along lanes,
    #      then one deep-K matmul (K = 9*c2) ----
    gath = jnp.dot(s3_ref[...], y2, preferred_element_type=jnp.float32)   # [9*m3, c2]
    for t in range(9):  # 128-lane-aligned sliced stores into bf16 scratch
        g_ref[:, t * c2:(t + 1) * c2] = (
            gath[t * m3:(t + 1) * m3, :].astype(jnp.bfloat16))
    acc3 = jnp.dot(g_ref[...], w3_ref[...], preferred_element_type=jnp.float32)
    sc3, sh3 = _bn_scale_shift(acc3, bn_ref[4:5, 0:c3], bn_ref[5:6, 0:c3], m3)
    o_ref[...] = jnp.maximum(acc3 * sc3 + sh3, 0.0).astype(o_ref.dtype)


# ---------------------------------------------------------------------------
# Host-side constant builders (pure numpy, become jit constants).
# ---------------------------------------------------------------------------

def _conv_out(s):
    return (s - 3) // 2 + 1


def _build_patch_indices(n, h, w):
    """Gather indices into flat x [n*h*w] producing the combined patch operand."""
    h1, w1 = _conv_out(h), _conv_out(w)
    h2, w2 = _conv_out(h1), _conv_out(w1)
    m1, m2 = n * h1 * w1, n * h2 * w2
    idx = np.zeros((m2 + m1, 81), np.int32)

    # rows [0, m2): tap-major conv1 patches at the layer-2 gather positions
    #   column t*9 + (u*3+v) for tap t=(kh,kw): input pixel feeding conv1-tap (u,v)
    #   of the conv1 output at spatial (2*i2+kh, 2*j2+kw).
    for b in range(n):
        for i2 in range(h2):
            for j2 in range(w2):
                r = (b * h2 + i2) * w2 + j2
                for kh in range(3):
                    for kw in range(3):
                        t = kh * 3 + kw
                        i1, j1 = 2 * i2 + kh, 2 * j2 + kw
                        for u in range(3):
                            for v in range(3):
                                idx[r, t * 9 + u * 3 + v] = (
                                    b * h * w + (2 * i1 + u) * w + (2 * j1 + v))

    # rows [m2, m2+m1): conv1 patches at every layer-1 position, replicated into
    # all 9 tap blocks so the block-diag matmul yields column-tiled BN1 stats.
    for b in range(n):
        for i1 in range(h1):
            for j1 in range(w1):
                r = m2 + (b * h1 + i1) * w1 + j1
                for u in range(3):
                    for v in range(3):
                        src = b * h * w + (2 * i1 + u) * w + (2 * j1 + v)
                        for t in range(9):
                            idx[r, t * 9 + u * 3 + v] = src
    return idx, (h1, w1, h2, w2, m1, m2)


def _build_s3(n, h2, w2, h3, w3):
    """[9*m3, m2] one-hot: row t*m3 + r3 selects layer-2 row (b, 2*i3+kh, 2*j3+kw)."""
    m2, m3 = n * h2 * w2, n * h3 * w3
    s3 = np.zeros((9 * m3, m2), np.float32)
    for kh in range(3):
        for kw in range(3):
            t = kh * 3 + kw
            for b in range(n):
                for i3 in range(h3):
                    for j3 in range(w3):
                        r3 = (b * h3 + i3) * w3 + j3
                        r2 = (b * h2 + 2 * i3 + kh) * w2 + (2 * j3 + kw)
                        s3[t * m3 + r3, r2] = 1.0
    return s3


def build_contextnet(params, n, h, w):
    """Precompute kernel constants and return a jitted forward(x_nchw)."""
    (cw1, g1, b1), (cw2, g2, b2), (cw3, g3, b3) = params
    c1, c2, c3 = cw1.shape[3], cw2.shape[3], cw3.shape[3]

    idx_np, (h1, w1s, h2, w2s, m1, m2) = _build_patch_indices(n, h, w)
    h3, w3s = _conv_out(h2), _conv_out(w2s)
    m3 = n * h3 * w3s

    # Block-diagonal conv1 weight: block t occupies rows t*9:(t+1)*9, cols t*c1:(t+1)*c1.
    w1m = np.asarray(cw1, np.float32).reshape(9, c1)
    w1big = np.zeros((81, 9 * c1), np.float32)
    for t in range(9):
        w1big[t * 9:(t + 1) * 9, t * c1:(t + 1) * c1] = w1m
    w2flat = np.asarray(cw2, np.float32).reshape(9 * c1, c2)   # tap-major rows (HWIO)
    w3flat = np.asarray(cw3, np.float32).reshape(9 * c2, c3)
    s3 = _build_s3(n, h2, w2s, h3, w3s)

    # Packed BN params (gamma1/beta1 pre-tiled x9 to match the tap-major columns).
    width = 9 * c1
    bn = np.zeros((8, width), np.float32)
    bn[0, :] = np.tile(np.asarray(g1, np.float32), 9)
    bn[1, :] = np.tile(np.asarray(b1, np.float32), 9)
    bn[2, :c2] = np.asarray(g2, np.float32)
    bn[3, :c2] = np.asarray(b2, np.float32)
    bn[4, :c3] = np.asarray(g3, np.float32)
    bn[5, :c3] = np.asarray(b3, np.float32)

    idx_c = jnp.asarray(idx_np)
    w1big_c = jnp.asarray(w1big, jnp.bfloat16)
    w2_c = jnp.asarray(w2flat, jnp.bfloat16)
    w3_c = jnp.asarray(w3flat, jnp.bfloat16)
    s3_c = jnp.asarray(s3, jnp.bfloat16)
    bn_c = jnp.asarray(bn, jnp.float32)

    kernel = functools.partial(_contextnet_kernel, m1=m1, m2=m2, m3=m3, c2=c2, c3=c3)
    vmem = pl.BlockSpec(memory_space=pltpu.MemorySpace.VMEM)   # whole-array blocks
    fused = pl.pallas_call(
        kernel,
        out_shape=jax.ShapeDtypeStruct((m3, c3), jnp.float32),
        in_specs=[vmem] * 6,
        out_specs=vmem,
        scratch_shapes=[pltpu.VMEM((m3, 9 * c2), jnp.bfloat16)],
    )

    @jax.jit
    def forward(x_nchw):
        # Single constant-index gather replaces transpose + 9-slice im2col + concat.
        pat = jnp.take(x_nchw.reshape(-1), idx_c, axis=0).astype(jnp.bfloat16)
        out = fused(pat, w1big_c, w2_c, s3_c, w3_c, bn_c)
        # rows of `out` are (b, i3, j3); match torch's x.view(N, -1) on NCHW.
        out = out.reshape(n, h3, w3s, c3).transpose(0, 3, 1, 2)
        return out.reshape(n, -1)

    return forward


# ---------------------------------------------------------------------------
# Parameters, pure-JAX reference, test driver
# ---------------------------------------------------------------------------

def init_params(key):
    """Conv weights: xavier_uniform (as in Block.__init__), stored HWIO.
    BN: PyTorch default init (gamma=1, beta=0)."""
    specs = [(1, 64), (64, 128), (128, 256)]
    params = []
    for cin, cout in specs:
        key, sub = jax.random.split(key)
        fan_in, fan_out = cin * 9, cout * 9
        bound = (6.0 / (fan_in + fan_out)) ** 0.5
        wgt = jax.random.uniform(sub, (3, 3, cin, cout), jnp.float32, -bound, bound)
        params.append((wgt, jnp.ones((cout,), jnp.float32), jnp.zeros((cout,), jnp.float32)))
    return params


def reference_forward(x_nchw, params):
    """Pure-JAX (f32, lax.conv) reference for correctness checking."""
    x = jnp.transpose(x_nchw, (0, 2, 3, 1))
    for wgt, gamma, beta in params:
        y = lax.conv_general_dilated(
            x, wgt, (2, 2), "VALID", dimension_numbers=("NHWC", "HWIO", "NHWC"))
        mean = jnp.mean(y, axis=(0, 1, 2), keepdims=True)
        var = jnp.mean((y - mean) ** 2, axis=(0, 1, 2), keepdims=True)
        x = jnp.maximum((y - mean) / jnp.sqrt(var + EPS) * gamma + beta, 0.0)
    x = jnp.transpose(x, (0, 3, 1, 2))
    return x.reshape(x.shape[0], -1)


if __name__ == "__main__":
    # MNIST-like input as in the PyTorch module: batch=2, 1 channel, 28x28 (NCHW).
    x = jax.random.normal(jax.random.PRNGKey(0), (2, 1, 28, 28), jnp.float32)
    params = init_params(jax.random.PRNGKey(1))

    forward = build_contextnet(params, n=2, h=28, w=28)
    out = jax.block_until_ready(forward(x))
    assert out.shape == (2, 256 * 2 * 2), out.shape

    ref = reference_forward(x, params)
    max_abs = float(jnp.max(jnp.abs(out - ref)))
    ref_scale = max(float(jnp.max(jnp.abs(ref))), 1e-6)
    rel = max_abs / ref_scale
    # bf16 MXU operands vs. f32 reference -> allow a few tenths of a percent.
    assert rel < 3e-2, f"relative error {rel} (max abs {max_abs})"

    print("KERNEL_OK")
</pallas_src>

<mosaic_0001>
module attributes {stable_mosaic.version = 11 : i64} {
  func.func @_contextnet_kernel(%arg0: memref<410x81xbf16, #tpu.memory_space<vmem>>, %arg1: memref<81x576xbf16, #tpu.memory_space<vmem>>, %arg2: memref<576x128xbf16, #tpu.memory_space<vmem>>, %arg3: memref<72x72xbf16, #tpu.memory_space<vmem>>, %arg4: memref<1152x256xbf16, #tpu.memory_space<vmem>>, %arg5: memref<8x576xf32, #tpu.memory_space<vmem>>, %arg6: memref<8x256xf32, #tpu.memory_space<vmem>>, %arg7: memref<8x1152xbf16, #tpu.memory_space<vmem>>) attributes {dimension_semantics = [], scalar_prefetch = 0 : i64, scratch_operands = 1 : i64, tpu.core_type = #tpu.core_type<tc>} {
    %c0 = arith.constant 0 : index
    %c0_0 = arith.constant 0 : index
    %0 = vector.load %arg0[%c0, %c0_0] : memref<410x81xbf16, #tpu.memory_space<vmem>>, vector<410x81xbf16>
    %c0_1 = arith.constant 0 : index
    %c0_2 = arith.constant 0 : index
    %1 = vector.load %arg1[%c0_1, %c0_2] : memref<81x576xbf16, #tpu.memory_space<vmem>>, vector<81x576xbf16>
    %cst = arith.constant dense<0.000000e+00> : vector<410x576xf32>
    %2 = tpu.matmul %0, %1, %cst {dimension_numbers = #tpu.dot_dimension_numbers<[1], [0], [0], [1], [0, 0, 1, 1], [], []>} : vector<410x81xbf16>, vector<81x576xbf16>, vector<410x576xf32> -> vector<410x576xf32>
    %3 = vector.extract_strided_slice %2 {offsets = [0, 0], sizes = [72, 576], strides = [1, 1]} : vector<410x576xf32> to vector<72x576xf32>
    %4 = vector.extract_strided_slice %2 {offsets = [72, 0], sizes = [338, 576], strides = [1, 1]} : vector<410x576xf32> to vector<338x576xf32>
    %c0_3 = arith.constant 0 : index
    %c0_4 = arith.constant 0 : index
    %5 = vector.load %arg5[%c0_3, %c0_4] : memref<8x576xf32, #tpu.memory_space<vmem>>, vector<1x576xf32>
    %c1 = arith.constant 1 : index
    %c0_5 = arith.constant 0 : index
    %6 = vector.load %arg5[%c1, %c0_5] : memref<8x576xf32, #tpu.memory_space<vmem>>, vector<1x576xf32>
    %cst_6 = arith.constant dense<0.000000e+00> : vector<576xf32>
    %7 = vector.multi_reduction <add>, %4, %cst_6 [0] : vector<338x576xf32> to vector<576xf32>
    %8 = vector.shape_cast %7 : vector<576xf32> to vector<1x576xf32>
    %9 = arith.mulf %4, %4 : vector<338x576xf32>
    %cst_7 = arith.constant dense<0.000000e+00> : vector<576xf32>
    %10 = vector.multi_reduction <add>, %9, %cst_7 [0] : vector<338x576xf32> to vector<576xf32>
    %11 = vector.shape_cast %10 : vector<576xf32> to vector<1x576xf32>
    %cst_8 = arith.constant 2.958580e-03 : f32
    %12 = vector.broadcast %cst_8 : f32 to vector<1x576xf32>
    %13 = arith.mulf %8, %12 : vector<1x576xf32>
    %cst_9 = arith.constant 2.958580e-03 : f32
    %14 = vector.broadcast %cst_9 : f32 to vector<1x576xf32>
    %15 = arith.mulf %11, %14 : vector<1x576xf32>
    %16 = arith.mulf %13, %13 : vector<1x576xf32>
    %17 = arith.subf %15, %16 : vector<1x576xf32>
    %cst_10 = arith.constant 9.99999974E-6 : f32
    %18 = vector.broadcast %cst_10 : f32 to vector<1x576xf32>
    %19 = arith.addf %17, %18 : vector<1x576xf32>
    %20 = math.rsqrt %19 : vector<1x576xf32>
    %21 = arith.mulf %20, %5 : vector<1x576xf32>
    %22 = arith.mulf %13, %21 : vector<1x576xf32>
    %23 = arith.subf %6, %22 : vector<1x576xf32>
    %24 = vector.broadcast %21 : vector<1x576xf32> to vector<72x576xf32>
    %25 = arith.mulf %3, %24 : vector<72x576xf32>
    %26 = vector.broadcast %23 : vector<1x576xf32> to vector<72x576xf32>
    %27 = arith.addf %25, %26 : vector<72x576xf32>
    %cst_11 = arith.constant 0.000000e+00 : f32
    %28 = vector.broadcast %cst_11 : f32 to vector<72x576xf32>
    %29 = arith.maximumf %27, %28 : vector<72x576xf32>
    %30 = arith.truncf %29 : vector<72x576xf32> to vector<72x576xbf16>
    %c0_12 = arith.constant 0 : index
    %c0_13 = arith.constant 0 : index
    %31 = vector.load %arg2[%c0_12, %c0_13] : memref<576x128xbf16, #tpu.memory_space<vmem>>, vector<576x128xbf16>
    %cst_14 = arith.constant dense<0.000000e+00> : vector<72x128xf32>
    %32 = tpu.matmul %30, %31, %cst_14 {dimension_numbers = #tpu.dot_dimension_numbers<[1], [0], [0], [1], [0, 0, 1, 1], [], []>} : vector<72x576xbf16>, vector<576x128xbf16>, vector<72x128xf32> -> vector<72x128xf32>
    %c2 = arith.constant 2 : index
    %c0_15 = arith.constant 0 : index
    %33 = vector.load %arg5[%c2, %c0_15] : memref<8x576xf32, #tpu.memory_space<vmem>>, vector<1x128xf32>
    %c3 = arith.constant 3 : index
    %c0_16 = arith.constant 0 : index
    %34 = vector.load %arg5[%c3, %c0_16] : memref<8x576xf32, #tpu.memory_space<vmem>>, vector<1x128xf32>
    %cst_17 = arith.constant dense<0.000000e+00> : vector<128xf32>
    %35 = vector.multi_reduction <add>, %32, %cst_17 [0] : vector<72x128xf32> to vector<128xf32>
    %36 = vector.shape_cast %35 : vector<128xf32> to vector<1x128xf32>
    %37 = arith.mulf %32, %32 : vector<72x128xf32>
    %cst_18 = arith.constant dense<0.000000e+00> : vector<128xf32>
    %38 = vector.multi_reduction <add>, %37, %cst_18 [0] : vector<72x128xf32> to vector<128xf32>
    %39 = vector.shape_cast %38 : vector<128xf32> to vector<1x128xf32>
    %cst_19 = arith.constant 0.013888889 : f32
    %40 = vector.broadcast %cst_19 : f32 to vector<1x128xf32>
    %41 = arith.mulf %36, %40 : vector<1x128xf32>
    %cst_20 = arith.constant 0.013888889 : f32
    %42 = vector.broadcast %cst_20 : f32 to vector<1x128xf32>
    %43 = arith.mulf %39, %42 : vector<1x128xf32>
    %44 = arith.mulf %41, %41 : vector<1x128xf32>
    %45 = arith.subf %43, %44 : vector<1x128xf32>
    %cst_21 = arith.constant 9.99999974E-6 : f32
    %46 = vector.broadcast %cst_21 : f32 to vector<1x128xf32>
    %47 = arith.addf %45, %46 : vector<1x128xf32>
    %48 = math.rsqrt %47 : vector<1x128xf32>
    %49 = arith.mulf %48, %33 : vector<1x128xf32>
    %50 = arith.mulf %41, %49 : vector<1x128xf32>
    %51 = arith.subf %34, %50 : vector<1x128xf32>
    %52 = vector.broadcast %49 : vector<1x128xf32> to vector<72x128xf32>
    %53 = arith.mulf %32, %52 : vector<72x128xf32>
    %54 = vector.broadcast %51 : vector<1x128xf32> to vector<72x128xf32>
    %55 = arith.addf %53, %54 : vector<72x128xf32>
    %cst_22 = arith.constant 0.000000e+00 : f32
    %56 = vector.broadcast %cst_22 : f32 to vector<72x128xf32>
    %57 = arith.maximumf %55, %56 : vector<72x128xf32>
    %58 = arith.truncf %57 : vector<72x128xf32> to vector<72x128xbf16>
    %c0_23 = arith.constant 0 : index
    %c0_24 = arith.constant 0 : index
    %59 = vector.load %arg3[%c0_23, %c0_24] : memref<72x72xbf16, #tpu.memory_space<vmem>>, vector<72x72xbf16>
    %cst_25 = arith.constant dense<0.000000e+00> : vector<72x128xf32>
    %60 = tpu.matmul %59, %58, %cst_25 {dimension_numbers = #tpu.dot_dimension_numbers<[1], [0], [0], [1], [0, 0, 1, 1], [], []>} : vector<72x72xbf16>, vector<72x128xbf16>, vector<72x128xf32> -> vector<72x128xf32>
    %61 = vector.extract_strided_slice %60 {offsets = [0, 0], sizes = [8, 128], strides = [1, 1]} : vector<72x128xf32> to vector<8x128xf32>
    %62 = arith.truncf %61 : vector<8x128xf32> to vector<8x128xbf16>
    %c0_26 = arith.constant 0 : index
    %c0_27 = arith.constant 0 : index
    %63 = vector.load %arg7[%c0_26, %c0_27] : memref<8x1152xbf16, #tpu.memory_space<vmem>>, vector<8x128xbf16>
    tpu.vector_store %arg7[%c0_26, %c0_27], %62 {strides = array<i32>} : memref<8x1152xbf16, #tpu.memory_space<vmem>>, vector<8x128xbf16>,
    %64 = vector.extract_strided_slice %60 {offsets = [8, 0], sizes = [8, 128], strides = [1, 1]} : vector<72x128xf32> to vector<8x128xf32>
    %65 = arith.truncf %64 : vector<8x128xf32> to vector<8x128xbf16>
    %c0_28 = arith.constant 0 : index
    %c128 = arith.constant 128 : index
    %66 = vector.load %arg7[%c0_28, %c128] : memref<8x1152xbf16, #tpu.memory_space<vmem>>, vector<8x128xbf16>
    tpu.vector_store %arg7[%c0_28, %c128], %65 {strides = array<i32>} : memref<8x1152xbf16, #tpu.memory_space<vmem>>, vector<8x128xbf16>,
    %67 = vector.extract_strided_slice %60 {offsets = [16, 0], sizes = [8, 128], strides = [1, 1]} : vector<72x128xf32> to vector<8x128xf32>
    %68 = arith.truncf %67 : vector<8x128xf32> to vector<8x128xbf16>
    %c0_29 = arith.constant 0 : index
    %c256 = arith.constant 256 : index
    %69 = vector.load %arg7[%c0_29, %c256] : memref<8x1152xbf16, #tpu.memory_space<vmem>>, vector<8x128xbf16>
    tpu.vector_store %arg7[%c0_29, %c256], %68 {strides = array<i32>} : memref<8x1152xbf16, #tpu.memory_space<vmem>>, vector<8x128xbf16>,
    %70 = vector.extract_strided_slice %60 {offsets = [24, 0], sizes = [8, 128], strides = [1, 1]} : vector<72x128xf32> to vector<8x128xf32>
    %71 = arith.truncf %70 : vector<8x128xf32> to vector<8x128xbf16>
    %c0_30 = arith.constant 0 : index
    %c384 = arith.constant 384 : index
    %72 = vector.load %arg7[%c0_30, %c384] : memref<8x1152xbf16, #tpu.memory_space<vmem>>, vector<8x128xbf16>
    tpu.vector_store %arg7[%c0_30, %c384], %71 {strides = array<i32>} : memref<8x1152xbf16, #tpu.memory_space<vmem>>, vector<8x128xbf16>,
    %73 = vector.extract_strided_slice %60 {offsets = [32, 0], sizes = [8, 128], strides = [1, 1]} : vector<72x128xf32> to vector<8x128xf32>
    %74 = arith.truncf %73 : vector<8x128xf32> to vector<8x128xbf16>
    %c0_31 = arith.constant 0 : index
    %c512 = arith.constant 512 : index
    %75 = vector.load %arg7[%c0_31, %c512] : memref<8x1152xbf16, #tpu.memory_space<vmem>>, vector<8x128xbf16>
    tpu.vector_store %arg7[%c0_31, %c512], %74 {strides = array<i32>} : memref<8x1152xbf16, #tpu.memory_space<vmem>>, vector<8x128xbf16>,
    %76 = vector.extract_strided_slice %60 {offsets = [40, 0], sizes = [8, 128], strides = [1, 1]} : vector<72x128xf32> to vector<8x128xf32>
    %77 = arith.truncf %76 : vector<8x128xf32> to vector<8x128xbf16>
    %c0_32 = arith.constant 0 : index
    %c640 = arith.constant 640 : index
    %78 = vector.load %arg7[%c0_32, %c640] : memref<8x1152xbf16, #tpu.memory_space<vmem>>, vector<8x128xbf16>
    tpu.vector_store %arg7[%c0_32, %c640], %77 {strides = array<i32>} : memref<8x1152xbf16, #tpu.memory_space<vmem>>, vector<8x128xbf16>,
    %79 = vector.extract_strided_slice %60 {offsets = [48, 0], sizes = [8, 128], strides = [1, 1]} : vector<72x128xf32> to vector<8x128xf32>
    %80 = arith.truncf %79 : vector<8x128xf32> to vector<8x128xbf16>
    %c0_33 = arith.constant 0 : index
    %c768 = arith.constant 768 : index
    %81 = vector.load %arg7[%c0_33, %c768] : memref<8x1152xbf16, #tpu.memory_space<vmem>>, vector<8x128xbf16>
    tpu.vector_store %arg7[%c0_33, %c768], %80 {strides = array<i32>} : memref<8x1152xbf16, #tpu.memory_space<vmem>>, vector<8x128xbf16>,
    %82 = vector.extract_strided_slice %60 {offsets = [56, 0], sizes = [8, 128], strides = [1, 1]} : vector<72x128xf32> to vector<8x128xf32>
    %83 = arith.truncf %82 : vector<8x128xf32> to vector<8x128xbf16>
    %c0_34 = arith.constant 0 : index
    %c896 = arith.constant 896 : index
    %84 = vector.load %arg7[%c0_34, %c896] : memref<8x1152xbf16, #tpu.memory_space<vmem>>, vector<8x128xbf16>
    tpu.vector_store %arg7[%c0_34, %c896], %83 {strides = array<i32>} : memref<8x1152xbf16, #tpu.memory_space<vmem>>, vector<8x128xbf16>,
    %85 = vector.extract_strided_slice %60 {offsets = [64, 0], sizes = [8, 128], strides = [1, 1]} : vector<72x128xf32> to vector<8x128xf32>
    %86 = arith.truncf %85 : vector<8x128xf32> to vector<8x128xbf16>
    %c0_35 = arith.constant 0 : index
    %c1024 = arith.constant 1024 : index
    %87 = vector.load %arg7[%c0_35, %c1024] : memref<8x1152xbf16, #tpu.memory_space<vmem>>, vector<8x128xbf16>
    tpu.vector_store %arg7[%c0_35, %c1024], %86 {strides = array<i32>} : memref<8x1152xbf16, #tpu.memory_space<vmem>>, vector<8x128xbf16>,
    %c0_36 = arith.constant 0 : index
    %c0_37 = arith.constant 0 : index
    %88 = vector.load %arg7[%c0_36, %c0_37] : memref<8x1152xbf16, #tpu.memory_space<vmem>>, vector<8x1152xbf16>
    %c0_38 = arith.constant 0 : index
    %c0_39 = arith.constant 0 : index
    %89 = vector.load %arg4[%c0_38, %c0_39] : memref<1152x256xbf16, #tpu.memory_space<vmem>>, vector<1152x256xbf16>
    %cst_40 = arith.constant dense<0.000000e+00> : vector<8x256xf32>
    %90 = tpu.matmul %88, %89, %cst_40 {dimension_numbers = #tpu.dot_dimension_numbers<[1], [0], [0], [1], [0, 0, 1, 1], [], []>} : vector<8x1152xbf16>, vector<1152x256xbf16>, vector<8x256xf32> -> vector<8x256xf32>
    %c4 = arith.constant 4 : index
    %c0_41 = arith.constant 0 : index
    %91 = vector.load %arg5[%c4, %c0_41] : memref<8x576xf32, #tpu.memory_space<vmem>>, vector<1x256xf32>
    %c5 = arith.constant 5 : index
    %c0_42 = arith.constant 0 : index
    %92 = vector.load %arg5[%c5, %c0_42] : memref<8x576xf32, #tpu.memory_space<vmem>>, vector<1x256xf32>
    %cst_43 = arith.constant dense<0.000000e+00> : vector<256xf32>
    %93 = vector.multi_reduction <add>, %90, %cst_43 [0] : vector<8x256xf32> to vector<256xf32>
    %94 = vector.shape_cast %93 : vector<256xf32> to vector<1x256xf32>
    %95 = arith.mulf %90, %90 : vector<8x256xf32>
    %cst_44 = arith.constant dense<0.000000e+00> : vector<256xf32>
    %96 = vector.multi_reduction <add>, %95, %cst_44 [0] : vector<8x256xf32> to vector<256xf32>
    %97 = vector.shape_cast %96 : vector<256xf32> to vector<1x256xf32>
    %cst_45 = arith.constant 1.250000e-01 : f32
    %98 = vector.broadcast %cst_45 : f32 to vector<1x256xf32>
    %99 = arith.mulf %94, %98 : vector<1x256xf32>
    %cst_46 = arith.constant 1.250000e-01 : f32
    %100 = vector.broadcast %cst_46 : f32 to vector<1x256xf32>
    %101 = arith.mulf %97, %100 : vector<1x256xf32>
    %102 = arith.mulf %99, %99 : vector<1x256xf32>
    %103 = arith.subf %101, %102 : vector<1x256xf32>
    %cst_47 = arith.constant 9.99999974E-6 : f32
    %104 = vector.broadcast %cst_47 : f32 to vector<1x256xf32>
    %105 = arith.addf %103, %104 : vector<1x256xf32>
    %106 = math.rsqrt %105 : vector<1x256xf32>
    %107 = arith.mulf %106, %91 : vector<1x256xf32>
    %108 = arith.mulf %99, %107 : vector<1x256xf32>
    %109 = arith.subf %92, %108 : vector<1x256xf32>
    %110 = vector.broadcast %107 : vector<1x256xf32> to vector<8x256xf32>
    %111 = arith.mulf %90, %110 : vector<8x256xf32>
    %112 = vector.broadcast %109 : vector<1x256xf32> to vector<8x256xf32>
    %113 = arith.addf %111, %112 : vector<8x256xf32>
    %cst_48 = arith.constant 0.000000e+00 : f32
    %114 = vector.broadcast %cst_48 : f32 to vector<8x256xf32>
    %115 = arith.maximumf %113, %114 : vector<8x256xf32>
    %c0_49 = arith.constant 0 : index
    %c0_50 = arith.constant 0 : index
    %116 = vector.load %arg6[%c0_49, %c0_50] : memref<8x256xf32, #tpu.memory_space<vmem>>, vector<8x256xf32>
    tpu.vector_store %arg6[%c0_49, %c0_50], %115 {strides = array<i32>} : memref<8x256xf32, #tpu.memory_space<vmem>>, vector<8x256xf32>,
    return
  }
}

</mosaic_0001>

<llo_original>
// kernel: forward.1
$region0: #{forward.1}
  #allocation0 [shape = 'u32[]', space=smem, size = 0x4, offset = 0x4, fixed_abs, tag = 'smem constant byte address 0x4 - core index']
  #allocation1 [shape = 'u32[144,128]{1,0:T(1,128)}', space=vmem, size = 0x12000, scoped, tag = 'internal scratch']
  #allocation2 [shape = 'bf16[8,1152]{1,0:T(8,128)(2,1)}', space=vmem, size = 0x4800, scoped, tag = 'scratch operand']
  %s0 = inlined_call_operand.vmem [shape: bf16[410,81], index: 0, kind: input, shape index: {}]
  %s1 = inlined_call_operand.vmem [shape: bf16[81,576], index: 1, kind: input, shape index: {}]
  %s2 = inlined_call_operand.vmem [shape: bf16[576,128], index: 2, kind: input, shape index: {}]
  %s3 = inlined_call_operand.vmem [shape: bf16[72,72], index: 3, kind: input, shape index: {}]
  %s4 = inlined_call_operand.vmem [shape: bf16[1152,256], index: 4, kind: input, shape index: {}]
  %s5 = inlined_call_operand.vmem [shape: f32[8,576], index: 5, kind: input, shape index: {}]
  %s6 = inlined_call_operand.vmem [shape: f32[8,256], index: 6, kind: output, shape index: {}]
  %s7 = sld [smem:[#allocation0]]
  $region34: #{forward.1} parent=0
    _
  %s9 = ssub.s32 1, %s7
  %s10 = scalar_select 0, %s9, %s7
  // Predicated region
  $region2: #{forward.1} parent=0 // pred_check
    _
  $region3: #{forward.1} parent=0 // pred_check_branch
    %12 = sbr.rel (0) target = $region5
  $region4: #{forward.1} parent=0 // pred_region
    _
  $region5: #{forward.1} parent=0 // pred_fallthru
    _
  // Predicated region
  $region6: #{forward.1} parent=0 // pred_check
    _
  $region7: #{forward.1} parent=0 // pred_check_branch
    %14 = sbr.rel (0) target = $region9
  $region8: #{forward.1} parent=0 // pred_region
    _
  $region9: #{forward.1} parent=0 // pred_fallthru
    _
  // Predicated region
  $region10: #{forward.1} parent=0 // pred_check
    _
  $region11: #{forward.1} parent=0 // pred_check_branch
    %16 = sbr.rel (0) target = $region13
  $region12: #{forward.1} parent=0 // pred_region
    _
  $region13: #{forward.1} parent=0 // pred_fallthru
    _
  // Predicated region
  $region14: #{forward.1} parent=0 // pred_check
    _
  $region15: #{forward.1} parent=0 // pred_check_branch
    %18 = sbr.rel (0) target = $region17
  $region16: #{forward.1} parent=0 // pred_region
    _
  $region17: #{forward.1} parent=0 // pred_fallthru
    _
  // Predicated region
  $region18: #{forward.1} parent=0 // pred_check
    _
  $region19: #{forward.1} parent=0 // pred_check_branch
    %20 = sbr.rel (0) target = $region21
  $region20: #{forward.1} parent=0 // pred_region
    _
  $region21: #{forward.1} parent=0 // pred_fallthru
    _
  // Predicated region
  $region22: #{forward.1} parent=0 // pred_check
    _
  $region23: #{forward.1} parent=0 // pred_check_branch
    %22 = sbr.rel (0) target = $region25
  $region24: #{forward.1} parent=0 // pred_region
    _
  $region25: #{forward.1} parent=0 // pred_fallthru
    _
  %v24 = vld [vmem:[%s0] sm:$0xf]
  %v25 = vld [vmem:[%s0 + $0x4] sm:$0xf]
  %v26 = vld [vmem:[%s0 + $0x8] sm:$0xf]
  %v27 = vld [vmem:[%s0 + $0xc] sm:$0xf]
  %v28 = vld [vmem:[%s0 + $0x10] sm:$0xf]
  %v29 = vld [vmem:[%s0 + $0x14] sm:$0xf]
  %v30 = vld [vmem:[%s0 + $0x18] sm:$0xf]
  %v31 = vld [vmem:[%s0 + $0x1c] sm:$0xf]
  %v32 = vld [vmem:[%s0 + $0x20] sm:$0xf]
  %v33 = vld [vmem:[%s0 + $0x24] sm:$0xf]
  %v34 = vld [vmem:[%s0 + $0x28] sm:$0xf]
  %v35 = vld [vmem:[%s0 + $0x2c] sm:$0xf]
  %v36 = vld [vmem:[%s0 + $0x30] sm:$0xf]
  %v37 = vld [vmem:[%s0 + $0x34] sm:$0xf]
  %v38 = vld [vmem:[%s0 + $0x38] sm:$0xf]
  %v39 = vld [vmem:[%s0 + $0x3c] sm:$0xf]
  %v40 = vld [vmem:[%s0 + $0x40] sm:$0xf]
  %v41 = vld [vmem:[%s0 + $0x44] sm:$0xf]
  %v42 = vld [vmem:[%s0 + $0x48] sm:$0xf]
  %v43 = vld [vmem:[%s0 + $0x4c] sm:$0xf]
  %v44 = vld [vmem:[%s0 + $0x50] sm:$0xf]
  %v45 = vld [vmem:[%s0 + $0x54] sm:$0xf]
  %v46 = vld [vmem:[%s0 + $0x58] sm:$0xf]
  %v47 = vld [vmem:[%s0 + $0x5c] sm:$0xf]
  %v48 = vld [vmem:[%s0 + $0x60] sm:$0xf]
  %v49 = vld [vmem:[%s0 + $0x64] sm:$0xf]
  %v50 = vld [vmem:[%s0 + $0x68] sm:$0xf]
  %v51 = vld [vmem:[%s0 + $0x6c] sm:$0xf]
  %v52 = vld [vmem:[%s0 + $0x70] sm:$0xf]
  %v53 = vld [vmem:[%s0 + $0x74] sm:$0xf]
  %v54 = vld [vmem:[%s0 + $0x78] sm:$0xf]
  %v55 = vld [vmem:[%s0 + $0x7c] sm:$0xf]
  %v56 = vld [vmem:[%s0 + $0x80] sm:$0xf]
  %v57 = vld [vmem:[%s0 + $0x84] sm:$0xf]
  %v58 = vld [vmem:[%s0 + $0x88] sm:$0xf]
  %v59 = vld [vmem:[%s0 + $0x8c] sm:$0xf]
  %v60 = vld [vmem:[%s0 + $0x90] sm:$0xf]
  %v61 = vld [vmem:[%s0 + $0x94] sm:$0xf]
  %v62 = vld [vmem:[%s0 + $0x98] sm:$0xf]
  %v63 = vld [vmem:[%s0 + $0x9c] sm:$0xf]
  %v64 = vld [vmem:[%s0 + $0xa0] sm:$0xf]
  %v65 = vld [vmem:[%s0 + $0xa4] sm:$0xf]
  %v66 = vld [vmem:[%s0 + $0xa8] sm:$0xf]
  %v67 = vld [vmem:[%s0 + $0xac] sm:$0xf]
  %v68 = vld [vmem:[%s0 + $0xb0] sm:$0xf]
  %v69 = vld [vmem:[%s0 + $0xb4] sm:$0xf]
  %v70 = vld [vmem:[%s0 + $0xb8] sm:$0xf]
  %v71 = vld [vmem:[%s0 + $0xbc] sm:$0xf]
  %v72 = vld [vmem:[%s0 + $0xc0] sm:$0xf]
  %v73 = vld [vmem:[%s0 + $0xc4] sm:$0xf]
  %v74 = vld [vmem:[%s0 + $0xc8] sm:$0xf]
  %v75 = vld [vmem:[%s0 + $0xcc] sm:$0x1]
  %v76 = vld [vmem:[%s1] sm:$0xff]
  %v77 = vld [vmem:[%s1 + $0x8] sm:$0xff]
  %v78 = vld [vmem:[%s1 + $0x10] sm:$0xf]
  %v79 = vld [vmem:[%s1 + $0x14] sm:$0xff]
  %v80 = vld [vmem:[%s1 + $0x1c] sm:$0xff]
  %v81 = vld [vmem:[%s1 + $0x24] sm:$0xf]
  %v82 = vld [vmem:[%s1 + $0x28] sm:$0xff]
  %v83 = vld [vmem:[%s1 + $0x30] sm:$0xff]
  %v84 = vld [vmem:[%s1 + $0x38] sm:$0xf]
  %v85 = vld [vmem:[%s1 + $0x3c] sm:$0xff]
  %v86 = vld [vmem:[%s1 + $0x44] sm:$0xff]
  %v87 = vld [vmem:[%s1 + $0x4c] sm:$0xf]
  %v88 = vld [vmem:[%s1 + $0x50] sm:$0xff]
  %v89 = vld [vmem:[%s1 + $0x58] sm:$0xff]
  %v90 = vld [vmem:[%s1 + $0x60] sm:$0xf]
  %v91 = vld [vmem:[%s1 + $0x64] sm:$0xff]
  %v92 = vld [vmem:[%s1 + $0x6c] sm:$0xff]
  %v93 = vld [vmem:[%s1 + $0x74] sm:$0xf]
  %v94 = vld [vmem:[%s1 + $0x78] sm:$0xff]
  %v95 = vld [vmem:[%s1 + $0x80] sm:$0xff]
  %v96 = vld [vmem:[%s1 + $0x88] sm:$0xf]
  %v97 = vld [vmem:[%s1 + $0x8c] sm:$0xff]
  %v98 = vld [vmem:[%s1 + $0x94] sm:$0xff]
  %v99 = vld [vmem:[%s1 + $0x9c] sm:$0xf]
  %v100 = vld [vmem:[%s1 + $0xa0] sm:$0xff]
  %v101 = vld [vmem:[%s1 + $0xa8] sm:$0xff]
  %v102 = vld [vmem:[%s1 + $0xb0] sm:$0xf]
  %v103 = vld [vmem:[%s1 + $0xb4] sm:$0xff]
  %v104 = vld [vmem:[%s1 + $0xbc] sm:$0xff]
  %v105 = vld [vmem:[%s1 + $0xc4] sm:$0xf]
  %v106 = vld [vmem:[%s1 + $0xc8] sm:$0x11]
  %v107 = vld [vmem:[%s1 + $0xd0] sm:$0x11]
  %v108 = vld [vmem:[%s1 + $0xd8] sm:$0x1]
  %v161 = vunpack.c.l.b16 %v24
  %v162 = vunpack.c.l.b16 %v25
  %v163 = vunpack.c.l.b16 %v26
  %v164 = vunpack.c.l.b16 %v27
  %v165 = vunpack.c.l.b16 %v28
  %v166 = vunpack.c.l.b16 %v29
  %v167 = vunpack.c.l.b16 %v30
  %v168 = vunpack.c.l.b16 %v31
  %v169 = vunpack.c.l.b16 %v32
  %v170 = vunpack.c.l.b16 %v33
  %v171 = vunpack.c.l.b16 %v34
  %v172 = vunpack.c.l.b16 %v35
  %v173 = vunpack.c.l.b16 %v36
  %v174 = vunpack.c.l.b16 %v37
  %v175 = vunpack.c.l.b16 %v38
  %v176 = vunpack.c.l.b16 %v39
  %v177 = vunpack.c.l.b16 %v40
  %v178 = vunpack.c.l.b16 %v41
  %v179 = vunpack.c.l.b16 %v42
  %v180 = vunpack.c.l.b16 %v43
  %v181 = vunpack.c.l.b16 %v44
  %v182 = vunpack.c.l.b16 %v45
  %v183 = vunpack.c.l.b16 %v46
  %v184 = vunpack.c.l.b16 %v47
  %v185 = vunpack.c.l.b16 %v48
  %v186 = vunpack.c.l.b16 %v49
  %v187 = vunpack.c.l.b16 %v50
  %v188 = vunpack.c.l.b16 %v51
  %v189 = vunpack.c.l.b16 %v52
  %v190 = vunpack.c.l.b16 %v53
  %v191 = vunpack.c.l.b16 %v54
  %v192 = vunpack.c.l.b16 %v55
  %v193 = vunpack.c.l.b16 %v56
  %v194 = vunpack.c.l.b16 %v57
  %v195 = vunpack.c.l.b16 %v58
  %v196 = vunpack.c.l.b16 %v59
  %v197 = vunpack.c.l.b16 %v60
  %v198 = vunpack.c.l.b16 %v61
  %v199 = vunpack.c.l.b16 %v62
  %v200 = vunpack.c.l.b16 %v63
  %v201 = vunpack.c.l.b16 %v64
  %v202 = vunpack.c.l.b16 %v65
  %v203 = vunpack.c.l.b16 %v66
  %v204 = vunpack.c.l.b16 %v67
  %v205 = vunpack.c.l.b16 %v68
  %v206 = vunpack.c.l.b16 %v69
  %v207 = vunpack.c.l.b16 %v70
  %v208 = vunpack.c.l.b16 %v71
  %v209 = vunpack.c.l.b16 %v72
  %v210 = vunpack.c.l.b16 %v73
  %v211 = vunpack.c.l.b16 %v74
  %v212 = vunpack.c.l.b16 %v75
  %v213 = vpack.c.b16 %v162, %v161
  %v214 = vpack.c.b16 %v164, %v163
  %v215 = vpack.c.b16 %v166, %v165
  %v216 = vpack.c.b16 %v168, %v167
  %v217 = vpack.c.b16 %v170, %v169
  %v218 = vpack.c.b16 %v172, %v171
  %v219 = vpack.c.b16 %v174, %v173
  %v220 = vpack.c.b16 %v176, %v175
  %v221 = vpack.c.b16 %v178, %v177
  %v222 = vpack.c.b16 %v180, %v179
  %v223 = vpack.c.b16 %v182, %v181
  %v224 = vpack.c.b16 %v184, %v183
  %v225 = vpack.c.b16 %v186, %v185
  %v226 = vpack.c.b16 %v188, %v187
  %v227 = vpack.c.b16 %v190, %v189
  %v228 = vpack.c.b16 %v192, %v191
  %v229 = vpack.c.b16 %v194, %v193
  %v230 = vpack.c.b16 %v196, %v195
  %v231 = vpack.c.b16 %v198, %v197
  %v232 = vpack.c.b16 %v200, %v199
  %v233 = vpack.c.b16 %v202, %v201
  %v234 = vpack.c.b16 %v204, %v203
  %v235 = vpack.c.b16 %v206, %v205
  %v236 = vpack.c.b16 %v208, %v207
  %v237 = vpack.c.b16 %v210, %v209
  %v238 = vpack.c.b16 %v212, %v211
  %v272 = vunpack.c.l.b16 %v76
  %v273 = vunpack.c.h.b16 %v76
  %v274 = vunpack.c.l.b16 %v77
  %v275 = vunpack.c.h.b16 %v77
  %v276 = vunpack.c.l.b16 %v78
  %v277 = vunpack.c.l.b16 %v79
  %v278 = vunpack.c.h.b16 %v79
  %v279 = vunpack.c.l.b16 %v80
  %v280 = vunpack.c.h.b16 %v80
  %v281 = vunpack.c.l.b16 %v81
  %v282 = vunpack.c.l.b16 %v82
  %v283 = vunpack.c.h.b16 %v82
  %v284 = vunpack.c.l.b16 %v83
  %v285 = vunpack.c.h.b16 %v83
  %v286 = vunpack.c.l.b16 %v84
  %v287 = vunpack.c.l.b16 %v85
  %v288 = vunpack.c.h.b16 %v85
  %v289 = vunpack.c.l.b16 %v86
  %v290 = vunpack.c.h.b16 %v86
  %v291 = vunpack.c.l.b16 %v87
  %v292 = vunpack.c.l.b16 %v88
  %v293 = vunpack.c.h.b16 %v88
  %v294 = vunpack.c.l.b16 %v89
  %v295 = vunpack.c.h.b16 %v89
  %v296 = vunpack.c.l.b16 %v90
  %v297 = vunpack.c.l.b16 %v91
  %v298 = vunpack.c.h.b16 %v91
  %v299 = vunpack.c.l.b16 %v92
  %v300 = vunpack.c.h.b16 %v92
  %v301 = vunpack.c.l.b16 %v93
  %v302 = vunpack.c.l.b16 %v94
  %v303 = vunpack.c.h.b16 %v94
  %v304 = vunpack.c.l.b16 %v95
  %v305 = vunpack.c.h.b16 %v95
  %v306 = vunpack.c.l.b16 %v96
  %v307 = vunpack.c.l.b16 %v97
  %v308 = vunpack.c.h.b16 %v97
  %v309 = vunpack.c.l.b16 %v98
  %v310 = vunpack.c.h.b16 %v98
  %v311 = vunpack.c.l.b16 %v99
  %v312 = vunpack.c.l.b16 %v100
  %v313 = vunpack.c.h.b16 %v100
  %v314 = vunpack.c.l.b16 %v101
  %v315 = vunpack.c.h.b16 %v101
  %v316 = vunpack.c.l.b16 %v102
  %v317 = vunpack.c.l.b16 %v103
  %v318 = vunpack.c.h.b16 %v103
  %v319 = vunpack.c.l.b16 %v104
  %v320 = vunpack.c.h.b16 %v104
  %v321 = vunpack.c.l.b16 %v105
  %v322 = vunpack.c.l.b16 %v106
  %v323 = vunpack.c.h.b16 %v106
  %v324 = vunpack.c.l.b16 %v107
  %v325 = vunpack.c.h.b16 %v107
  %v326 = vunpack.c.l.b16 %v108
  %v327 = vpack.c.b16 %v277, %v272
  %v328 = vpack.c.b16 %v278, %v273
  %v329 = vpack.c.b16 %v279, %v274
  %v330 = vpack.c.b16 %v280, %v275
  %v331 = vpack.c.b16 %v281, %v276
  %v332 = vpack.c.b16 %v287, %v282
  %v333 = vpack.c.b16 %v288, %v283
  %v334 = vpack.c.b16 %v289, %v284
  %v335 = vpack.c.b16 %v290, %v285
  %v336 = vpack.c.b16 %v291, %v286
  %v337 = vpack.c.b16 %v297, %v292
  %v338 = vpack.c.b16 %v298, %v293
  %v339 = vpack.c.b16 %v299, %v294
  %v340 = vpack.c.b16 %v300, %v295
  %v341 = vpack.c.b16 %v301, %v296
  %v342 = vpack.c.b16 %v307, %v302
  %v343 = vpack.c.b16 %v308, %v303
  %v344 = vpack.c.b16 %v309, %v304
  %v345 = vpack.c.b16 %v310, %v305
  %v346 = vpack.c.b16 %v311, %v306
  %v347 = vpack.c.b16 %v317, %v312
  %v348 = vpack.c.b16 %v318, %v313
  %v349 = vpack.c.b16 %v319, %v314
  %v350 = vpack.c.b16 %v320, %v315
  %v351 = vpack.c.b16 %v321, %v316
  %v352 = vpack.c.b16 %v322, %v322
  %v353 = vpack.c.b16 %v323, %v323
  %v354 = vpack.c.b16 %v324, %v324
  %v355 = vpack.c.b16 %v325, %v325
  %v356 = vpack.c.b16 %v326, %v326
  %vm382 = vcmask 662528
  %v384 = vsel %vm382, %v213, 0
  %v387 = vsel %vm382, %v214, 0
  %v390 = vsel %vm382, %v215, 0
  %v393 = vsel %vm382, %v216, 0
  %v396 = vsel %vm382, %v217, 0
  %v399 = vsel %vm382, %v218, 0
  %v402 = vsel %vm382, %v219, 0
  %v405 = vsel %vm382, %v220, 0
  %v408 = vsel %vm382, %v221, 0
  %v411 = vsel %vm382, %v222, 0
  %v414 = vsel %vm382, %v223, 0
  %v417 = vsel %vm382, %v224, 0
  %v420 = vsel %vm382, %v225, 0
  %v423 = vsel %vm382, %v226, 0
  %v426 = vsel %vm382, %v227, 0
  %v429 = vsel %vm382, %v228, 0
  %v432 = vsel %vm382, %v229, 0
  %v435 = vsel %vm382, %v230, 0
  %v438 = vsel %vm382, %v231, 0
  %v441 = vsel %vm382, %v232, 0
  %v444 = vsel %vm382, %v233, 0
  %v447 = vsel %vm382, %v234, 0
  %v450 = vsel %vm382, %v235, 0
  %v453 = vsel %vm382, %v236, 0
  %v456 = vsel %vm382, %v237, 0
  %v459 = vsel %vm382, %v238, 0
  %vm461 = vcmask 1040384
  %v462 = vsel 0, 4294967295, 65535
  %v463 = vsel %vm461, %v462, 0
  %v465 = vand.u32 %v352, %v463
  %v468 = vand.u32 %v353, %v463
  %v471 = vand.u32 %v354, %v463
  %v474 = vand.u32 %v355, %v463
  %v477 = vand.u32 %v356, %v463
  %479 = vmatprep.subr.bf16.mxu0 0
  %480 = vmatpush1.bf16.msra.mxu0 0
  %481 = vmatprep.subr.bf16.mxu0 0
  %482 = vmatpush1.bf16.msra.mxu0 0
  %483 = vmatprep.subr.bf16.mxu0 %v468
  %484 = vmatpush1.bf16.msra.mxu0 %v465
  %485 = vmatprep.subr.bf16.mxu0 %v348
  %486 = vmatpush1.bf16.msra.mxu0 %v347
  %487 = vmatprep.subr.bf16.mxu0 %v343
  %488 = vmatpush1.bf16.msra.mxu0 %v342
  %489 = vmatprep.subr.bf16.mxu0 %v338
  %490 = vmatpush1.bf16.msra.mxu0 %v337
  %491 = vmatprep.subr.bf16.mxu0 %v333
  %492 = vmatpush1.bf16.msra.mxu0 %v332
  %493 = vmatprep.subr.bf16.mxu0 %v328
  %494 = vmatpush1.bf16.msra.mxu0 %v327
  %495 = vmatprep.subr.bf16.mxu0 0
  %496 = vmatpush2.bf16.msra.mxu0 0
  %497 = vmatprep.subr.bf16.mxu0 0
  %498 = vmatpush2.bf16.msra.mxu0 0
  %499 = vmatprep.subr.bf16.mxu0 0
  %500 = vmatpush2.bf16.msra.mxu0 0
  %501 = vmatprep.subr.bf16.mxu0 0
  %502 = vmatpush2.bf16.msra.mxu0 0
  %503 = vmatprep.subr.bf16.mxu0 0
  %504 = vmatpush2.bf16.msra.mxu0 0
  %505 = vmatprep.subr.bf16.mxu0 0
  %506 = vmatpush2.bf16.msra.mxu0 0
  %507 = vmatprep.subr.bf16.mxu0 0
  %508 = vmatpush2.bf16.msra.mxu0 0
  %509 = vmatprep.subr.bf16.mxu0 0
  %510 = vmatpush2.bf16.msra.mxu0 0
  %511 = vmatprep.mubr.bf16.mxu0 0
  %512 = vmatmul.mubr.bf16.gmra.mxu0 %v384
  %v513 = vpop.f32.mrf.mxu0
  %v514 = vadd.f32 0.0, %v513
  %v515 = vpop.f32.mrf.mxu0
  %v516 = vadd.f32 0.0, %v515
  %v517 = vpop.f32.mrf.mxu0
  %v518 = vadd.f32 0.0, %v517
  %v519 = vpop.f32.mrf.mxu0
  %v520 = vadd.f32 0.0, %v519
  %521 = vmatprep.mubr.bf16.mxu0 0
  %522 = vmatmul.mubr.bf16.gmra.mxu0 %v387
  %v523 = vpop.f32.mrf.mxu0
  %v524 = vadd.f32 0.0, %v523
  %v525 = vpop.f32.mrf.mxu0
  %v526 = vadd.f32 0.0, %v525
  %v527 = vpop.f32.mrf.mxu0
  %v528 = vadd.f32 0.0, %v527
  %v529 = vpop.f32.mrf.mxu0
  %v530 = vadd.f32 0.0, %v529
  %531 = vmatprep.mubr.bf16.mxu0 0
  %532 = vmatmul.mubr.bf16.gmra.mxu0 %v390
  %v533 = vpop.f32.mrf.mxu0
  %v534 = vadd.f32 0.0, %v533
  %v535 = vpop.f32.mrf.mxu0
  %v536 = vadd.f32 0.0, %v535
  %v537 = vpop.f32.mrf.mxu0
  %v538 = vadd.f32 0.0, %v537
  %v539 = vpop.f32.mrf.mxu0
  %v540 = vadd.f32 0.0, %v539
  %541 = vmatprep.mubr.bf16.mxu0 0
  %542 = vmatmul.mubr.bf16.gmra.mxu0 %v393
  %v543 = vpop.f32.mrf.mxu0
  %v544 = vadd.f32 0.0, %v543
  %v545 = vpop.f32.mrf.mxu0
  %v546 = vadd.f32 0.0, %v545
  %v547 = vpop.f32.mrf.mxu0
  %v548 = vadd.f32 0.0, %v547
  %v549 = vpop.f32.mrf.mxu0
  %v550 = vadd.f32 0.0, %v549
  %551 = vmatprep.mubr.bf16.mxu0 0
  %552 = vmatmul.mubr.bf16.gmra.mxu0 %v396
  %v553 = vpop.f32.mrf.mxu0
  %v554 = vadd.f32 0.0, %v553
  %v555 = vpop.f32.mrf.mxu0
  %v556 = vadd.f32 0.0, %v555
  %v557 = vpop.f32.mrf.mxu0
  %v558 = vadd.f32 0.0, %v557
  %v559 = vpop.f32.mrf.mxu0
  %v560 = vadd.f32 0.0, %v559
  %561 = vmatprep.mubr.bf16.mxu0 0
  %562 = vmatmul.mubr.bf16.gmra.mxu0 %v399
  %v563 = vpop.f32.mrf.mxu0
  %v564 = vadd.f32 0.0, %v563
  %v565 = vpop.f32.mrf.mxu0
  %v566 = vadd.f32 0.0, %v565
  %v567 = vpop.f32.mrf.mxu0
  %v568 = vadd.f32 0.0, %v567
  %v569 = vpop.f32.mrf.mxu0
  %v570 = vadd.f32 0.0, %v569
  %571 = vmatprep.mubr.bf16.mxu0 0
  %572 = vmatmul.mubr.bf16.gmra.mxu0 %v402
  %v573 = vpop.f32.mrf.mxu0
  %v574 = vadd.f32 0.0, %v573
  %v575 = vpop.f32.mrf.mxu0
  %v576 = vadd.f32 0.0, %v575
  %v577 = vpop.f32.mrf.mxu0
  %v578 = vadd.f32 0.0, %v577
  %v579 = vpop.f32.mrf.mxu0
  %v580 = vadd.f32 0.0, %v579
  %581 = vmatprep.mubr.bf16.mxu0 0
  %582 = vmatmul.mubr.bf16.gmra.mxu0 %v405
  %v583 = vpop.f32.mrf.mxu0
  %v584 = vadd.f32 0.0, %v583
  %v585 = vpop.f32.mrf.mxu0
  %v586 = vadd.f32 0.0, %v585
  %v587 = vpop.f32.mrf.mxu0
  %v588 = vadd.f32 0.0, %v587
  %v589 = vpop.f32.mrf.mxu0
  %v590 = vadd.f32 0.0, %v589
  %591 = vmatprep.mubr.bf16.mxu0 0
  %592 = vmatmul.mubr.bf16.gmra.mxu0 %v408
  %v593 = vpop.f32.mrf.mxu0
  %v594 = vadd.f32 0.0, %v593
  %v595 = vpop.f32.mrf.mxu0
  %v596 = vadd.f32 0.0, %v595
  %v597 = vpop.f32.mrf.mxu0
  %v598 = vadd.f32 0.0, %v597
  %v599 = vpop.f32.mrf.mxu0
  %v600 = vadd.f32 0.0, %v599
  %601 = vmatprep.mubr.bf16.mxu0 0
  %602 = vmatmul.mubr.bf16.gmra.mxu0 %v411
  %v603 = vpop.f32.mrf.mxu0
  %v604 = vadd.f32 0.0, %v603
  %v605 = vpop.f32.mrf.mxu0
  %v606 = vadd.f32 0.0, %v605
  %v607 = vpop.f32.mrf.mxu0
  %v608 = vadd.f32 0.0, %v607
  %v609 = vpop.f32.mrf.mxu0
  %v610 = vadd.f32 0.0, %v609
  %611 = vmatprep.mubr.bf16.mxu0 0
  %612 = vmatmul.mubr.bf16.gmra.mxu0 %v414
  %v613 = vpop.f32.mrf.mxu0
  %v614 = vadd.f32 0.0, %v613
  %v615 = vpop.f32.mrf.mxu0
  %v616 = vadd.f32 0.0, %v615
  %v617 = vpop.f32.mrf.mxu0
  %v618 = vadd.f32 0.0, %v617
  %v619 = vpop.f32.mrf.mxu0
  %v620 = vadd.f32 0.0, %v619
  %621 = vmatprep.mubr.bf16.mxu0 0
  %622 = vmatmul.mubr.bf16.gmra.mxu0 %v417
  %v623 = vpop.f32.mrf.mxu0
  %v624 = vadd.f32 0.0, %v623
  %v625 = vpop.f32.mrf.mxu0
  %v626 = vadd.f32 0.0, %v625
  %v627 = vpop.f32.mrf.mxu0
  %v628 = vadd.f32 0.0, %v627
  %v629 = vpop.f32.mrf.mxu0
  %v630 = vadd.f32 0.0, %v629
  %631 = vmatprep.mubr.bf16.mxu0 0
  %632 = vmatmul.mubr.bf16.gmra.mxu0 %v420
  %v633 = vpop.f32.mrf.mxu0
  %v634 = vadd.f32 0.0, %v633
  %v635 = vpop.f32.mrf.mxu0
  %v636 = vadd.f32 0.0, %v635
  %v637 = vpop.f32.mrf.mxu0
  %v638 = vadd.f32 0.0, %v637
  %v639 = vpop.f32.mrf.mxu0
  %v640 = vadd.f32 0.0, %v639
  %641 = vmatprep.mubr.bf16.mxu0 0
  %642 = vmatmul.mubr.bf16.gmra.mxu0 %v423
  %v643 = vpop.f32.mrf.mxu0
  %v644 = vadd.f32 0.0, %v643
  %v645 = vpop.f32.mrf.mxu0
  %v646 = vadd.f32 0.0, %v645
  %v647 = vpop.f32.mrf.mxu0
  %v648 = vadd.f32 0.0, %v647
  %v649 = vpop.f32.mrf.mxu0
  %v650 = vadd.f32 0.0, %v649
  %651 = vmatprep.mubr.bf16.mxu0 0
  %652 = vmatmul.mubr.bf16.gmra.mxu0 %v426
  %v653 = vpop.f32.mrf.mxu0
  %v654 = vadd.f32 0.0, %v653
  %v655 = vpop.f32.mrf.mxu0
  %v656 = vadd.f32 0.0, %v655
  %v657 = vpop.f32.mrf.mxu0
  %v658 = vadd.f32 0.0, %v657
  %v659 = vpop.f32.mrf.mxu0
  %v660 = vadd.f32 0.0, %v659
  %661 = vmatprep.mubr.bf16.mxu0 0
  %662 = vmatmul.mubr.bf16.gmra.mxu0 %v429
  %v663 = vpop.f32.mrf.mxu0
  %v664 = vadd.f32 0.0, %v663
  %v665 = vpop.f32.mrf.mxu0
  %v666 = vadd.f32 0.0, %v665
  %v667 = vpop.f32.mrf.mxu0
  %v668 = vadd.f32 0.0, %v667
  %v669 = vpop.f32.mrf.mxu0
  %v670 = vadd.f32 0.0, %v669
  %671 = vmatprep.mubr.bf16.mxu0 0
  %672 = vmatmul.mubr.bf16.gmra.mxu0 %v432
  %v673 = vpop.f32.mrf.mxu0
  %v674 = vadd.f32 0.0, %v673
  %v675 = vpop.f32.mrf.mxu0
  %v676 = vadd.f32 0.0, %v675
  %v677 = vpop.f32.mrf.mxu0
  %v678 = vadd.f32 0.0, %v677
  %v679 = vpop.f32.mrf.mxu0
  %v680 = vadd.f32 0.0, %v679
  %681 = vmatprep.mubr.bf16.mxu0 0
  %682 = vmatmul.mubr.bf16.gmra.mxu0 %v435
  %v683 = vpop.f32.mrf.mxu0
  %v684 = vadd.f32 0.0, %v683
  %v685 = vpop.f32.mrf.mxu0
  %v686 = vadd.f32 0.0, %v685
  %v687 = vpop.f32.mrf.mxu0
  %v688 = vadd.f32 0.0, %v687
  %v689 = vpop.f32.mrf.mxu0
  %v690 = vadd.f32 0.0, %v689
  %691 = vmatprep.mubr.bf16.mxu0 0
  %692 = vmatmul.mubr.bf16.gmra.mxu0 %v438
  %v693 = vpop.f32.mrf.mxu0
  %v694 = vadd.f32 0.0, %v693
  %v695 = vpop.f32.mrf.mxu0
  %v696 = vadd.f32 0.0, %v695
  %v697 = vpop.f32.mrf.mxu0
  %v698 = vadd.f32 0.0, %v697
  %v699 = vpop.f32.mrf.mxu0
  %v700 = vadd.f32 0.0, %v699
  %701 = vmatprep.mubr.bf16.mxu0 0
  %702 = vmatmul.mubr.bf16.gmra.mxu0 %v441
  %v703 = vpop.f32.mrf.mxu0
  %v704 = vadd.f32 0.0, %v703
  %v705 = vpop.f32.mrf.mxu0
  %v706 = vadd.f32 0.0, %v705
  %v707 = vpop.f32.mrf.mxu0
  %v708 = vadd.f32 0.0, %v707
  %v709 = vpop.f32.mrf.mxu0
  %v710 = vadd.f32 0.0, %v709
  %711 = vmatprep.mubr.bf16.mxu0 0
  %712 = vmatmul.mubr.bf16.gmra.mxu0 %v444
  %v713 = vpop.f32.mrf.mxu0
  %v714 = vadd.f32 0.0, %v713
  %v715 = vpop.f32.mrf.mxu0
  %v716 = vadd.f32 0.0, %v715
  %v717 = vpop.f32.mrf.mxu0
  %v718 = vadd.f32 0.0, %v717
  %v719 = vpop.f32.mrf.mxu0
  %v720 = vadd.f32 0.0, %v719
  %721 = vmatprep.mubr.bf16.mxu0 0
  %722 = vmatmul.mubr.bf16.gmra.mxu0 %v447
  %v723 = vpop.f32.mrf.mxu0
  %v724 = vadd.f32 0.0, %v723
  %v725 = vpop.f32.mrf.mxu0
  %v726 = vadd.f32 0.0, %v725
  %v727 = vpop.f32.mrf.mxu0
  %v728 = vadd.f32 0.0, %v727
  %v729 = vpop.f32.mrf.mxu0
  %v730 = vadd.f32 0.0, %v729
  %731 = vmatprep.mubr.bf16.mxu0 0
  %732 = vmatmul.mubr.bf16.gmra.mxu0 %v450
  %v733 = vpop.f32.mrf.mxu0
  %v734 = vadd.f32 0.0, %v733
  %v735 = vpop.f32.mrf.mxu0
  %v736 = vadd.f32 0.0, %v735
  %v737 = vpop.f32.mrf.mxu0
  %v738 = vadd.f32 0.0, %v737
  %v739 = vpop.f32.mrf.mxu0
  %v740 = vadd.f32 0.0, %v739
  %741 = vmatprep.mubr.bf16.mxu0 0
  %742 = vmatmul.mubr.bf16.gmra.mxu0 %v453
  %v743 = vpop.f32.mrf.mxu0
  %v744 = vadd.f32 0.0, %v743
  %v745 = vpop.f32.mrf.mxu0
  %v746 = vadd.f32 0.0, %v745
  %v747 = vpop.f32.mrf.mxu0
  %v748 = vadd.f32 0.0, %v747
  %v749 = vpop.f32.mrf.mxu0
  %v750 = vadd.f32 0.0, %v749
  %751 = vmatprep.mubr.bf16.mxu0 0
  %752 = vmatmul.mubr.bf16.gmra.mxu0 %v456
  %v753 = vpop.f32.mrf.mxu0
  %v754 = vadd.f32 0.0, %v753
  %v755 = vpop.f32.mrf.mxu0
  %v756 = vadd.f32 0.0, %v755
  %v757 = vpop.f32.mrf.mxu0
  %v758 = vadd.f32 0.0, %v757
  %v759 = vpop.f32.mrf.mxu0
  %v760 = vadd.f32 0.0, %v759
  %761 = vmatprep.mubr.bf16.mxu0 0
  %762 = vmatmul.mubr.bf16.gmra.mxu0 %v459
  %v763 = vpop.f32.mrf.mxu0
  %v764 = vadd.f32 0.0, %v763
  %v765 = vpop.f32.mrf.mxu0
  %v766 = vadd.f32 0.0, %v765
  %v767 = vpop.f32.mrf.mxu0
  %v768 = vadd.f32 0.0, %v767
  %v769 = vpop.f32.mrf.mxu0
  %v770 = vadd.f32 0.0, %v769
  %771 = vdwg.mxu0
  %772 = vmatprep.subr.bf16.mxu0 0
  %773 = vmatpush1.bf16.msra.mxu0 0
  %774 = vmatprep.subr.bf16.mxu0 0
  %775 = vmatpush1.bf16.msra.mxu0 0
  %776 = vmatprep.subr.bf16.mxu0 %v474
  %777 = vmatpush1.bf16.msra.mxu0 %v471
  %778 = vmatprep.subr.bf16.mxu0 %v350
  %779 = vmatpush1.bf16.msra.mxu0 %v349
  %780 = vmatprep.subr.bf16.mxu0 %v345
  %781 = vmatpush1.bf16.msra.mxu0 %v344
  %782 = vmatprep.subr.bf16.mxu0 %v340
  %783 = vmatpush1.bf16.msra.mxu0 %v339
  %784 = vmatprep.subr.bf16.mxu0 %v335
  %785 = vmatpush1.bf16.msra.mxu0 %v334
  %786 = vmatprep.subr.bf16.mxu0 %v330
  %787 = vmatpush1.bf16.msra.mxu0 %v329
  %788 = vmatprep.subr.bf16.mxu0 0
  %789 = vmatpush2.bf16.msra.mxu0 0
  %790 = vmatprep.subr.bf16.mxu0 0
  %791 = vmatpush2.bf16.msra.mxu0 0
  %792 = vmatprep.subr.bf16.mxu0 0
  %793 = vmatpush2.bf16.msra.mxu0 0
  %794 = vmatprep.subr.bf16.mxu0 0
  %795 = vmatpush2.bf16.msra.mxu0 0
  %796 = vmatprep.subr.bf16.mxu0 0
  %797 = vmatpush2.bf16.msra.mxu0 0
  %798 = vmatprep.subr.bf16.mxu0 0
  %799 = vmatpush2.bf16.msra.mxu0 0
  %800 = vmatprep.subr.bf16.mxu0 0
  %801 = vmatpush2.bf16.msra.mxu0 0
  %802 = vmatprep.subr.bf16.mxu0 0
  %803 = vmatpush2.bf16.msra.mxu0 0
  %804 = vmatprep.mubr.bf16.mxu0 0
  %805 = vmatmul.mubr.bf16.gmra.mxu0 %v384
  %v806 = vpop.f32.mrf.mxu0
  %v807 = vadd.f32 0.0, %v806
  %v808 = vpop.f32.mrf.mxu0
  %v809 = vadd.f32 0.0, %v808
  %v810 = vpop.f32.mrf.mxu0
  %v811 = vadd.f32 0.0, %v810
  %v812 = vpop.f32.mrf.mxu0
  %v813 = vadd.f32 0.0, %v812
  %814 = vmatprep.mubr.bf16.mxu0 0
  %815 = vmatmul.mubr.bf16.gmra.mxu0 %v387
  %v816 = vpop.f32.mrf.mxu0
  %v817 = vadd.f32 0.0, %v816
  %v818 = vpop.f32.mrf.mxu0
  %v819 = vadd.f32 0.0, %v818
  %v820 = vpop.f32.mrf.mxu0
  %v821 = vadd.f32 0.0, %v820
  %v822 = vpop.f32.mrf.mxu0
  %v823 = vadd.f32 0.0, %v822
  %824 = vmatprep.mubr.bf16.mxu0 0
  %825 = vmatmul.mubr.bf16.gmra.mxu0 %v390
  %v826 = vpop.f32.mrf.mxu0
  %v827 = vadd.f32 0.0, %v826
  %v828 = vpop.f32.mrf.mxu0
  %v829 = vadd.f32 0.0, %v828
  %v830 = vpop.f32.mrf.mxu0
  %v831 = vadd.f32 0.0, %v830
  %v832 = vpop.f32.mrf.mxu0
  %v833 = vadd.f32 0.0, %v832
  %834 = vmatprep.mubr.bf16.mxu0 0
  %835 = vmatmul.mubr.bf16.gmra.mxu0 %v393
  %v836 = vpop.f32.mrf.mxu0
  %v837 = vadd.f32 0.0, %v836
  %v838 = vpop.f32.mrf.mxu0
  %v839 = vadd.f32 0.0, %v838
  %v840 = vpop.f32.mrf.mxu0
  %v841 = vadd.f32 0.0, %v840
  %v842 = vpop.f32.mrf.mxu0
  %v843 = vadd.f32 0.0, %v842
  %844 = vmatprep.mubr.bf16.mxu0 0
  %845 = vmatmul.mubr.bf16.gmra.mxu0 %v396
  %v846 = vpop.f32.mrf.mxu0
  %v847 = vadd.f32 0.0, %v846
  %v848 = vpop.f32.mrf.mxu0
  %v849 = vadd.f32 0.0, %v848
  %v850 = vpop.f32.mrf.mxu0
  %v851 = vadd.f32 0.0, %v850
  %v852 = vpop.f32.mrf.mxu0
  %v853 = vadd.f32 0.0, %v852
  %854 = vmatprep.mubr.bf16.mxu0 0
  %855 = vmatmul.mubr.bf16.gmra.mxu0 %v399
  %v856 = vpop.f32.mrf.mxu0
  %v857 = vadd.f32 0.0, %v856
  %v858 = vpop.f32.mrf.mxu0
  %v859 = vadd.f32 0.0, %v858
  %v860 = vpop.f32.mrf.mxu0
  %v861 = vadd.f32 0.0, %v860
  %v862 = vpop.f32.mrf.mxu0
  %v863 = vadd.f32 0.0, %v862
  %864 = vmatprep.mubr.bf16.mxu0 0
  %865 = vmatmul.mubr.bf16.gmra.mxu0 %v402
  %v866 = vpop.f32.mrf.mxu0
  %v867 = vadd.f32 0.0, %v866
  %v868 = vpop.f32.mrf.mxu0
  %v869 = vadd.f32 0.0, %v868
  %v870 = vpop.f32.mrf.mxu0
  %v871 = vadd.f32 0.0, %v870
  %v872 = vpop.f32.mrf.mxu0
  %v873 = vadd.f32 0.0, %v872
  %874 = vmatprep.mubr.bf16.mxu0 0
  %875 = vmatmul.mubr.bf16.gmra.mxu0 %v405
  %v876 = vpop.f32.mrf.mxu0
  %v877 = vadd.f32 0.0, %v876
  %v878 = vpop.f32.mrf.mxu0
  %v879 = vadd.f32 0.0, %v878
  %v880 = vpop.f32.mrf.mxu0
  %v881 = vadd.f32 0.0, %v880
  %v882 = vpop.f32.mrf.mxu0
  %v883 = vadd.f32 0.0, %v882
  %884 = vmatprep.mubr.bf16.mxu0 0
  %885 = vmatmul.mubr.bf16.gmra.mxu0 %v408
  %v886 = vpop.f32.mrf.mxu0
  %v887 = vadd.f32 0.0, %v886
  %v888 = vpop.f32.mrf.mxu0
  %v889 = vadd.f32 0.0, %v888
  %v890 = vpop.f32.mrf.mxu0
  %v891 = vadd.f32 0.0, %v890
  %v892 = vpop.f32.mrf.mxu0
  %v893 = vadd.f32 0.0, %v892
  %894 = vmatprep.mubr.bf16.mxu0 0
  %895 = vmatmul.mubr.bf16.gmra.mxu0 %v411
  %v896 = vpop.f32.mrf.mxu0
  %v897 = vadd.f32 0.0, %v896
  %v898 = vpop.f32.mrf.mxu0
  %v899 = vadd.f32 0.0, %v898
  %v900 = vpop.f32.mrf.mxu0
  %v901 = vadd.f32 0.0, %v900
  %v902 = vpop.f32.mrf.mxu0
  %v903 = vadd.f32 0.0, %v902
  %904 = vmatprep.mubr.bf16.mxu0 0
  %905 = vmatmul.mubr.bf16.gmra.mxu0 %v414
  %v906 = vpop.f32.mrf.mxu0
  %v907 = vadd.f32 0.0, %v906
  %v908 = vpop.f32.mrf.mxu0
  %v909 = vadd.f32 0.0, %v908
  %v910 = vpop.f32.mrf.mxu0
  %v911 = vadd.f32 0.0, %v910
  %v912 = vpop.f32.mrf.mxu0
  %v913 = vadd.f32 0.0, %v912
  %914 = vmatprep.mubr.bf16.mxu0 0
  %915 = vmatmul.mubr.bf16.gmra.mxu0 %v417
  %v916 = vpop.f32.mrf.mxu0
  %v917 = vadd.f32 0.0, %v916
  %v918 = vpop.f32.mrf.mxu0
  %v919 = vadd.f32 0.0, %v918
  %v920 = vpop.f32.mrf.mxu0
  %v921 = vadd.f32 0.0, %v920
  %v922 = vpop.f32.mrf.mxu0
  %v923 = vadd.f32 0.0, %v922
  %924 = vmatprep.mubr.bf16.mxu0 0
  %925 = vmatmul.mubr.bf16.gmra.mxu0 %v420
  %v926 = vpop.f32.mrf.mxu0
  %v927 = vadd.f32 0.0, %v926
  %v928 = vpop.f32.mrf.mxu0
  %v929 = vadd.f32 0.0, %v928
  %v930 = vpop.f32.mrf.mxu0
  %v931 = vadd.f32 0.0, %v930
  %v932 = vpop.f32.mrf.mxu0
  %v933 = vadd.f32 0.0, %v932
  %934 = vmatprep.mubr.bf16.mxu0 0
  %935 = vmatmul.mubr.bf16.gmra.mxu0 %v423
  %v936 = vpop.f32.mrf.mxu0
  %v937 = vadd.f32 0.0, %v936
  %v938 = vpop.f32.mrf.mxu0
  %v939 = vadd.f32 0.0, %v938
  %v940 = vpop.f32.mrf.mxu0
  %v941 = vadd.f32 0.0, %v940
  %v942 = vpop.f32.mrf.mxu0
  %v943 = vadd.f32 0.0, %v942
  %944 = vmatprep.mubr.bf16.mxu0 0
  %945 = vmatmul.mubr.bf16.gmra.mxu0 %v426
  %v946 = vpop.f32.mrf.mxu0
  %v947 = vadd.f32 0.0, %v946
  %v948 = vpop.f32.mrf.mxu0
  %v949 = vadd.f32 0.0, %v948
  %v950 = vpop.f32.mrf.mxu0
  %v951 = vadd.f32 0.0, %v950
  %v952 = vpop.f32.mrf.mxu0
  %v953 = vadd.f32 0.0, %v952
  %954 = vmatprep.mubr.bf16.mxu0 0
  %955 = vmatmul.mubr.bf16.gmra.mxu0 %v429
  %v956 = vpop.f32.mrf.mxu0
  %v957 = vadd.f32 0.0, %v956
  %v958 = vpop.f32.mrf.mxu0
  %v959 = vadd.f32 0.0, %v958
  %v960 = vpop.f32.mrf.mxu0
  %v961 = vadd.f32 0.0, %v960
  %v962 = vpop.f32.mrf.mxu0
  %v963 = vadd.f32 0.0, %v962
  %964 = vmatprep.mubr.bf16.mxu0 0
  %965 = vmatmul.mubr.bf16.gmra.mxu0 %v432
  %v966 = vpop.f32.mrf.mxu0
  %v967 = vadd.f32 0.0, %v966
  %v968 = vpop.f32.mrf.mxu0
  %v969 = vadd.f32 0.0, %v968
  %v970 = vpop.f32.mrf.mxu0
  %v971 = vadd.f32 0.0, %v970
  %v972 = vpop.f32.mrf.mxu0
  %v973 = vadd.f32 0.0, %v972
  %974 = vmatprep.mubr.bf16.mxu0 0
  %975 = vmatmul.mubr.bf16.gmra.mxu0 %v435
  %v976 = vpop.f32.mrf.mxu0
  %v977 = vadd.f32 0.0, %v976
  %v978 = vpop.f32.mrf.mxu0
  %v979 = vadd.f32 0.0, %v978
  %v980 = vpop.f32.mrf.mxu0
  %v981 = vadd.f32 0.0, %v980
  %v982 = vpop.f32.mrf.mxu0
  %v983 = vadd.f32 0.0, %v982
  %984 = vmatprep.mubr.bf16.mxu0 0
  %985 = vmatmul.mubr.bf16.gmra.mxu0 %v438
  %v986 = vpop.f32.mrf.mxu0
  %v987 = vadd.f32 0.0, %v986
  %v988 = vpop.f32.mrf.mxu0
  %v989 = vadd.f32 0.0, %v988
  %v990 = vpop.f32.mrf.mxu0
  %v991 = vadd.f32 0.0, %v990
  %v992 = vpop.f32.mrf.mxu0
  %v993 = vadd.f32 0.0, %v992
  %994 = vmatprep.mubr.bf16.mxu0 0
  %995 = vmatmul.mubr.bf16.gmra.mxu0 %v441
  %v996 = vpop.f32.mrf.mxu0
  %v997 = vadd.f32 0.0, %v996
  %v998 = vpop.f32.mrf.mxu0
  %v999 = vadd.f32 0.0, %v998
  %v1000 = vpop.f32.mrf.mxu0
  %v1001 = vadd.f32 0.0, %v1000
  %v1002 = vpop.f32.mrf.mxu0
  %v1003 = vadd.f32 0.0, %v1002
  %1004 = vmatprep.mubr.bf16.mxu0 0
  %1005 = vmatmul.mubr.bf16.gmra.mxu0 %v444
  %v1006 = vpop.f32.mrf.mxu0
  %v1007 = vadd.f32 0.0, %v1006
  %v1008 = vpop.f32.mrf.mxu0
  %v1009 = vadd.f32 0.0, %v1008
  %v1010 = vpop.f32.mrf.mxu0
  %v1011 = vadd.f32 0.0, %v1010
  %v1012 = vpop.f32.mrf.mxu0
  %v1013 = vadd.f32 0.0, %v1012
  %1014 = vmatprep.mubr.bf16.mxu0 0
  %1015 = vmatmul.mubr.bf16.gmra.mxu0 %v447
  %v1016 = vpop.f32.mrf.mxu0
  %v1017 = vadd.f32 0.0, %v1016
  %v1018 = vpop.f32.mrf.mxu0
  %v1019 = vadd.f32 0.0, %v1018
  %v1020 = vpop.f32.mrf.mxu0
  %v1021 = vadd.f32 0.0, %v1020
  %v1022 = vpop.f32.mrf.mxu0
  %v1023 = vadd.f32 0.0, %v1022
  %1024 = vmatprep.mubr.bf16.mxu0 0
  %1025 = vmatmul.mubr.bf16.gmra.mxu0 %v450
  %v1026 = vpop.f32.mrf.mxu0
  %v1027 = vadd.f32 0.0, %v1026
  %v1028 = vpop.f32.mrf.mxu0
  %v1029 = vadd.f32 0.0, %v1028
  %v1030 = vpop.f32.mrf.mxu0
  %v1031 = vadd.f32 0.0, %v1030
  %v1032 = vpop.f32.mrf.mxu0
  %v1033 = vadd.f32 0.0, %v1032
  %1034 = vmatprep.mubr.bf16.mxu0 0
  %1035 = vmatmul.mubr.bf16.gmra.mxu0 %v453
  %v1036 = vpop.f32.mrf.mxu0
  %v1037 = vadd.f32 0.0, %v1036
  %v1038 = vpop.f32.mrf.mxu0
  %v1039 = vadd.f32 0.0, %v1038
  %v1040 = vpop.f32.mrf.mxu0
  %v1041 = vadd.f32 0.0, %v1040
  %v1042 = vpop.f32.mrf.mxu0
  %v1043 = vadd.f32 0.0, %v1042
  %1044 = vmatprep.mubr.bf16.mxu0 0
  %1045 = vmatmul.mubr.bf16.gmra.mxu0 %v456
  %v1046 = vpop.f32.mrf.mxu0
  %v1047 = vadd.f32 0.0, %v1046
  %v1048 = vpop.f32.mrf.mxu0
  %v1049 = vadd.f32 0.0, %v1048
  %v1050 = vpop.f32.mrf.mxu0
  %v1051 = vadd.f32 0.0, %v1050
  %v1052 = vpop.f32.mrf.mxu0
  %v1053 = vadd.f32 0.0, %v1052
  %1054 = vmatprep.mubr.bf16.mxu0 0
  %1055 = vmatmul.mubr.bf16.gmra.mxu0 %v459
  %v1056 = vpop.f32.mrf.mxu0
  %v1057 = vadd.f32 0.0, %v1056
  %v1058 = vpop.f32.mrf.mxu0
  %v1059 = vadd.f32 0.0, %v1058
  %v1060 = vpop.f32.mrf.mxu0
  %v1061 = vadd.f32 0.0, %v1060
  %v1062 = vpop.f32.mrf.mxu0
  %v1063 = vadd.f32 0.0, %v1062
  %1064 = vdwg.mxu0
  %1065 = vmatprep.subr.bf16.mxu0 0
  %1066 = vmatpush1.bf16.msra.mxu0 0
  %1067 = vmatprep.subr.bf16.mxu0 0
  %1068 = vmatpush1.bf16.msra.mxu0 0
  %1069 = vmatprep.subr.bf16.mxu0 0
  %1070 = vmatpush1.bf16.msra.mxu0 %v477
  %1071 = vmatprep.subr.bf16.mxu0 0
  %1072 = vmatpush1.bf16.msra.mxu0 %v351
  %1073 = vmatprep.subr.bf16.mxu0 0
  %1074 = vmatpush1.bf16.msra.mxu0 %v346
  %1075 = vmatprep.subr.bf16.mxu0 0
  %1076 = vmatpush1.bf16.msra.mxu0 %v341
  %1077 = vmatprep.subr.bf16.mxu0 0
  %1078 = vmatpush1.bf16.msra.mxu0 %v336
  %1079 = vmatprep.subr.bf16.mxu0 0
  %1080 = vmatpush1.bf16.msra.mxu0 %v331
  %1081 = vmatprep.subr.bf16.mxu0 0
  %1082 = vmatpush2.bf16.msra.mxu0 0
  %1083 = vmatprep.subr.bf16.mxu0 0
  %1084 = vmatpush2.bf16.msra.mxu0 0
  %1085 = vmatprep.subr.bf16.mxu0 0
  %1086 = vmatpush2.bf16.msra.mxu0 0
  %1087 = vmatprep.subr.bf16.mxu0 0
  %1088 = vmatpush2.bf16.msra.mxu0 0
  %1089 = vmatprep.subr.bf16.mxu0 0
  %1090 = vmatpush2.bf16.msra.mxu0 0
  %1091 = vmatprep.subr.bf16.mxu0 0
  %1092 = vmatpush2.bf16.msra.mxu0 0
  %1093 = vmatprep.subr.bf16.mxu0 0
  %1094 = vmatpush2.bf16.msra.mxu0 0
  %1095 = vmatprep.subr.bf16.mxu0 0
  %1096 = vmatpush2.bf16.msra.mxu0 0
  %1097 = vmatprep.mubr.bf16.mxu0 0
  %1098 = vmatmul.mubr.bf16.gmra.mxu0 %v384
  %v1099 = vpop.f32.mrf.mxu0
  %v1100 = vadd.f32 0.0, %v1099
  %v1101 = vpop.f32.mrf.mxu0
  %v1102 = vpop.f32.mrf.mxu0
  %v1103 = vadd.f32 0.0, %v1102
  %v1104 = vpop.f32.mrf.mxu0
  %1105 = vmatprep.mubr.bf16.mxu0 0
  %1106 = vmatmul.mubr.bf16.gmra.mxu0 %v387
  %v1107 = vpop.f32.mrf.mxu0
  %v1108 = vadd.f32 0.0, %v1107
  %v1109 = vpop.f32.mrf.mxu0
  %v1110 = vpop.f32.mrf.mxu0
  %v1111 = vadd.f32 0.0, %v1110
  %v1112 = vpop.f32.mrf.mxu0
  %1113 = vmatprep.mubr.bf16.mxu0 0
  %1114 = vmatmul.mubr.bf16.gmra.mxu0 %v390
  %v1115 = vpop.f32.mrf.mxu0
  %v1116 = vadd.f32 0.0, %v1115
  %v1117 = vpop.f32.mrf.mxu0
  %v1118 = vpop.f32.mrf.mxu0
  %v1119 = vadd.f32 0.0, %v1118
  %v1120 = vpop.f32.mrf.mxu0
  %1121 = vmatprep.mubr.bf16.mxu0 0
  %1122 = vmatmul.mubr.bf16.gmra.mxu0 %v393
  %v1123 = vpop.f32.mrf.mxu0
  %v1124 = vadd.f32 0.0, %v1123
  %v1125 = vpop.f32.mrf.mxu0
  %v1126 = vpop.f32.mrf.mxu0
  %v1127 = vadd.f32 0.0, %v1126
  %v1128 = vpop.f32.mrf.mxu0
  %1129 = vmatprep.mubr.bf16.mxu0 0
  %1130 = vmatmul.mubr.bf16.gmra.mxu0 %v396
  %v1131 = vpop.f32.mrf.mxu0
  %v1132 = vadd.f32 0.0, %v1131
  %v1133 = vpop.f32.mrf.mxu0
  %v1134 = vpop.f32.mrf.mxu0
  %v1135 = vadd.f32 0.0, %v1134
  %v1136 = vpop.f32.mrf.mxu0
  %1137 = vmatprep.mubr.bf16.mxu0 0
  %1138 = vmatmul.mubr.bf16.gmra.mxu0 %v399
  %v1139 = vpop.f32.mrf.mxu0
  %v1140 = vadd.f32 0.0, %v1139
  %v1141 = vpop.f32.mrf.mxu0
  %v1142 = vpop.f32.mrf.mxu0
  %v1143 = vadd.f32 0.0, %v1142
  %v1144 = vpop.f32.mrf.mxu0
  %1145 = vmatprep.mubr.bf16.mxu0 0
  %1146 = vmatmul.mubr.bf16.gmra.mxu0 %v402
  %v1147 = vpop.f32.mrf.mxu0
  %v1148 = vadd.f32 0.0, %v1147
  %v1149 = vpop.f32.mrf.mxu0
  %v1150 = vpop.f32.mrf.mxu0
  %v1151 = vadd.f32 0.0, %v1150
  %v1152 = vpop.f32.mrf.mxu0
  %1153 = vmatprep.mubr.bf16.mxu0 0
  %1154 = vmatmul.mubr.bf16.gmra.mxu0 %v405
  %v1155 = vpop.f32.mrf.mxu0
  %v1156 = vadd.f32 0.0, %v1155
  %v1157 = vpop.f32.mrf.mxu0
  %v1158 = vpop.f32.mrf.mxu0
  %v1159 = vadd.f32 0.0, %v1158
  %v1160 = vpop.f32.mrf.mxu0
  %1161 = vmatprep.mubr.bf16.mxu0 0
  %1162 = vmatmul.mubr.bf16.gmra.mxu0 %v408
  %v1163 = vpop.f32.mrf.mxu0
  %v1164 = vadd.f32 0.0, %v1163
  %v1165 = vpop.f32.mrf.mxu0
  %v1166 = vpop.f32.mrf.mxu0
  %v1167 = vadd.f32 0.0, %v1166
  %v1168 = vpop.f32.mrf.mxu0
  %1169 = vmatprep.mubr.bf16.mxu0 0
  %1170 = vmatmul.mubr.bf16.gmra.mxu0 %v411
  %v1171 = vpop.f32.mrf.mxu0
  %v1172 = vadd.f32 0.0, %v1171
  %v1173 = vpop.f32.mrf.mxu0
  %v1174 = vpop.f32.mrf.mxu0
  %v1175 = vadd.f32 0.0, %v1174
  %v1176 = vpop.f32.mrf.mxu0
  %1177 = vmatprep.mubr.bf16.mxu0 0
  %1178 = vmatmul.mubr.bf16.gmra.mxu0 %v414
  %v1179 = vpop.f32.mrf.mxu0
  %v1180 = vadd.f32 0.0, %v1179
  %v1181 = vpop.f32.mrf.mxu0
  %v1182 = vpop.f32.mrf.mxu0
  %v1183 = vadd.f32 0.0, %v1182
  %v1184 = vpop.f32.mrf.mxu0
  %1185 = vmatprep.mubr.bf16.mxu0 0
  %1186 = vmatmul.mubr.bf16.gmra.mxu0 %v417
  %v1187 = vpop.f32.mrf.mxu0
  %v1188 = vadd.f32 0.0, %v1187
  %v1189 = vpop.f32.mrf.mxu0
  %v1190 = vpop.f32.mrf.mxu0
  %v1191 = vadd.f32 0.0, %v1190
  %v1192 = vpop.f32.mrf.mxu0
  %1193 = vmatprep.mubr.bf16.mxu0 0
  %1194 = vmatmul.mubr.bf16.gmra.mxu0 %v420
  %v1195 = vpop.f32.mrf.mxu0
  %v1196 = vadd.f32 0.0, %v1195
  %v1197 = vpop.f32.mrf.mxu0
  %v1198 = vpop.f32.mrf.mxu0
  %v1199 = vadd.f32 0.0, %v1198
  %v1200 = vpop.f32.mrf.mxu0
  %1201 = vmatprep.mubr.bf16.mxu0 0
  %1202 = vmatmul.mubr.bf16.gmra.mxu0 %v423
  %v1203 = vpop.f32.mrf.mxu0
  %v1204 = vadd.f32 0.0, %v1203
  %v1205 = vpop.f32.mrf.mxu0
  %v1206 = vpop.f32.mrf.mxu0
  %v1207 = vadd.f32 0.0, %v1206
  %v1208 = vpop.f32.mrf.mxu0
  %1209 = vmatprep.mubr.bf16.mxu0 0
  %1210 = vmatmul.mubr.bf16.gmra.mxu0 %v426
  %v1211 = vpop.f32.mrf.mxu0
  %v1212 = vadd.f32 0.0, %v1211
  %v1213 = vpop.f32.mrf.mxu0
  %v1214 = vpop.f32.mrf.mxu0
  %v1215 = vadd.f32 0.0, %v1214
  %v1216 = vpop.f32.mrf.mxu0
  %1217 = vmatprep.mubr.bf16.mxu0 0
  %1218 = vmatmul.mubr.bf16.gmra.mxu0 %v429
  %v1219 = vpop.f32.mrf.mxu0
  %v1220 = vadd.f32 0.0, %v1219
  %v1221 = vpop.f32.mrf.mxu0
  %v1222 = vpop.f32.mrf.mxu0
  %v1223 = vadd.f32 0.0, %v1222
  %v1224 = vpop.f32.mrf.mxu0
  %1225 = vmatprep.mubr.bf16.mxu0 0
  %1226 = vmatmul.mubr.bf16.gmra.mxu0 %v432
  %v1227 = vpop.f32.mrf.mxu0
  %v1228 = vadd.f32 0.0, %v1227
  %v1229 = vpop.f32.mrf.mxu0
  %v1230 = vpop.f32.mrf.mxu0
  %v1231 = vadd.f32 0.0, %v1230
  %v1232 = vpop.f32.mrf.mxu0
  %1233 = vmatprep.mubr.bf16.mxu0 0
  %1234 = vmatmul.mubr.bf16.gmra.mxu0 %v435
  %v1235 = vpop.f32.mrf.mxu0
  %v1236 = vadd.f32 0.0, %v1235
  %v1237 = vpop.f32.mrf.mxu0
  %v1238 = vpop.f32.mrf.mxu0
  %v1239 = vadd.f32 0.0, %v1238
  %v1240 = vpop.f32.mrf.mxu0
  %1241 = vmatprep.mubr.bf16.mxu0 0
  %1242 = vmatmul.mubr.bf16.gmra.mxu0 %v438
  %v1243 = vpop.f32.mrf.mxu0
  %v1244 = vadd.f32 0.0, %v1243
  %v1245 = vpop.f32.mrf.mxu0
  %v1246 = vpop.f32.mrf.mxu0
  %v1247 = vadd.f32 0.0, %v1246
  %v1248 = vpop.f32.mrf.mxu0
  %1249 = vmatprep.mubr.bf16.mxu0 0
  %1250 = vmatmul.mubr.bf16.gmra.mxu0 %v441
  %v1251 = vpop.f32.mrf.mxu0
  %v1252 = vadd.f32 0.0, %v1251
  %v1253 = vpop.f32.mrf.mxu0
  %v1254 = vpop.f32.mrf.mxu0
  %v1255 = vadd.f32 0.0, %v1254
  %v1256 = vpop.f32.mrf.mxu0
  %1257 = vmatprep.mubr.bf16.mxu0 0
  %1258 = vmatmul.mubr.bf16.gmra.mxu0 %v444
  %v1259 = vpop.f32.mrf.mxu0
  %v1260 = vadd.f32 0.0, %v1259
  %v1261 = vpop.f32.mrf.mxu0
  %v1262 = vpop.f32.mrf.mxu0
  %v1263 = vadd.f32 0.0, %v1262
  %v1264 = vpop.f32.mrf.mxu0
  %1265 = vmatprep.mubr.bf16.mxu0 0
  %1266 = vmatmul.mubr.bf16.gmra.mxu0 %v447
  %v1267 = vpop.f32.mrf.mxu0
  %v1268 = vadd.f32 0.0, %v1267
  %v1269 = vpop.f32.mrf.mxu0
  %v1270 = vpop.f32.mrf.mxu0
  %v1271 = vadd.f32 0.0, %v1270
  %v1272 = vpop.f32.mrf.mxu0
  %1273 = vmatprep.mubr.bf16.mxu0 0
  %1274 = vmatmul.mubr.bf16.gmra.mxu0 %v450
  %v1275 = vpop.f32.mrf.mxu0
  %v1276 = vadd.f32 0.0, %v1275
  %v1277 = vpop.f32.mrf.mxu0
  %v1278 = vpop.f32.mrf.mxu0
  %v1279 = vadd.f32 0.0, %v1278
  %v1280 = vpop.f32.mrf.mxu0
  %1281 = vmatprep.mubr.bf16.mxu0 0
  %1282 = vmatmul.mubr.bf16.gmra.mxu0 %v453
  %v1283 = vpop.f32.mrf.mxu0
  %v1284 = vadd.f32 0.0, %v1283
  %v1285 = vpop.f32.mrf.mxu0
  %v1286 = vpop.f32.mrf.mxu0
  %v1287 = vadd.f32 0.0, %v1286
  %v1288 = vpop.f32.mrf.mxu0
  %1289 = vmatprep.mubr.bf16.mxu0 0
  %1290 = vmatmul.mubr.bf16.gmra.mxu0 %v456
  %v1291 = vpop.f32.mrf.mxu0
  %v1292 = vadd.f32 0.0, %v1291
  %v1293 = vpop.f32.mrf.mxu0
  %v1294 = vpop.f32.mrf.mxu0
  %v1295 = vadd.f32 0.0, %v1294
  %v1296 = vpop.f32.mrf.mxu0
  %1297 = vmatprep.mubr.bf16.mxu0 0
  %1298 = vmatmul.mubr.bf16.gmra.mxu0 %v459
  %v1299 = vpop.f32.mrf.mxu0
  %v1300 = vadd.f32 0.0, %v1299
  %v1301 = vpop.f32.mrf.mxu0
  %v1302 = vpop.f32.mrf.mxu0
  %v1303 = vadd.f32 0.0, %v1302
  %v1304 = vpop.f32.mrf.mxu0
  %1305 = vdwg.mxu0
  %v1306 = vld [vmem:[%s5] ss:$8 sm:$0xf]
  %v1307 = vld [vmem:[%s5] ss:$8 sm:$0x10]
  %v1308 = vor.u32 %v1306, %v1307
  %s1309 = scalar_lea.vmem %s5, 1
  %v1310 = vld [vmem:[%s1309] ss:$8 sm:$0xf]
  %v1311 = vld [vmem:[%s1309] ss:$8 sm:$0x10]
  %v1312 = vor.u32 %v1310, %v1311
  %v1313 = vadd.f32 %v558, %v564
  %v1314 = vadd.f32 %v1313, %v568
  %v1315 = vadd.f32 %v1314, %v574
  %v1316 = vadd.f32 %v1315, %v578
  %v1317 = vadd.f32 %v1316, %v584
  %v1318 = vadd.f32 %v1317, %v588
  %v1319 = vadd.f32 %v1318, %v594
  %v1320 = vadd.f32 %v1319, %v598
  %v1321 = vadd.f32 %v1320, %v604
  %v1322 = vadd.f32 %v1321, %v608
  %v1323 = vadd.f32 %v1322, %v614
  %v1324 = vadd.f32 %v1323, %v618
  %v1325 = vadd.f32 %v1324, %v624
  %v1326 = vadd.f32 %v1325, %v628
  %v1327 = vadd.f32 %v1326, %v634
  %v1328 = vadd.f32 %v1327, %v638
  %v1329 = vadd.f32 %v1328, %v644
  %v1330 = vadd.f32 %v1329, %v648
  %v1331 = vadd.f32 %v1330, %v654
  %v1332 = vadd.f32 %v1331, %v658
  %v1333 = vadd.f32 %v1332, %v664
  %v1334 = vadd.f32 %v1333, %v668
  %v1335 = vadd.f32 %v1334, %v674
  %v1336 = vadd.f32 %v1335, %v678
  %v1337 = vadd.f32 %v1336, %v684
  %v1338 = vadd.f32 %v1337, %v688
  %v1339 = vadd.f32 %v1338, %v694
  %v1340 = vadd.f32 %v1339, %v698
  %v1341 = vadd.f32 %v1340, %v704
  %v1342 = vadd.f32 %v1341, %v708
  %v1343 = vadd.f32 %v1342, %v714
  %v1344 = vadd.f32 %v1343, %v718
  %v1345 = vadd.f32 %v1344, %v724
  %v1346 = vadd.f32 %v1345, %v728
  %v1347 = vadd.f32 %v1346, %v734
  %v1348 = vadd.f32 %v1347, %v738
  %v1349 = vadd.f32 %v1348, %v744
  %v1350 = vadd.f32 %v1349, %v748
  %v1351 = vadd.f32 %v1350, %v754
  %v1352 = vadd.f32 %v1351, %v758
  %v1353 = vadd.f32 %v1352, %v764
  %vm1354 = vcmask 1041408
  %v1355 = vsel %vm1354, %v768, 0.0
  %v1356 = vadd.f32 %v1353, %v1355
  %v1357 = vrot.slane %v1356, 4
  %v1358 = vadd.f32 %v1356, %v1357
  %v1359 = vrot.slane %v1358, 2
  %v1360 = vadd.f32 %v1358, %v1359
  %v1361 = vrot.slane %v1360, 1
  %v1362 = vadd.f32 %v1360, %v1361
  %v1363 = vadd.f32 %v560, %v566
  %v1364 = vadd.f32 %v1363, %v570
  %v1365 = vadd.f32 %v1364, %v576
  %v1366 = vadd.f32 %v1365, %v580
  %v1367 = vadd.f32 %v1366, %v586
  %v1368 = vadd.f32 %v1367, %v590
  %v1369 = vadd.f32 %v1368, %v596
  %v1370 = vadd.f32 %v1369, %v600
  %v1371 = vadd.f32 %v1370, %v606
  %v1372 = vadd.f32 %v1371, %v610
  %v1373 = vadd.f32 %v1372, %v616
  %v1374 = vadd.f32 %v1373, %v620
  %v1375 = vadd.f32 %v1374, %v626
  %v1376 = vadd.f32 %v1375, %v630
  %v1377 = vadd.f32 %v1376, %v636
  %v1378 = vadd.f32 %v1377, %v640
  %v1379 = vadd.f32 %v1378, %v646
  %v1380 = vadd.f32 %v1379, %v650
  %v1381 = vadd.f32 %v1380, %v656
  %v1382 = vadd.f32 %v1381, %v660
  %v1383 = vadd.f32 %v1382, %v666
  %v1384 = vadd.f32 %v1383, %v670
  %v1385 = vadd.f32 %v1384, %v676
  %v1386 = vadd.f32 %v1385, %v680
  %v1387 = vadd.f32 %v1386, %v686
  %v1388 = vadd.f32 %v1387, %v690
  %v1389 = vadd.f32 %v1388, %v696
  %v1390 = vadd.f32 %v1389, %v700
  %v1391 = vadd.f32 %v1390, %v706
  %v1392 = vadd.f32 %v1391, %v710
  %v1393 = vadd.f32 %v1392, %v716
  %v1394 = vadd.f32 %v1393, %v720
  %v1395 = vadd.f32 %v1394, %v726
  %v1396 = vadd.f32 %v1395, %v730
  %v1397 = vadd.f32 %v1396, %v736
  %v1398 = vadd.f32 %v1397, %v740
  %v1399 = vadd.f32 %v1398, %v746
  %v1400 = vadd.f32 %v1399, %v750
  %v1401 = vadd.f32 %v1400, %v756
  %v1402 = vadd.f32 %v1401, %v760
  %v1403 = vadd.f32 %v1402, %v766
  %v1404 = vsel %vm1354, %v770, 0.0
  %v1405 = vadd.f32 %v1403, %v1404
  %v1406 = vrot.slane %v1405, 4
  %v1407 = vadd.f32 %v1405, %v1406
  %v1408 = vrot.slane %v1407, 2
  %v1409 = vadd.f32 %v1407, %v1408
  %v1410 = vrot.slane %v1409, 1
  %v1411 = vadd.f32 %v1409, %v1410
  %v1412 = vadd.f32 %v851, %v857
  %v1413 = vadd.f32 %v1412, %v861
  %v1414 = vadd.f32 %v1413, %v867
  %v1415 = vadd.f32 %v1414, %v871
  %v1416 = vadd.f32 %v1415, %v877
  %v1417 = vadd.f32 %v1416, %v881
  %v1418 = vadd.f32 %v1417, %v887
  %v1419 = vadd.f32 %v1418, %v891
  %v1420 = vadd.f32 %v1419, %v897
  %v1421 = vadd.f32 %v1420, %v901
  %v1422 = vadd.f32 %v1421, %v907
  %v1423 = vadd.f32 %v1422, %v911
  %v1424 = vadd.f32 %v1423, %v917
  %v1425 = vadd.f32 %v1424, %v921
  %v1426 = vadd.f32 %v1425, %v927
  %v1427 = vadd.f32 %v1426, %v931
  %v1428 = vadd.f32 %v1427, %v937
  %v1429 = vadd.f32 %v1428, %v941
  %v1430 = vadd.f32 %v1429, %v947
  %v1431 = vadd.f32 %v1430, %v951
  %v1432 = vadd.f32 %v1431, %v957
  %v1433 = vadd.f32 %v1432, %v961
  %v1434 = vadd.f32 %v1433, %v967
  %v1435 = vadd.f32 %v1434, %v971
  %v1436 = vadd.f32 %v1435, %v977
  %v1437 = vadd.f32 %v1436, %v981
  %v1438 = vadd.f32 %v1437, %v987
  %v1439 = vadd.f32 %v1438, %v991
  %v1440 = vadd.f32 %v1439, %v997
  %v1441 = vadd.f32 %v1440, %v1001
  %v1442 = vadd.f32 %v1441, %v1007
  %v1443 = vadd.f32 %v1442, %v1011
  %v1444 = vadd.f32 %v1443, %v1017
  %v1445 = vadd.f32 %v1444, %v1021
  %v1446 = vadd.f32 %v1445, %v1027
  %v1447 = vadd.f32 %v1446, %v1031
  %v1448 = vadd.f32 %v1447, %v1037
  %v1449 = vadd.f32 %v1448, %v1041
  %v1450 = vadd.f32 %v1449, %v1047
  %v1451 = vadd.f32 %v1450, %v1051
  %v1452 = vadd.f32 %v1451, %v1057
  %v1453 = vsel %vm1354, %v1061, 0.0
  %v1454 = vadd.f32 %v1452, %v1453
  %v1455 = vrot.slane %v1454, 4
  %v1456 = vadd.f32 %v1454, %v1455
  %v1457 = vrot.slane %v1456, 2
  %v1458 = vadd.f32 %v1456, %v1457
  %v1459 = vrot.slane %v1458, 1
  %v1460 = vadd.f32 %v1458, %v1459
  %v1461 = vadd.f32 %v853, %v859
  %v1462 = vadd.f32 %v1461, %v863
  %v1463 = vadd.f32 %v1462, %v869
  %v1464 = vadd.f32 %v1463, %v873
  %v1465 = vadd.f32 %v1464, %v879
  %v1466 = vadd.f32 %v1465, %v883
  %v1467 = vadd.f32 %v1466, %v889
  %v1468 = vadd.f32 %v1467, %v893
  %v1469 = vadd.f32 %v1468, %v899
  %v1470 = vadd.f32 %v1469, %v903
  %v1471 = vadd.f32 %v1470, %v909
  %v1472 = vadd.f32 %v1471, %v913
  %v1473 = vadd.f32 %v1472, %v919
  %v1474 = vadd.f32 %v1473, %v923
  %v1475 = vadd.f32 %v1474, %v929
  %v1476 = vadd.f32 %v1475, %v933
  %v1477 = vadd.f32 %v1476, %v939
  %v1478 = vadd.f32 %v1477, %v943
  %v1479 = vadd.f32 %v1478, %v949
  %v1480 = vadd.f32 %v1479, %v953
  %v1481 = vadd.f32 %v1480, %v959
  %v1482 = vadd.f32 %v1481, %v963
  %v1483 = vadd.f32 %v1482, %v969
  %v1484 = vadd.f32 %v1483, %v973
  %v1485 = vadd.f32 %v1484, %v979
  %v1486 = vadd.f32 %v1485, %v983
  %v1487 = vadd.f32 %v1486, %v989
  %v1488 = vadd.f32 %v1487, %v993
  %v1489 = vadd.f32 %v1488, %v999
  %v1490 = vadd.f32 %v1489, %v1003
  %v1491 = vadd.f32 %v1490, %v1009
  %v1492 = vadd.f32 %v1491, %v1013
  %v1493 = vadd.f32 %v1492, %v1019
  %v1494 = vadd.f32 %v1493, %v1023
  %v1495 = vadd.f32 %v1494, %v1029
  %v1496 = vadd.f32 %v1495, %v1033
  %v1497 = vadd.f32 %v1496, %v1039
  %v1498 = vadd.f32 %v1497, %v1043
  %v1499 = vadd.f32 %v1498, %v1049
  %v1500 = vadd.f32 %v1499, %v1053
  %v1501 = vadd.f32 %v1500, %v1059
  %v1502 = vsel %vm1354, %v1063, 0.0
  %v1503 = vadd.f32 %v1501, %v1502
  %v1504 = vrot.slane %v1503, 4
  %v1505 = vadd.f32 %v1503, %v1504
  %v1506 = vrot.slane %v1505, 2
  %v1507 = vadd.f32 %v1505, %v1506
  %v1508 = vrot.slane %v1507, 1
  %v1509 = vadd.f32 %v1507, %v1508
  %vm1510 = vcmask 523264
  %v1511 = vsel %vm1510, %v1135, 0.0
  %v1512 = vsel %vm1510, %v1140, 0.0
  %v1513 = vadd.f32 %v1511, %v1512
  %v1514 = vsel %vm1510, %v1143, 0.0
  %v1515 = vadd.f32 %v1513, %v1514
  %v1516 = vsel %vm1510, %v1148, 0.0
  %v1517 = vadd.f32 %v1515, %v1516
  %v1518 = vsel %vm1510, %v1151, 0.0
  %v1519 = vadd.f32 %v1517, %v1518
  %v1520 = vsel %vm1510, %v1156, 0.0
  %v1521 = vadd.f32 %v1519, %v1520
  %v1522 = vsel %vm1510, %v1159, 0.0
  %v1523 = vadd.f32 %v1521, %v1522
  %v1524 = vsel %vm1510, %v1164, 0.0
  %v1525 = vadd.f32 %v1523, %v1524
  %v1526 = vsel %vm1510, %v1167, 0.0
  %v1527 = vadd.f32 %v1525, %v1526
  %v1528 = vsel %vm1510, %v1172, 0.0
  %v1529 = vadd.f32 %v1527, %v1528
  %v1530 = vsel %vm1510, %v1175, 0.0
  %v1531 = vadd.f32 %v1529, %v1530
  %v1532 = vsel %vm1510, %v1180, 0.0
  %v1533 = vadd.f32 %v1531, %v1532
  %v1534 = vsel %vm1510, %v1183, 0.0
  %v1535 = vadd.f32 %v1533, %v1534
  %v1536 = vsel %vm1510, %v1188, 0.0
  %v1537 = vadd.f32 %v1535, %v1536
  %v1538 = vsel %vm1510, %v1191, 0.0
  %v1539 = vadd.f32 %v1537, %v1538
  %v1540 = vsel %vm1510, %v1196, 0.0
  %v1541 = vadd.f32 %v1539, %v1540
  %v1542 = vsel %vm1510, %v1199, 0.0
  %v1543 = vadd.f32 %v1541, %v1542
  %v1544 = vsel %vm1510, %v1204, 0.0
  %v1545 = vadd.f32 %v1543, %v1544
  %v1546 = vsel %vm1510, %v1207, 0.0
  %v1547 = vadd.f32 %v1545, %v1546
  %v1548 = vsel %vm1510, %v1212, 0.0
  %v1549 = vadd.f32 %v1547, %v1548
  %v1550 = vsel %vm1510, %v1215, 0.0
  %v1551 = vadd.f32 %v1549, %v1550
  %v1552 = vsel %vm1510, %v1220, 0.0
  %v1553 = vadd.f32 %v1551, %v1552
  %v1554 = vsel %vm1510, %v1223, 0.0
  %v1555 = vadd.f32 %v1553, %v1554
  %v1556 = vsel %vm1510, %v1228, 0.0
  %v1557 = vadd.f32 %v1555, %v1556
  %v1558 = vsel %vm1510, %v1231, 0.0
  %v1559 = vadd.f32 %v1557, %v1558
  %v1560 = vsel %vm1510, %v1236, 0.0
  %v1561 = vadd.f32 %v1559, %v1560
  %v1562 = vsel %vm1510, %v1239, 0.0
  %v1563 = vadd.f32 %v1561, %v1562
  %v1564 = vsel %vm1510, %v1244, 0.0
  %v1565 = vadd.f32 %v1563, %v1564
  %v1566 = vsel %vm1510, %v1247, 0.0
  %v1567 = vadd.f32 %v1565, %v1566
  %v1568 = vsel %vm1510, %v1252, 0.0
  %v1569 = vadd.f32 %v1567, %v1568
  %v1570 = vsel %vm1510, %v1255, 0.0
  %v1571 = vadd.f32 %v1569, %v1570
  %v1572 = vsel %vm1510, %v1260, 0.0
  %v1573 = vadd.f32 %v1571, %v1572
  %v1574 = vsel %vm1510, %v1263, 0.0
  %v1575 = vadd.f32 %v1573, %v1574
  %v1576 = vsel %vm1510, %v1268, 0.0
  %v1577 = vadd.f32 %v1575, %v1576
  %v1578 = vsel %vm1510, %v1271, 0.0
  %v1579 = vadd.f32 %v1577, %v1578
  %v1580 = vsel %vm1510, %v1276, 0.0
  %v1581 = vadd.f32 %v1579, %v1580
  %v1582 = vsel %vm1510, %v1279, 0.0
  %v1583 = vadd.f32 %v1581, %v1582
  %v1584 = vsel %vm1510, %v1284, 0.0
  %v1585 = vadd.f32 %v1583, %v1584
  %v1586 = vsel %vm1510, %v1287, 0.0
  %v1587 = vadd.f32 %v1585, %v1586
  %v1588 = vsel %vm1510, %v1292, 0.0
  %v1589 = vadd.f32 %v1587, %v1588
  %v1590 = vsel %vm1510, %v1295, 0.0
  %v1591 = vadd.f32 %v1589, %v1590
  %v1592 = vsel %vm1510, %v1300, 0.0
  %v1593 = vadd.f32 %v1591, %v1592
  %vm1594 = vcmask 517120
  %v1595 = vsel %vm1594, %v1303, 0.0
  %v1596 = vadd.f32 %v1593, %v1595
  %v1597 = vrot.slane %v1596, 4
  %v1598 = vadd.f32 %v1596, %v1597
  %v1599 = vrot.slane %v1598, 2
  %v1600 = vadd.f32 %v1598, %v1599
  %v1601 = vrot.slane %v1600, 1
  %v1602 = vadd.f32 %v1600, %v1601
  %v1603 = vmul.f32 %v558, %v558
  %v1604 = vmul.f32 %v560, %v560
  %v1605 = vmul.f32 %v851, %v851
  %v1606 = vmul.f32 %v853, %v853
  %v1607 = vmul.f32 %v1135, %v1135
  %v1608 = vmul.f32 %v564, %v564
  %v1609 = vmul.f32 %v566, %v566
  %v1610 = vmul.f32 %v857, %v857
  %v1611 = vmul.f32 %v859, %v859
  %v1612 = vmul.f32 %v1140, %v1140
  %v1613 = vmul.f32 %v568, %v568
  %v1614 = vmul.f32 %v570, %v570
  %v1615 = vmul.f32 %v861, %v861
  %v1616 = vmul.f32 %v863, %v863
  %v1617 = vmul.f32 %v1143, %v1143
  %v1618 = vmul.f32 %v574, %v574
  %v1619 = vmul.f32 %v576, %v576
  %v1620 = vmul.f32 %v867, %v867
  %v1621 = vmul.f32 %v869, %v869
  %v1622 = vmul.f32 %v1148, %v1148
  %v1623 = vmul.f32 %v578, %v578
  %v1624 = vmul.f32 %v580, %v580
  %v1625 = vmul.f32 %v871, %v871
  %v1626 = vmul.f32 %v873, %v873
  %v1627 = vmul.f32 %v1151, %v1151
  %v1628 = vmul.f32 %v584, %v584
  %v1629 = vmul.f32 %v586, %v586
  %v1630 = vmul.f32 %v877, %v877
  %v1631 = vmul.f32 %v879, %v879
  %v1632 = vmul.f32 %v1156, %v1156
  %v1633 = vmul.f32 %v588, %v588
  %v1634 = vmul.f32 %v590, %v590
  %v1635 = vmul.f32 %v881, %v881
  %v1636 = vmul.f32 %v883, %v883
  %v1637 = vmul.f32 %v1159, %v1159
  %v1638 = vmul.f32 %v594, %v594
  %v1639 = vmul.f32 %v596, %v596
  %v1640 = vmul.f32 %v887, %v887
  %v1641 = vmul.f32 %v889, %v889
  %v1642 = vmul.f32 %v1164, %v1164
  %v1643 = vmul.f32 %v598, %v598
  %v1644 = vmul.f32 %v600, %v600
  %v1645 = vmul.f32 %v891, %v891
  %v1646 = vmul.f32 %v893, %v893
  %v1647 = vmul.f32 %v1167, %v1167
  %v1648 = vmul.f32 %v604, %v604
  %v1649 = vmul.f32 %v606, %v606
  %v1650 = vmul.f32 %v897, %v897
  %v1651 = vmul.f32 %v899, %v899
  %v1652 = vmul.f32 %v1172, %v1172
  %v1653 = vmul.f32 %v608, %v608
  %v1654 = vmul.f32 %v610, %v610
  %v1655 = vmul.f32 %v901, %v901
  %v1656 = vmul.f32 %v903, %v903
  %v1657 = vmul.f32 %v1175, %v1175
  %v1658 = vmul.f32 %v614, %v614
  %v1659 = vmul.f32 %v616, %v616
  %v1660 = vmul.f32 %v907, %v907
  %v1661 = vmul.f32 %v909, %v909
  %v1662 = vmul.f32 %v1180, %v1180
  %v1663 = vmul.f32 %v618, %v618
  %v1664 = vmul.f32 %v620, %v620
  %v1665 = vmul.f32 %v911, %v911
  %v1666 = vmul.f32 %v913, %v913
  %v1667 = vmul.f32 %v1183, %v1183
  %v1668 = vmul.f32 %v624, %v624
  %v1669 = vmul.f32 %v626, %v626
  %v1670 = vmul.f32 %v917, %v917
  %v1671 = vmul.f32 %v919, %v919
  %v1672 = vmul.f32 %v1188, %v1188
  %v1673 = vmul.f32 %v628, %v628
  %v1674 = vmul.f32 %v630, %v630
  %v1675 = vmul.f32 %v921, %v921
  %v1676 = vmul.f32 %v923, %v923
  %v1677 = vmul.f32 %v1191, %v1191
  %v1678 = vmul.f32 %v634, %v634
  %v1679 = vmul.f32 %v636, %v636
  %v1680 = vmul.f32 %v927, %v927
  %v1681 = vmul.f32 %v929, %v929
  %v1682 = vmul.f32 %v1196, %v1196
  %v1683 = vmul.f32 %v638, %v638
  %v1684 = vmul.f32 %v640, %v640
  %v1685 = vmul.f32 %v931, %v931
  %v1686 = vmul.f32 %v933, %v933
  %v1687 = vmul.f32 %v1199, %v1199
  %v1688 = vmul.f32 %v644, %v644
  %v1689 = vmul.f32 %v646, %v646
  %v1690 = vmul.f32 %v937, %v937
  %v1691 = vmul.f32 %v939, %v939
  %v1692 = vmul.f32 %v1204, %v1204
  %v1693 = vmul.f32 %v648, %v648
  %v1694 = vmul.f32 %v650, %v650
  %v1695 = vmul.f32 %v941, %v941
  %v1696 = vmul.f32 %v943, %v943
  %v1697 = vmul.f32 %v1207, %v1207
  %v1698 = vmul.f32 %v654, %v654
  %v1699 = vmul.f32 %v656, %v656
  %v1700 = vmul.f32 %v947, %v947
  %v1701 = vmul.f32 %v949, %v949
  %v1702 = vmul.f32 %v1212, %v1212
  %v1703 = vmul.f32 %v658, %v658
  %v1704 = vmul.f32 %v660, %v660
  %v1705 = vmul.f32 %v951, %v951
  %v1706 = vmul.f32 %v953, %v953
  %v1707 = vmul.f32 %v1215, %v1215
  %v1708 = vmul.f32 %v664, %v664
  %v1709 = vmul.f32 %v666, %v666
  %v1710 = vmul.f32 %v957, %v957
  %v1711 = vmul.f32 %v959, %v959
  %v1712 = vmul.f32 %v1220, %v1220
  %v1713 = vmul.f32 %v668, %v668
  %v1714 = vmul.f32 %v670, %v670
  %v1715 = vmul.f32 %v961, %v961
  %v1716 = vmul.f32 %v963, %v963
  %v1717 = vmul.f32 %v1223, %v1223
  %v1718 = vmul.f32 %v674, %v674
  %v1719 = vmul.f32 %v676, %v676
  %v1720 = vmul.f32 %v967, %v967
  %v1721 = vmul.f32 %v969, %v969
  %v1722 = vmul.f32 %v1228, %v1228
  %v1723 = vmul.f32 %v678, %v678
  %v1724 = vmul.f32 %v680, %v680
  %v1725 = vmul.f32 %v971, %v971
  %v1726 = vmul.f32 %v973, %v973
  %v1727 = vmul.f32 %v1231, %v1231
  %v1728 = vmul.f32 %v684, %v684
  %v1729 = vmul.f32 %v686, %v686
  %v1730 = vmul.f32 %v977, %v977
  %v1731 = vmul.f32 %v979, %v979
  %v1732 = vmul.f32 %v1236, %v1236
  %v1733 = vmul.f32 %v688, %v688
  %v1734 = vmul.f32 %v690, %v690
  %v1735 = vmul.f32 %v981, %v981
  %v1736 = vmul.f32 %v983, %v983
  %v1737 = vmul.f32 %v1239, %v1239
  %v1738 = vmul.f32 %v694, %v694
  %v1739 = vmul.f32 %v696, %v696
  %v1740 = vmul.f32 %v987, %v987
  %v1741 = vmul.f32 %v989, %v989
  %v1742 = vmul.f32 %v1244, %v1244
  %v1743 = vmul.f32 %v698, %v698
  %v1744 = vmul.f32 %v700, %v700
  %v1745 = vmul.f32 %v991, %v991
  %v1746 = vmul.f32 %v993, %v993
  %v1747 = vmul.f32 %v1247, %v1247
  %v1748 = vmul.f32 %v704, %v704
  %v1749 = vmul.f32 %v706, %v706
  %v1750 = vmul.f32 %v997, %v997
  %v1751 = vmul.f32 %v999, %v999
  %v1752 = vmul.f32 %v1252, %v1252
  %v1753 = vmul.f32 %v708, %v708
  %v1754 = vmul.f32 %v710, %v710
  %v1755 = vmul.f32 %v1001, %v1001
  %v1756 = vmul.f32 %v1003, %v1003
  %v1757 = vmul.f32 %v1255, %v1255
  %v1758 = vmul.f32 %v714, %v714
  %v1759 = vmul.f32 %v716, %v716
  %v1760 = vmul.f32 %v1007, %v1007
  %v1761 = vmul.f32 %v1009, %v1009
  %v1762 = vmul.f32 %v1260, %v1260
  %v1763 = vmul.f32 %v718, %v718
  %v1764 = vmul.f32 %v720, %v720
  %v1765 = vmul.f32 %v1011, %v1011
  %v1766 = vmul.f32 %v1013, %v1013
  %v1767 = vmul.f32 %v1263, %v1263
  %v1768 = vmul.f32 %v724, %v724
  %v1769 = vmul.f32 %v726, %v726
  %v1770 = vmul.f32 %v1017, %v1017
  %v1771 = vmul.f32 %v1019, %v1019
  %v1772 = vmul.f32 %v1268, %v1268
  %v1773 = vmul.f32 %v728, %v728
  %v1774 = vmul.f32 %v730, %v730
  %v1775 = vmul.f32 %v1021, %v1021
  %v1776 = vmul.f32 %v1023, %v1023
  %v1777 = vmul.f32 %v1271, %v1271
  %v1778 = vmul.f32 %v734, %v734
  %v1779 = vmul.f32 %v736, %v736
  %v1780 = vmul.f32 %v1027, %v1027
  %v1781 = vmul.f32 %v1029, %v1029
  %v1782 = vmul.f32 %v1276, %v1276
  %v1783 = vmul.f32 %v738, %v738
  %v1784 = vmul.f32 %v740, %v740
  %v1785 = vmul.f32 %v1031, %v1031
  %v1786 = vmul.f32 %v1033, %v1033
  %v1787 = vmul.f32 %v1279, %v1279
  %v1788 = vmul.f32 %v744, %v744
  %v1789 = vmul.f32 %v746, %v746
  %v1790 = vmul.f32 %v1037, %v1037
  %v1791 = vmul.f32 %v1039, %v1039
  %v1792 = vmul.f32 %v1284, %v1284
  %v1793 = vmul.f32 %v748, %v748
  %v1794 = vmul.f32 %v750, %v750
  %v1795 = vmul.f32 %v1041, %v1041
  %v1796 = vmul.f32 %v1043, %v1043
  %v1797 = vmul.f32 %v1287, %v1287
  %v1798 = vmul.f32 %v754, %v754
  %v1799 = vmul.f32 %v756, %v756
  %v1800 = vmul.f32 %v1047, %v1047
  %v1801 = vmul.f32 %v1049, %v1049
  %v1802 = vmul.f32 %v1292, %v1292
  %v1803 = vmul.f32 %v758, %v758
  %v1804 = vmul.f32 %v760, %v760
  %v1805 = vmul.f32 %v1051, %v1051
  %v1806 = vmul.f32 %v1053, %v1053
  %v1807 = vmul.f32 %v1295, %v1295
  %v1808 = vmul.f32 %v764, %v764
  %v1809 = vmul.f32 %v766, %v766
  %v1810 = vmul.f32 %v1057, %v1057
  %v1811 = vmul.f32 %v1059, %v1059
  %v1812 = vmul.f32 %v1300, %v1300
  %v1813 = vmul.f32 %v768, %v768
  %v1814 = vmul.f32 %v770, %v770
  %v1815 = vmul.f32 %v1061, %v1061
  %v1816 = vmul.f32 %v1063, %v1063
  %v1817 = vmul.f32 %v1303, %v1303
  %v1818 = vadd.f32 %v1603, %v1608
  %v1819 = vadd.f32 %v1818, %v1613
  %v1820 = vadd.f32 %v1819, %v1618
  %v1821 = vadd.f32 %v1820, %v1623
  %v1822 = vadd.f32 %v1821, %v1628
  %v1823 = vadd.f32 %v1822, %v1633
  %v1824 = vadd.f32 %v1823, %v1638
  %v1825 = vadd.f32 %v1824, %v1643
  %v1826 = vadd.f32 %v1825, %v1648
  %v1827 = vadd.f32 %v1826, %v1653
  %v1828 = vadd.f32 %v1827, %v1658
  %v1829 = vadd.f32 %v1828, %v1663
  %v1830 = vadd.f32 %v1829, %v1668
  %v1831 = vadd.f32 %v1830, %v1673
  %v1832 = vadd.f32 %v1831, %v1678
  %v1833 = vadd.f32 %v1832, %v1683
  %v1834 = vadd.f32 %v1833, %v1688
  %v1835 = vadd.f32 %v1834, %v1693
  %v1836 = vadd.f32 %v1835, %v1698
  %v1837 = vadd.f32 %v1836, %v1703
  %v1838 = vadd.f32 %v1837, %v1708
  %v1839 = vadd.f32 %v1838, %v1713
  %v1840 = vadd.f32 %v1839, %v1718
  %v1841 = vadd.f32 %v1840, %v1723
  %v1842 = vadd.f32 %v1841, %v1728
  %v1843 = vadd.f32 %v1842, %v1733
  %v1844 = vadd.f32 %v1843, %v1738
  %v1845 = vadd.f32 %v1844, %v1743
  %v1846 = vadd.f32 %v1845, %v1748
  %v1847 = vadd.f32 %v1846, %v1753
  %v1848 = vadd.f32 %v1847, %v1758
  %v1849 = vadd.f32 %v1848, %v1763
  %v1850 = vadd.f32 %v1849, %v1768
  %v1851 = vadd.f32 %v1850, %v1773
  %v1852 = vadd.f32 %v1851, %v1778
  %v1853 = vadd.f32 %v1852, %v1783
  %v1854 = vadd.f32 %v1853, %v1788
  %v1855 = vadd.f32 %v1854, %v1793
  %v1856 = vadd.f32 %v1855, %v1798
  %v1857 = vadd.f32 %v1856, %v1803
  %v1858 = vadd.f32 %v1857, %v1808
  %v1859 = vsel %vm1354, %v1813, 0.0
  %v1860 = vadd.f32 %v1858, %v1859
  %v1861 = vrot.slane %v1860, 4
  %v1862 = vadd.f32 %v1860, %v1861
  %v1863 = vrot.slane %v1862, 2
  %v1864 = vadd.f32 %v1862, %v1863
  %v1865 = vrot.slane %v1864, 1
  %v1866 = vadd.f32 %v1864, %v1865
  %v1867 = vadd.f32 %v1604, %v1609
  %v1868 = vadd.f32 %v1867, %v1614
  %v1869 = vadd.f32 %v1868, %v1619
  %v1870 = vadd.f32 %v1869, %v1624
  %v1871 = vadd.f32 %v1870, %v1629
  %v1872 = vadd.f32 %v1871, %v1634
  %v1873 = vadd.f32 %v1872, %v1639
  %v1874 = vadd.f32 %v1873, %v1644
  %v1875 = vadd.f32 %v1874, %v1649
  %v1876 = vadd.f32 %v1875, %v1654
  %v1877 = vadd.f32 %v1876, %v1659
  %v1878 = vadd.f32 %v1877, %v1664
  %v1879 = vadd.f32 %v1878, %v1669
  %v1880 = vadd.f32 %v1879, %v1674
  %v1881 = vadd.f32 %v1880, %v1679
  %v1882 = vadd.f32 %v1881, %v1684
  %v1883 = vadd.f32 %v1882, %v1689
  %v1884 = vadd.f32 %v1883, %v1694
  %v1885 = vadd.f32 %v1884, %v1699
  %v1886 = vadd.f32 %v1885, %v1704
  %v1887 = vadd.f32 %v1886, %v1709
  %v1888 = vadd.f32 %v1887, %v1714
  %v1889 = vadd.f32 %v1888, %v1719
  %v1890 = vadd.f32 %v1889, %v1724
  %v1891 = vadd.f32 %v1890, %v1729
  %v1892 = vadd.f32 %v1891, %v1734
  %v1893 = vadd.f32 %v1892, %v1739
  %v1894 = vadd.f32 %v1893, %v1744
  %v1895 = vadd.f32 %v1894, %v1749
  %v1896 = vadd.f32 %v1895, %v1754
  %v1897 = vadd.f32 %v1896, %v1759
  %v1898 = vadd.f32 %v1897, %v1764
  %v1899 = vadd.f32 %v1898, %v1769
  %v1900 = vadd.f32 %v1899, %v1774
  %v1901 = vadd.f32 %v1900, %v1779
  %v1902 = vadd.f32 %v1901, %v1784
  %v1903 = vadd.f32 %v1902, %v1789
  %v1904 = vadd.f32 %v1903, %v1794
  %v1905 = vadd.f32 %v1904, %v1799
  %v1906 = vadd.f32 %v1905, %v1804
  %v1907 = vadd.f32 %v1906, %v1809
  %v1908 = vsel %vm1354, %v1814, 0.0
  %v1909 = vadd.f32 %v1907, %v1908
  %v1910 = vrot.slane %v1909, 4
  %v1911 = vadd.f32 %v1909, %v1910
  %v1912 = vrot.slane %v1911, 2
  %v1913 = vadd.f32 %v1911, %v1912
  %v1914 = vrot.slane %v1913, 1
  %v1915 = vadd.f32 %v1913, %v1914
  %v1916 = vadd.f32 %v1605, %v1610
  %v1917 = vadd.f32 %v1916, %v1615
  %v1918 = vadd.f32 %v1917, %v1620
  %v1919 = vadd.f32 %v1918, %v1625
  %v1920 = vadd.f32 %v1919, %v1630
  %v1921 = vadd.f32 %v1920, %v1635
  %v1922 = vadd.f32 %v1921, %v1640
  %v1923 = vadd.f32 %v1922, %v1645
  %v1924 = vadd.f32 %v1923, %v1650
  %v1925 = vadd.f32 %v1924, %v1655
  %v1926 = vadd.f32 %v1925, %v1660
  %v1927 = vadd.f32 %v1926, %v1665
  %v1928 = vadd.f32 %v1927, %v1670
  %v1929 = vadd.f32 %v1928, %v1675
  %v1930 = vadd.f32 %v1929, %v1680
  %v1931 = vadd.f32 %v1930, %v1685
  %v1932 = vadd.f32 %v1931, %v1690
  %v1933 = vadd.f32 %v1932, %v1695
  %v1934 = vadd.f32 %v1933, %v1700
  %v1935 = vadd.f32 %v1934, %v1705
  %v1936 = vadd.f32 %v1935, %v1710
  %v1937 = vadd.f32 %v1936, %v1715
  %v1938 = vadd.f32 %v1937, %v1720
  %v1939 = vadd.f32 %v1938, %v1725
  %v1940 = vadd.f32 %v1939, %v1730
  %v1941 = vadd.f32 %v1940, %v1735
  %v1942 = vadd.f32 %v1941, %v1740
  %v1943 = vadd.f32 %v1942, %v1745
  %v1944 = vadd.f32 %v1943, %v1750
  %v1945 = vadd.f32 %v1944, %v1755
  %v1946 = vadd.f32 %v1945, %v1760
  %v1947 = vadd.f32 %v1946, %v1765
  %v1948 = vadd.f32 %v1947, %v1770
  %v1949 = vadd.f32 %v1948, %v1775
  %v1950 = vadd.f32 %v1949, %v1780
  %v1951 = vadd.f32 %v1950, %v1785
  %v1952 = vadd.f32 %v1951, %v1790
  %v1953 = vadd.f32 %v1952, %v1795
  %v1954 = vadd.f32 %v1953, %v1800
  %v1955 = vadd.f32 %v1954, %v1805
  %v1956 = vadd.f32 %v1955, %v1810
  %v1957 = vsel %vm1354, %v1815, 0.0
  %v1958 = vadd.f32 %v1956, %v1957
  %v1959 = vrot.slane %v1958, 4
  %v1960 = vadd.f32 %v1958, %v1959
  %v1961 = vrot.slane %v1960, 2
  %v1962 = vadd.f32 %v1960, %v1961
  %v1963 = vrot.slane %v1962, 1
  %v1964 = vadd.f32 %v1962, %v1963
  %v1965 = vadd.f32 %v1606, %v1611
  %v1966 = vadd.f32 %v1965, %v1616
  %v1967 = vadd.f32 %v1966, %v1621
  %v1968 = vadd.f32 %v1967, %v1626
  %v1969 = vadd.f32 %v1968, %v1631
  %v1970 = vadd.f32 %v1969, %v1636
  %v1971 = vadd.f32 %v1970, %v1641
  %v1972 = vadd.f32 %v1971, %v1646
  %v1973 = vadd.f32 %v1972, %v1651
  %v1974 = vadd.f32 %v1973, %v1656
  %v1975 = vadd.f32 %v1974, %v1661
  %v1976 = vadd.f32 %v1975, %v1666
  %v1977 = vadd.f32 %v1976, %v1671
  %v1978 = vadd.f32 %v1977, %v1676
  %v1979 = vadd.f32 %v1978, %v1681
  %v1980 = vadd.f32 %v1979, %v1686
  %v1981 = vadd.f32 %v1980, %v1691
  %v1982 = vadd.f32 %v1981, %v1696
  %v1983 = vadd.f32 %v1982, %v1701
  %v1984 = vadd.f32 %v1983, %v1706
  %v1985 = vadd.f32 %v1984, %v1711
  %v1986 = vadd.f32 %v1985, %v1716
  %v1987 = vadd.f32 %v1986, %v1721
  %v1988 = vadd.f32 %v1987, %v1726
  %v1989 = vadd.f32 %v1988, %v1731
  %v1990 = vadd.f32 %v1989, %v1736
  %v1991 = vadd.f32 %v1990, %v1741
  %v1992 = vadd.f32 %v1991, %v1746
  %v1993 = vadd.f32 %v1992, %v1751
  %v1994 = vadd.f32 %v1993, %v1756
  %v1995 = vadd.f32 %v1994, %v1761
  %v1996 = vadd.f32 %v1995, %v1766
  %v1997 = vadd.f32 %v1996, %v1771
  %v1998 = vadd.f32 %v1997, %v1776
  %v1999 = vadd.f32 %v1998, %v1781
  %v2000 = vadd.f32 %v1999, %v1786
  %v2001 = vadd.f32 %v2000, %v1791
  %v2002 = vadd.f32 %v2001, %v1796
  %v2003 = vadd.f32 %v2002, %v1801
  %v2004 = vadd.f32 %v2003, %v1806
  %v2005 = vadd.f32 %v2004, %v1811
  %v2006 = vsel %vm1354, %v1816, 0.0
  %v2007 = vadd.f32 %v2005, %v2006
  %v2008 = vrot.slane %v2007, 4
  %v2009 = vadd.f32 %v2007, %v2008
  %v2010 = vrot.slane %v2009, 2
  %v2011 = vadd.f32 %v2009, %v2010
  %v2012 = vrot.slane %v2011, 1
  %v2013 = vadd.f32 %v2011, %v2012
  %v2014 = vsel %vm1510, %v1607, 0.0
  %v2015 = vsel %vm1510, %v1612, 0.0
  %v2016 = vadd.f32 %v2014, %v2015
  %v2017 = vsel %vm1510, %v1617, 0.0
  %v2018 = vadd.f32 %v2016, %v2017
  %v2019 = vsel %vm1510, %v1622, 0.0
  %v2020 = vadd.f32 %v2018, %v2019
  %v2021 = vsel %vm1510, %v1627, 0.0
  %v2022 = vadd.f32 %v2020, %v2021
  %v2023 = vsel %vm1510, %v1632, 0.0
  %v2024 = vadd.f32 %v2022, %v2023
  %v2025 = vsel %vm1510, %v1637, 0.0
  %v2026 = vadd.f32 %v2024, %v2025
  %v2027 = vsel %vm1510, %v1642, 0.0
  %v2028 = vadd.f32 %v2026, %v2027
  %v2029 = vsel %vm1510, %v1647, 0.0
  %v2030 = vadd.f32 %v2028, %v2029
  %v2031 = vsel %vm1510, %v1652, 0.0
  %v2032 = vadd.f32 %v2030, %v2031
  %v2033 = vsel %vm1510, %v1657, 0.0
  %v2034 = vadd.f32 %v2032, %v2033
  %v2035 = vsel %vm1510, %v1662, 0.0
  %v2036 = vadd.f32 %v2034, %v2035
  %v2037 = vsel %vm1510, %v1667, 0.0
  %v2038 = vadd.f32 %v2036, %v2037
  %v2039 = vsel %vm1510, %v1672, 0.0
  %v2040 = vadd.f32 %v2038, %v2039
  %v2041 = vsel %vm1510, %v1677, 0.0
  %v2042 = vadd.f32 %v2040, %v2041
  %v2043 = vsel %vm1510, %v1682, 0.0
  %v2044 = vadd.f32 %v2042, %v2043
  %v2045 = vsel %vm1510, %v1687, 0.0
  %v2046 = vadd.f32 %v2044, %v2045
  %v2047 = vsel %vm1510, %v1692, 0.0
  %v2048 = vadd.f32 %v2046, %v2047
  %v2049 = vsel %vm1510, %v1697, 0.0
  %v2050 = vadd.f32 %v2048, %v2049
  %v2051 = vsel %vm1510, %v1702, 0.0
  %v2052 = vadd.f32 %v2050, %v2051
  %v2053 = vsel %vm1510, %v1707, 0.0
  %v2054 = vadd.f32 %v2052, %v2053
  %v2055 = vsel %vm1510, %v1712, 0.0
  %v2056 = vadd.f32 %v2054, %v2055
  %v2057 = vsel %vm1510, %v1717, 0.0
  %v2058 = vadd.f32 %v2056, %v2057
  %v2059 = vsel %vm1510, %v1722, 0.0
  %v2060 = vadd.f32 %v2058, %v2059
  %v2061 = vsel %vm1510, %v1727, 0.0
  %v2062 = vadd.f32 %v2060, %v2061
  %v2063 = vsel %vm1510, %v1732, 0.0
  %v2064 = vadd.f32 %v2062, %v2063
  %v2065 = vsel %vm1510, %v1737, 0.0
  %v2066 = vadd.f32 %v2064, %v2065
  %v2067 = vsel %vm1510, %v1742, 0.0
  %v2068 = vadd.f32 %v2066, %v2067
  %v2069 = vsel %vm1510, %v1747, 0.0
  %v2070 = vadd.f32 %v2068, %v2069
  %v2071 = vsel %vm1510, %v1752, 0.0
  %v2072 = vadd.f32 %v2070, %v2071
  %v2073 = vsel %vm1510, %v1757, 0.0
  %v2074 = vadd.f32 %v2072, %v2073
  %v2075 = vsel %vm1510, %v1762, 0.0
  %v2076 = vadd.f32 %v2074, %v2075
  %v2077 = vsel %vm1510, %v1767, 0.0
  %v2078 = vadd.f32 %v2076, %v2077
  %v2079 = vsel %vm1510, %v1772, 0.0
  %v2080 = vadd.f32 %v2078, %v2079
  %v2081 = vsel %vm1510, %v1777, 0.0
  %v2082 = vadd.f32 %v2080, %v2081
  %v2083 = vsel %vm1510, %v1782, 0.0
  %v2084 = vadd.f32 %v2082, %v2083
  %v2085 = vsel %vm1510, %v1787, 0.0
  %v2086 = vadd.f32 %v2084, %v2085
  %v2087 = vsel %vm1510, %v1792, 0.0
  %v2088 = vadd.f32 %v2086, %v2087
  %v2089 = vsel %vm1510, %v1797, 0.0
  %v2090 = vadd.f32 %v2088, %v2089
  %v2091 = vsel %vm1510, %v1802, 0.0
  %v2092 = vadd.f32 %v2090, %v2091
  %v2093 = vsel %vm1510, %v1807, 0.0
  %v2094 = vadd.f32 %v2092, %v2093
  %v2095 = vsel %vm1510, %v1812, 0.0
  %v2096 = vadd.f32 %v2094, %v2095
  %v2097 = vsel %vm1594, %v1817, 0.0
  %v2098 = vadd.f32 %v2096, %v2097
  %v2099 = vrot.slane %v2098, 4
  %v2100 = vadd.f32 %v2098, %v2099
  %v2101 = vrot.slane %v2100, 2
  %v2102 = vadd.f32 %v2100, %v2101
  %v2103 = vrot.slane %v2102, 1
  %v2104 = vadd.f32 %v2102, %v2103
  %v2105 = vmul.f32 %v1362, 0.00295858
  %v2106 = vmul.f32 %v1411, 0.00295858
  %v2107 = vmul.f32 %v1460, 0.00295858
  %v2108 = vmul.f32 %v1509, 0.00295858
  %v2109 = vmul.f32 %v1602, 0.00295858
  %v2110 = vmul.f32 %v1866, 0.00295858
  %v2111 = vmul.f32 %v1915, 0.00295858
  %v2112 = vmul.f32 %v1964, 0.00295858
  %v2113 = vmul.f32 %v2013, 0.00295858
  %v2114 = vmul.f32 %v2104, 0.00295858
  %v2115 = vmul.f32 %v2105, %v2105
  %v2116 = vmul.f32 %v2106, %v2106
  %v2117 = vmul.f32 %v2107, %v2107
  %v2118 = vmul.f32 %v2108, %v2108
  %v2119 = vmul.f32 %v2109, %v2109
  %v2120 = vsub.f32 %v2110, %v2115
  %v2121 = vsub.f32 %v2111, %v2116
  %v2122 = vsub.f32 %v2112, %v2117
  %v2123 = vsub.f32 %v2113, %v2118
  %v2124 = vsub.f32 %v2114, %v2119
  %v2125 = vadd.f32 %v2120, 1e-05
  %v2126 = vadd.f32 %v2121, 1e-05
  %v2127 = vadd.f32 %v2122, 1e-05
  %v2128 = vadd.f32 %v2123, 1e-05
  %v2129 = vadd.f32 %v2124, 1e-05
  %v2130 = vrsqrt.pop %v2125
  %v2131 = vrsqrt.pop %v2126
  %v2132 = vrsqrt.pop %v2127
  %v2133 = vrsqrt.pop %v2128
  %v2134 = vrsqrt.pop %v2129
  %v2136 = vlaneseq
  %v2137 = vshrl.u32 %v2136, 7
  %v2138 = vsub.s32 0, %v2137
  %v2139 = vrot.slane %v1308, %v2138
  %v2140 = vlaneseq
  %v2141 = vshrl.u32 %v2140, 7
  %v2142 = vsub.s32 1, %v2141
  %v2143 = vrot.slane %v1308, %v2142
  %v2144 = vlaneseq
  %v2145 = vshrl.u32 %v2144, 7
  %v2146 = vsub.s32 2, %v2145
  %v2147 = vrot.slane %v1308, %v2146
  %v2148 = vlaneseq
  %v2149 = vshrl.u32 %v2148, 7
  %v2150 = vsub.s32 3, %v2149
  %v2151 = vrot.slane %v1308, %v2150
  %v2152 = vlaneseq
  %v2153 = vshrl.u32 %v2152, 7
  %v2154 = vsub.s32 4, %v2153
  %v2155 = vrot.slane %v1308, %v2154
  %v2161 = vmul.f32 %v2130, %v2139
  %v2162 = vmul.f32 %v2131, %v2143
  %v2163 = vmul.f32 %v2132, %v2147
  %v2164 = vmul.f32 %v2133, %v2151
  %v2165 = vmul.f32 %v2134, %v2155
  %v2166 = vmul.f32 %v2105, %v2161
  %v2167 = vmul.f32 %v2106, %v2162
  %v2168 = vmul.f32 %v2107, %v2163
  %v2169 = vmul.f32 %v2108, %v2164
  %v2170 = vmul.f32 %v2109, %v2165
  %v2176 = vcombine.low %v2166, %v2167
  %v2177 = vcombine.low %v2168, %v2169
  %v2179 = vunpack.c.l.s4 1966171168
  %v2180 = vunpack.c.0.s8 %v2179
  %v2181 = vlaneseq
  %v2182 = vshrl.u32 %v2181, 7
  %v2183 = vsub.s32 %v2180, %v2182
  %v2184 = vrot.slane %v2176, %v2183
  %v2186 = vunpack.c.l.s4 1966171168
  %v2187 = vunpack.c.0.s8 %v2186
  %v2188 = vlaneseq
  %v2189 = vshrl.u32 %v2188, 7
  %v2190 = vsub.s32 %v2187, %v2189
  %v2191 = vrot.slane %v2177, %v2190
  %v2193 = vunpack.c.l.s4 1966171168
  %v2194 = vunpack.c.0.s8 %v2193
  %v2195 = vlaneseq
  %v2196 = vshrl.u32 %v2195, 7
  %v2197 = vsub.s32 %v2194, %v2196
  %v2198 = vrot.slane %v2170, %v2197
  %v2199 = vcombine.low %v2184, %v2191
  %v2201 = vunpack.c.l.s4 1966171168
  %v2202 = vunpack.c.0.s8 %v2201
  %v2203 = vlaneseq
  %v2204 = vshrl.u32 %v2203, 7
  %v2205 = vsub.s32 %v2202, %v2204
  %v2206 = vrot.slane %v2199, %v2205
  %v2208 = vunpack.c.l.s4 1966171168
  %v2209 = vunpack.c.0.s8 %v2208
  %v2210 = vlaneseq
  %v2211 = vshrl.u32 %v2210, 7
  %v2212 = vsub.s32 %v2209, %v2211
  %v2213 = vrot.slane %v2198, %v2212
  %v2214 = vcombine.low %v2206, %v2213
  %v2216 = vsub.f32 %v1312, %v2214
  %v2217 = vlaneseq
  %v2218 = vshrl.u32 %v2217, 7
  %v2219 = vsub.s32 0, %v2218
  %v2220 = vrot.slane %v2161, %v2219
  %v2221 = vlaneseq
  %v2222 = vshrl.u32 %v2221, 7
  %v2223 = vsub.s32 0, %v2222
  %v2224 = vrot.slane %v2162, %v2223
  %v2225 = vlaneseq
  %v2226 = vshrl.u32 %v2225, 7
  %v2227 = vsub.s32 0, %v2226
  %v2228 = vrot.slane %v2163, %v2227
  %v2229 = vlaneseq
  %v2230 = vshrl.u32 %v2229, 7
  %v2231 = vsub.s32 0, %v2230
  %v2232 = vrot.slane %v2164, %v2231
  %v2233 = vlaneseq
  %v2234 = vshrl.u32 %v2233, 7
  %v2235 = vsub.s32 0, %v2234
  %v2236 = vrot.slane %v2165, %v2235
  %v2237 = vmul.f32 %v514, %v2220
  %v2238 = vmul.f32 %v516, %v2224
  %v2239 = vmul.f32 %v807, %v2228
  %v2240 = vmul.f32 %v809, %v2232
  %v2241 = vmul.f32 %v1100, %v2236
  %v2242 = vmul.f32 %v518, %v2220
  %v2243 = vmul.f32 %v520, %v2224
  %v2244 = vmul.f32 %v811, %v2228
  %v2245 = vmul.f32 %v813, %v2232
  %v2246 = vmul.f32 %v1103, %v2236
  %v2247 = vmul.f32 %v524, %v2220
  %v2248 = vmul.f32 %v526, %v2224
  %v2249 = vmul.f32 %v817, %v2228
  %v2250 = vmul.f32 %v819, %v2232
  %v2251 = vmul.f32 %v1108, %v2236
  %v2252 = vmul.f32 %v528, %v2220
  %v2253 = vmul.f32 %v530, %v2224
  %v2254 = vmul.f32 %v821, %v2228
  %v2255 = vmul.f32 %v823, %v2232
  %v2256 = vmul.f32 %v1111, %v2236
  %v2257 = vmul.f32 %v534, %v2220
  %v2258 = vmul.f32 %v536, %v2224
  %v2259 = vmul.f32 %v827, %v2228
  %v2260 = vmul.f32 %v829, %v2232
  %v2261 = vmul.f32 %v1116, %v2236
  %v2262 = vmul.f32 %v538, %v2220
  %v2263 = vmul.f32 %v540, %v2224
  %v2264 = vmul.f32 %v831, %v2228
  %v2265 = vmul.f32 %v833, %v2232
  %v2266 = vmul.f32 %v1119, %v2236
  %v2267 = vmul.f32 %v544, %v2220
  %v2268 = vmul.f32 %v546, %v2224
  %v2269 = vmul.f32 %v837, %v2228
  %v2270 = vmul.f32 %v839, %v2232
  %v2271 = vmul.f32 %v1124, %v2236
  %v2272 = vmul.f32 %v548, %v2220
  %v2273 = vmul.f32 %v550, %v2224
  %v2274 = vmul.f32 %v841, %v2228
  %v2275 = vmul.f32 %v843, %v2232
  %v2276 = vmul.f32 %v1127, %v2236
  %v2277 = vmul.f32 %v554, %v2220
  %v2278 = vmul.f32 %v556, %v2224
  %v2279 = vmul.f32 %v847, %v2228
  %v2280 = vmul.f32 %v849, %v2232
  %v2281 = vmul.f32 %v1132, %v2236
  %v2283 = vlaneseq
  %v2284 = vshrl.u32 %v2283, 7
  %v2285 = vsub.s32 0, %v2284
  %v2286 = vrot.slane %v2216, %v2285
  %v2287 = vlaneseq
  %v2288 = vshrl.u32 %v2287, 7
  %v2289 = vsub.s32 1, %v2288
  %v2290 = vrot.slane %v2216, %v2289
  %v2291 = vlaneseq
  %v2292 = vshrl.u32 %v2291, 7
  %v2293 = vsub.s32 2, %v2292
  %v2294 = vrot.slane %v2216, %v2293
  %v2295 = vlaneseq
  %v2296 = vshrl.u32 %v2295, 7
  %v2297 = vsub.s32 3, %v2296
  %v2298 = vrot.slane %v2216, %v2297
  %v2299 = vlaneseq
  %v2300 = vshrl.u32 %v2299, 7
  %v2301 = vsub.s32 4, %v2300
  %v2302 = vrot.slane %v2216, %v2301
  %v2308 = vadd.f32 %v2237, %v2286
  %v2309 = vadd.f32 %v2238, %v2290
  %v2310 = vadd.f32 %v2239, %v2294
  %v2311 = vadd.f32 %v2240, %v2298
  %v2312 = vadd.f32 %v2241, %v2302
  %v2313 = vadd.f32 %v2242, %v2286
  %v2314 = vadd.f32 %v2243, %v2290
  %v2315 = vadd.f32 %v2244, %v2294
  %v2316 = vadd.f32 %v2245, %v2298
  %v2317 = vadd.f32 %v2246, %v2302
  %v2318 = vadd.f32 %v2247, %v2286
  %v2319 = vadd.f32 %v2248, %v2290
  %v2320 = vadd.f32 %v2249, %v2294
  %v2321 = vadd.f32 %v2250, %v2298
  %v2322 = vadd.f32 %v2251, %v2302
  %v2323 = vadd.f32 %v2252, %v2286
  %v2324 = vadd.f32 %v2253, %v2290
  %v2325 = vadd.f32 %v2254, %v2294
  %v2326 = vadd.f32 %v2255, %v2298
  %v2327 = vadd.f32 %v2256, %v2302
  %v2328 = vadd.f32 %v2257, %v2286
  %v2329 = vadd.f32 %v2258, %v2290
  %v2330 = vadd.f32 %v2259, %v2294
  %v2331 = vadd.f32 %v2260, %v2298
  %v2332 = vadd.f32 %v2261, %v2302
  %v2333 = vadd.f32 %v2262, %v2286
  %v2334 = vadd.f32 %v2263, %v2290
  %v2335 = vadd.f32 %v2264, %v2294
  %v2336 = vadd.f32 %v2265, %v2298
  %v2337 = vadd.f32 %v2266, %v2302
  %v2338 = vadd.f32 %v2267, %v2286
  %v2339 = vadd.f32 %v2268, %v2290
  %v2340 = vadd.f32 %v2269, %v2294
  %v2341 = vadd.f32 %v2270, %v2298
  %v2342 = vadd.f32 %v2271, %v2302
  %v2343 = vadd.f32 %v2272, %v2286
  %v2344 = vadd.f32 %v2273, %v2290
  %v2345 = vadd.f32 %v2274, %v2294
  %v2346 = vadd.f32 %v2275, %v2298
  %v2347 = vadd.f32 %v2276, %v2302
  %v2348 = vadd.f32 %v2277, %v2286
  %v2349 = vadd.f32 %v2278, %v2290
  %v2350 = vadd.f32 %v2279, %v2294
  %v2351 = vadd.f32 %v2280, %v2298
  %v2352 = vadd.f32 %v2281, %v2302
  %v2353 = vmax.f32 %v2308, 0.0
  %v2354 = vmax.f32 %v2309, 0.0
  %v2355 = vmax.f32 %v2310, 0.0
  %v2356 = vmax.f32 %v2311, 0.0
  %v2357 = vmax.f32 %v2312, 0.0
  %v2358 = vmax.f32 %v2313, 0.0
  %v2359 = vmax.f32 %v2314, 0.0
  %v2360 = vmax.f32 %v2315, 0.0
  %v2361 = vmax.f32 %v2316, 0.0
  %v2362 = vmax.f32 %v2317, 0.0
  %v2363 = vmax.f32 %v2318, 0.0
  %v2364 = vmax.f32 %v2319, 0.0
  %v2365 = vmax.f32 %v2320, 0.0
  %v2366 = vmax.f32 %v2321, 0.0
  %v2367 = vmax.f32 %v2322, 0.0
  %v2368 = vmax.f32 %v2323, 0.0
  %v2369 = vmax.f32 %v2324, 0.0
  %v2370 = vmax.f32 %v2325, 0.0
  %v2371 = vmax.f32 %v2326, 0.0
  %v2372 = vmax.f32 %v2327, 0.0
  %v2373 = vmax.f32 %v2328, 0.0
  %v2374 = vmax.f32 %v2329, 0.0
  %v2375 = vmax.f32 %v2330, 0.0
  %v2376 = vmax.f32 %v2331, 0.0
  %v2377 = vmax.f32 %v2332, 0.0
  %v2378 = vmax.f32 %v2333, 0.0
  %v2379 = vmax.f32 %v2334, 0.0
  %v2380 = vmax.f32 %v2335, 0.0
  %v2381 = vmax.f32 %v2336, 0.0
  %v2382 = vmax.f32 %v2337, 0.0
  %v2383 = vmax.f32 %v2338, 0.0
  %v2384 = vmax.f32 %v2339, 0.0
  %v2385 = vmax.f32 %v2340, 0.0
  %v2386 = vmax.f32 %v2341, 0.0
  %v2387 = vmax.f32 %v2342, 0.0
  %v2388 = vmax.f32 %v2343, 0.0
  %v2389 = vmax.f32 %v2344, 0.0
  %v2390 = vmax.f32 %v2345, 0.0
  %v2391 = vmax.f32 %v2346, 0.0
  %v2392 = vmax.f32 %v2347, 0.0
  %v2393 = vmax.f32 %v2348, 0.0
  %v2394 = vmax.f32 %v2349, 0.0
  %v2395 = vmax.f32 %v2350, 0.0
  %v2396 = vmax.f32 %v2351, 0.0
  %v2397 = vmax.f32 %v2352, 0.0
  %v2398 = vpack.c.bf16 %v2358, %v2353
  %v2399 = vpack.c.bf16 %v2359, %v2354
  %v2400 = vpack.c.bf16 %v2360, %v2355
  %v2401 = vpack.c.bf16 %v2361, %v2356
  %v2402 = vpack.c.bf16 %v2362, %v2357
  %v2403 = vpack.c.bf16 %v2368, %v2363
  %v2404 = vpack.c.bf16 %v2369, %v2364
  %v2405 = vpack.c.bf16 %v2370, %v2365
  %v2406 = vpack.c.bf16 %v2371, %v2366
  %v2407 = vpack.c.bf16 %v2372, %v2367
  %v2408 = vpack.c.bf16 %v2378, %v2373
  %v2409 = vpack.c.bf16 %v2379, %v2374
  %v2410 = vpack.c.bf16 %v2380, %v2375
  %v2411 = vpack.c.bf16 %v2381, %v2376
  %v2412 = vpack.c.bf16 %v2382, %v2377
  %v2413 = vpack.c.bf16 %v2388, %v2383
  %v2414 = vpack.c.bf16 %v2389, %v2384
  %v2415 = vpack.c.bf16 %v2390, %v2385
  %v2416 = vpack.c.bf16 %v2391, %v2386
  %v2417 = vpack.c.bf16 %v2392, %v2387
  %v2418 = vpack.c.bf16 %v2393, %v2393
  %v2419 = vpack.c.bf16 %v2394, %v2394
  %v2420 = vpack.c.bf16 %v2395, %v2395
  %v2421 = vpack.c.bf16 %v2396, %v2396
  %v2422 = vpack.c.bf16 %v2397, %v2397
  %v2423 = vld [vmem:[%s2] sm:$0xf]
  %v2424 = vld [vmem:[%s2 + $0x4] sm:$0xf]
  %v2425 = vld [vmem:[%s2 + $0x8] sm:$0xf]
  %v2426 = vld [vmem:[%s2 + $0xc] sm:$0xf]
  %v2427 = vld [vmem:[%s2 + $0x10] sm:$0xf]
  %v2428 = vld [vmem:[%s2 + $0x14] sm:$0xf]
  %v2429 = vld [vmem:[%s2 + $0x18] sm:$0xf]
  %v2430 = vld [vmem:[%s2 + $0x1c] sm:$0xf]
  %v2431 = vld [vmem:[%s2 + $0x20] sm:$0xf]
  %v2432 = vld [vmem:[%s2 + $0x24] sm:$0xf]
  %v2433 = vld [vmem:[%s2 + $0x28] sm:$0xf]
  %v2434 = vld [vmem:[%s2 + $0x2c] sm:$0xf]
  %v2435 = vld [vmem:[%s2 + $0x30] sm:$0xf]
  %v2436 = vld [vmem:[%s2 + $0x34] sm:$0xf]
  %v2437 = vld [vmem:[%s2 + $0x38] sm:$0xf]
  %v2438 = vld [vmem:[%s2 + $0x3c] sm:$0xf]
  %v2439 = vld [vmem:[%s2 + $0x40] sm:$0xf]
  %v2440 = vld [vmem:[%s2 + $0x44] sm:$0xf]
  %v2441 = vld [vmem:[%s2 + $0x48] sm:$0xf]
  %v2442 = vld [vmem:[%s2 + $0x4c] sm:$0xf]
  %v2443 = vld [vmem:[%s2 + $0x50] sm:$0xf]
  %v2444 = vld [vmem:[%s2 + $0x54] sm:$0xf]
  %v2445 = vld [vmem:[%s2 + $0x58] sm:$0xf]
  %v2446 = vld [vmem:[%s2 + $0x5c] sm:$0xf]
  %v2447 = vld [vmem:[%s2 + $0x60] sm:$0xf]
  %v2448 = vld [vmem:[%s2 + $0x64] sm:$0xf]
  %v2449 = vld [vmem:[%s2 + $0x68] sm:$0xf]
  %v2450 = vld [vmem:[%s2 + $0x6c] sm:$0xf]
  %v2451 = vld [vmem:[%s2 + $0x70] sm:$0xf]
  %v2452 = vld [vmem:[%s2 + $0x74] sm:$0xf]
  %v2453 = vld [vmem:[%s2 + $0x78] sm:$0xf]
  %v2454 = vld [vmem:[%s2 + $0x7c] sm:$0xf]
  %v2455 = vld [vmem:[%s2 + $0x80] sm:$0xf]
  %v2456 = vld [vmem:[%s2 + $0x84] sm:$0xf]
  %v2457 = vld [vmem:[%s2 + $0x88] sm:$0xf]
  %v2458 = vld [vmem:[%s2 + $0x8c] sm:$0xf]
  %v2459 = vld [vmem:[%s2 + $0x90] sm:$0xf]
  %v2460 = vld [vmem:[%s2 + $0x94] sm:$0xf]
  %v2461 = vld [vmem:[%s2 + $0x98] sm:$0xf]
  %v2462 = vld [vmem:[%s2 + $0x9c] sm:$0xf]
  %v2463 = vld [vmem:[%s2 + $0xa0] sm:$0xf]
  %v2464 = vld [vmem:[%s2 + $0xa4] sm:$0xf]
  %v2465 = vld [vmem:[%s2 + $0xa8] sm:$0xf]
  %v2466 = vld [vmem:[%s2 + $0xac] sm:$0xf]
  %v2467 = vld [vmem:[%s2 + $0xb0] sm:$0xf]
  %v2468 = vld [vmem:[%s2 + $0xb4] sm:$0xf]
  %v2469 = vld [vmem:[%s2 + $0xb8] sm:$0xf]
  %v2470 = vld [vmem:[%s2 + $0xbc] sm:$0xf]
  %v2471 = vld [vmem:[%s2 + $0xc0] sm:$0xf]
  %v2472 = vld [vmem:[%s2 + $0xc4] sm:$0xf]
  %v2473 = vld [vmem:[%s2 + $0xc8] sm:$0xf]
  %v2474 = vld [vmem:[%s2 + $0xcc] sm:$0xf]
  %v2475 = vld [vmem:[%s2 + $0xd0] sm:$0xf]
  %v2476 = vld [vmem:[%s2 + $0xd4] sm:$0xf]
  %v2477 = vld [vmem:[%s2 + $0xd8] sm:$0xf]
  %v2478 = vld [vmem:[%s2 + $0xdc] sm:$0xf]
  %v2479 = vld [vmem:[%s2 + $0xe0] sm:$0xf]
  %v2480 = vld [vmem:[%s2 + $0xe4] sm:$0xf]
  %v2481 = vld [vmem:[%s2 + $0xe8] sm:$0xf]
  %v2482 = vld [vmem:[%s2 + $0xec] sm:$0xf]
  %v2483 = vld [vmem:[%s2 + $0xf0] sm:$0xf]
  %v2484 = vld [vmem:[%s2 + $0xf4] sm:$0xf]
  %v2485 = vld [vmem:[%s2 + $0xf8] sm:$0xf]
  %v2486 = vld [vmem:[%s2 + $0xfc] sm:$0xf]
  %v2487 = vld [vmem:[%s2 + $0x100] sm:$0xf]
  %v2488 = vld [vmem:[%s2 + $0x104] sm:$0xf]
  %v2489 = vld [vmem:[%s2 + $0x108] sm:$0xf]
  %v2490 = vld [vmem:[%s2 + $0x10c] sm:$0xf]
  %v2491 = vld [vmem:[%s2 + $0x110] sm:$0xf]
  %v2492 = vld [vmem:[%s2 + $0x114] sm:$0xf]
  %v2493 = vld [vmem:[%s2 + $0x118] sm:$0xf]
  %v2494 = vld [vmem:[%s2 + $0x11c] sm:$0xf]
  %v2567 = vunpack.c.l.b16 %v2423
  %v2568 = vunpack.c.l.b16 %v2424
  %v2569 = vunpack.c.l.b16 %v2425
  %v2570 = vunpack.c.l.b16 %v2426
  %v2571 = vunpack.c.l.b16 %v2427
  %v2572 = vunpack.c.l.b16 %v2428
  %v2573 = vunpack.c.l.b16 %v2429
  %v2574 = vunpack.c.l.b16 %v2430
  %v2575 = vunpack.c.l.b16 %v2431
  %v2576 = vunpack.c.l.b16 %v2432
  %v2577 = vunpack.c.l.b16 %v2433
  %v2578 = vunpack.c.l.b16 %v2434
  %v2579 = vunpack.c.l.b16 %v2435
  %v2580 = vunpack.c.l.b16 %v2436
  %v2581 = vunpack.c.l.b16 %v2437
  %v2582 = vunpack.c.l.b16 %v2438
  %v2583 = vunpack.c.l.b16 %v2439
  %v2584 = vunpack.c.l.b16 %v2440
  %v2585 = vunpack.c.l.b16 %v2441
  %v2586 = vunpack.c.l.b16 %v2442
  %v2587 = vunpack.c.l.b16 %v2443
  %v2588 = vunpack.c.l.b16 %v2444
  %v2589 = vunpack.c.l.b16 %v2445
  %v2590 = vunpack.c.l.b16 %v2446
  %v2591 = vunpack.c.l.b16 %v2447
  %v2592 = vunpack.c.l.b16 %v2448
  %v2593 = vunpack.c.l.b16 %v2449
  %v2594 = vunpack.c.l.b16 %v2450
  %v2595 = vunpack.c.l.b16 %v2451
  %v2596 = vunpack.c.l.b16 %v2452
  %v2597 = vunpack.c.l.b16 %v2453
  %v2598 = vunpack.c.l.b16 %v2454
  %v2599 = vunpack.c.l.b16 %v2455
  %v2600 = vunpack.c.l.b16 %v2456
  %v2601 = vunpack.c.l.b16 %v2457
  %v2602 = vunpack.c.l.b16 %v2458
  %v2603 = vunpack.c.l.b16 %v2459
  %v2604 = vunpack.c.l.b16 %v2460
  %v2605 = vunpack.c.l.b16 %v2461
  %v2606 = vunpack.c.l.b16 %v2462
  %v2607 = vunpack.c.l.b16 %v2463
  %v2608 = vunpack.c.l.b16 %v2464
  %v2609 = vunpack.c.l.b16 %v2465
  %v2610 = vunpack.c.l.b16 %v2466
  %v2611 = vunpack.c.l.b16 %v2467
  %v2612 = vunpack.c.l.b16 %v2468
  %v2613 = vunpack.c.l.b16 %v2469
  %v2614 = vunpack.c.l.b16 %v2470
  %v2615 = vunpack.c.l.b16 %v2471
  %v2616 = vunpack.c.l.b16 %v2472
  %v2617 = vunpack.c.l.b16 %v2473
  %v2618 = vunpack.c.l.b16 %v2474
  %v2619 = vunpack.c.l.b16 %v2475
  %v2620 = vunpack.c.l.b16 %v2476
  %v2621 = vunpack.c.l.b16 %v2477
  %v2622 = vunpack.c.l.b16 %v2478
  %v2623 = vunpack.c.l.b16 %v2479
  %v2624 = vunpack.c.l.b16 %v2480
  %v2625 = vunpack.c.l.b16 %v2481
  %v2626 = vunpack.c.l.b16 %v2482
  %v2627 = vunpack.c.l.b16 %v2483
  %v2628 = vunpack.c.l.b16 %v2484
  %v2629 = vunpack.c.l.b16 %v2485
  %v2630 = vunpack.c.l.b16 %v2486
  %v2631 = vunpack.c.l.b16 %v2487
  %v2632 = vunpack.c.l.b16 %v2488
  %v2633 = vunpack.c.l.b16 %v2489
  %v2634 = vunpack.c.l.b16 %v2490
  %v2635 = vunpack.c.l.b16 %v2491
  %v2636 = vunpack.c.l.b16 %v2492
  %v2637 = vunpack.c.l.b16 %v2493
  %v2638 = vunpack.c.l.b16 %v2494
  %v2639 = vpack.c.b16 %v2568, %v2567
  %v2640 = vpack.c.b16 %v2570, %v2569
  %v2641 = vpack.c.b16 %v2572, %v2571
  %v2642 = vpack.c.b16 %v2574, %v2573
  %v2643 = vpack.c.b16 %v2576, %v2575
  %v2644 = vpack.c.b16 %v2578, %v2577
  %v2645 = vpack.c.b16 %v2580, %v2579
  %v2646 = vpack.c.b16 %v2582, %v2581
  %v2647 = vpack.c.b16 %v2584, %v2583
  %v2648 = vpack.c.b16 %v2586, %v2585
  %v2649 = vpack.c.b16 %v2588, %v2587
  %v2650 = vpack.c.b16 %v2590, %v2589
  %v2651 = vpack.c.b16 %v2592, %v2591
  %v2652 = vpack.c.b16 %v2594, %v2593
  %v2653 = vpack.c.b16 %v2596, %v2595
  %v2654 = vpack.c.b16 %v2598, %v2597
  %v2655 = vpack.c.b16 %v2600, %v2599
  %v2656 = vpack.c.b16 %v2602, %v2601
  %v2657 = vpack.c.b16 %v2604, %v2603
  %v2658 = vpack.c.b16 %v2606, %v2605
  %v2659 = vpack.c.b16 %v2608, %v2607
  %v2660 = vpack.c.b16 %v2610, %v2609
  %v2661 = vpack.c.b16 %v2612, %v2611
  %v2662 = vpack.c.b16 %v2614, %v2613
  %v2663 = vpack.c.b16 %v2616, %v2615
  %v2664 = vpack.c.b16 %v2618, %v2617
  %v2665 = vpack.c.b16 %v2620, %v2619
  %v2666 = vpack.c.b16 %v2622, %v2621
  %v2667 = vpack.c.b16 %v2624, %v2623
  %v2668 = vpack.c.b16 %v2626, %v2625
  %v2669 = vpack.c.b16 %v2628, %v2627
  %v2670 = vpack.c.b16 %v2630, %v2629
  %v2671 = vpack.c.b16 %v2632, %v2631
  %v2672 = vpack.c.b16 %v2634, %v2633
  %v2673 = vpack.c.b16 %v2636, %v2635
  %v2674 = vpack.c.b16 %v2638, %v2637
  %v2712 = vsel %vm1510, %v2402, 0
  %v2715 = vsel %vm1510, %v2407, 0
  %v2718 = vsel %vm1510, %v2412, 0
  %v2721 = vsel %vm1510, %v2417, 0
  %v2724 = vsel %vm1510, %v2422, 0
  %2726 = vmatprep.subr.bf16.mxu0 0
  %2727 = vmatpush1.bf16.msra.mxu0 %v2646
  %2728 = vmatprep.subr.bf16.mxu0 0
  %2729 = vmatpush1.bf16.msra.mxu0 %v2645
  %2730 = vmatprep.subr.bf16.mxu0 0
  %2731 = vmatpush1.bf16.msra.mxu0 %v2644
  %2732 = vmatprep.subr.bf16.mxu0 0
  %2733 = vmatpush1.bf16.msra.mxu0 %v2643
  %2734 = vmatprep.subr.bf16.mxu0 0
  %2735 = vmatpush1.bf16.msra.mxu0 %v2642
  %2736 = vmatprep.subr.bf16.mxu0 0
  %2737 = vmatpush1.bf16.msra.mxu0 %v2641
  %2738 = vmatprep.subr.bf16.mxu0 0
  %2739 = vmatpush1.bf16.msra.mxu0 %v2640
  %2740 = vmatprep.subr.bf16.mxu0 0
  %2741 = vmatpush1.bf16.msra.mxu0 %v2639
  %2742 = vmatprep.subr.bf16.mxu0 0
  %2743 = vmatpush2.bf16.msra.mxu0 %v2654
  %2744 = vmatprep.subr.bf16.mxu0 0
  %2745 = vmatpush2.bf16.msra.mxu0 %v2653
  %2746 = vmatprep.subr.bf16.mxu0 0
  %2747 = vmatpush2.bf16.msra.mxu0 %v2652
  %2748 = vmatprep.subr.bf16.mxu0 0
  %2749 = vmatpush2.bf16.msra.mxu0 %v2651
  %2750 = vmatprep.subr.bf16.mxu0 0
  %2751 = vmatpush2.bf16.msra.mxu0 %v2650
  %2752 = vmatprep.subr.bf16.mxu0 0
  %2753 = vmatpush2.bf16.msra.mxu0 %v2649
  %2754 = vmatprep.subr.bf16.mxu0 0
  %2755 = vmatpush2.bf16.msra.mxu0 %v2648
  %2756 = vmatprep.subr.bf16.mxu0 0
  %2757 = vmatpush2.bf16.msra.mxu0 %v2647
  %2758 = vmatprep.mubr.bf16.mxu0 %v2399
  %2759 = vmatmul.mubr.bf16.gmra.mxu0 %v2398
  %v2760 = vpop.f32.mrf.mxu0
  %v2761 = vadd.f32 0.0, %v2760
  %v2762 = vpop.f32.mrf.mxu0
  %v2763 = vpop.f32.mrf.mxu0
  %v2764 = vadd.f32 0.0, %v2763
  %v2765 = vpop.f32.mrf.mxu0
  %2766 = vmatprep.mubr.bf16.mxu0 %v2404
  %2767 = vmatmul.mubr.bf16.gmra.mxu0 %v2403
  %v2768 = vpop.f32.mrf.mxu0
  %v2769 = vadd.f32 0.0, %v2768
  %v2770 = vpop.f32.mrf.mxu0
  %v2771 = vpop.f32.mrf.mxu0
  %v2772 = vadd.f32 0.0, %v2771
  %v2773 = vpop.f32.mrf.mxu0
  %2774 = vmatprep.mubr.bf16.mxu0 %v2409
  %2775 = vmatmul.mubr.bf16.gmra.mxu0 %v2408
  %v2776 = vpop.f32.mrf.mxu0
  %v2777 = vadd.f32 0.0, %v2776
  %v2778 = vpop.f32.mrf.mxu0
  %v2779 = vpop.f32.mrf.mxu0
  %v2780 = vadd.f32 0.0, %v2779
  %v2781 = vpop.f32.mrf.mxu0
  %2782 = vmatprep.mubr.bf16.mxu0 %v2414
  %2783 = vmatmul.mubr.bf16.gmra.mxu0 %v2413
  %v2784 = vpop.f32.mrf.mxu0
  %v2785 = vadd.f32 0.0, %v2784
  %v2786 = vpop.f32.mrf.mxu0
  %v2787 = vpop.f32.mrf.mxu0
  %v2788 = vadd.f32 0.0, %v2787
  %v2789 = vpop.f32.mrf.mxu0
  %2790 = vmatprep.mubr.bf16.mxu0 %v2419
  %2791 = vmatmul.mubr.bf16.gmra.mxu0 %v2418
  %v2792 = vpop.f32.mrf.mxu0
  %v2793 = vadd.f32 0.0, %v2792
  %v2794 = vpop.f32.mrf.mxu0
  %v2795 = vpop.f32.mrf.mxu0
  %v2796 = vpop.f32.mrf.mxu0
  %2797 = vdwg.mxu0
  %2798 = vmatprep.subr.bf16.mxu0 0
  %2799 = vmatpush1.bf16.msra.mxu0 %v2662
  %2800 = vmatprep.subr.bf16.mxu0 0
  %2801 = vmatpush1.bf16.msra.mxu0 %v2661
  %2802 = vmatprep.subr.bf16.mxu0 0
  %2803 = vmatpush1.bf16.msra.mxu0 %v2660
  %2804 = vmatprep.subr.bf16.mxu0 0
  %2805 = vmatpush1.bf16.msra.mxu0 %v2659
  %2806 = vmatprep.subr.bf16.mxu0 0
  %2807 = vmatpush1.bf16.msra.mxu0 %v2658
  %2808 = vmatprep.subr.bf16.mxu0 0
  %2809 = vmatpush1.bf16.msra.mxu0 %v2657
  %2810 = vmatprep.subr.bf16.mxu0 0
  %2811 = vmatpush1.bf16.msra.mxu0 %v2656
  %2812 = vmatprep.subr.bf16.mxu0 0
  %2813 = vmatpush1.bf16.msra.mxu0 %v2655
  %2814 = vmatprep.subr.bf16.mxu0 0
  %2815 = vmatpush2.bf16.msra.mxu0 %v2670
  %2816 = vmatprep.subr.bf16.mxu0 0
  %2817 = vmatpush2.bf16.msra.mxu0 %v2669
  %2818 = vmatprep.subr.bf16.mxu0 0
  %2819 = vmatpush2.bf16.msra.mxu0 %v2668
  %2820 = vmatprep.subr.bf16.mxu0 0
  %2821 = vmatpush2.bf16.msra.mxu0 %v2667
  %2822 = vmatprep.subr.bf16.mxu0 0
  %2823 = vmatpush2.bf16.msra.mxu0 %v2666
  %2824 = vmatprep.subr.bf16.mxu0 0
  %2825 = vmatpush2.bf16.msra.mxu0 %v2665
  %2826 = vmatprep.subr.bf16.mxu0 0
  %2827 = vmatpush2.bf16.msra.mxu0 %v2664
  %2828 = vmatprep.subr.bf16.mxu0 0
  %2829 = vmatpush2.bf16.msra.mxu0 %v2663
  %2830 = vmatprep.mubr.bf16.mxu0 %v2401
  %2831 = vmatmul.mubr.bf16.gmra.mxu0 %v2400
  %v2832 = vpop.f32.mrf.mxu0
  %v2833 = vadd.f32 %v2761, %v2832
  %v2834 = vpop.f32.mrf.mxu0
  %v2835 = vpop.f32.mrf.mxu0
  %v2836 = vadd.f32 %v2764, %v2835
  %v2837 = vpop.f32.mrf.mxu0
  %2838 = vmatprep.mubr.bf16.mxu0 %v2406
  %2839 = vmatmul.mubr.bf16.gmra.mxu0 %v2405
  %v2840 = vpop.f32.mrf.mxu0
  %v2841 = vadd.f32 %v2769, %v2840
  %v2842 = vpop.f32.mrf.mxu0
  %v2843 = vpop.f32.mrf.mxu0
  %v2844 = vadd.f32 %v2772, %v2843
  %v2845 = vpop.f32.mrf.mxu0
  %2846 = vmatprep.mubr.bf16.mxu0 %v2411
  %2847 = vmatmul.mubr.bf16.gmra.mxu0 %v2410
  %v2848 = vpop.f32.mrf.mxu0
  %v2849 = vadd.f32 %v2777, %v2848
  %v2850 = vpop.f32.mrf.mxu0
  %v2851 = vpop.f32.mrf.mxu0
  %v2852 = vadd.f32 %v2780, %v2851
  %v2853 = vpop.f32.mrf.mxu0
  %2854 = vmatprep.mubr.bf16.mxu0 %v2416
  %2855 = vmatmul.mubr.bf16.gmra.mxu0 %v2415
  %v2856 = vpop.f32.mrf.mxu0
  %v2857 = vadd.f32 %v2785, %v2856
  %v2858 = vpop.f32.mrf.mxu0
  %v2859 = vpop.f32.mrf.mxu0
  %v2860 = vadd.f32 %v2788, %v2859
  %v2861 = vpop.f32.mrf.mxu0
  %2862 = vmatprep.mubr.bf16.mxu0 %v2421
  %2863 = vmatmul.mubr.bf16.gmra.mxu0 %v2420
  %v2864 = vpop.f32.mrf.mxu0
  %v2865 = vadd.f32 %v2793, %v2864
  %v2866 = vpop.f32.mrf.mxu0
  %v2867 = vpop.f32.mrf.mxu0
  %v2868 = vpop.f32.mrf.mxu0
  %2869 = vdwg.mxu0
  %2870 = vmatprep.subr.bf16.mxu0 0
  %2871 = vmatpush1.bf16.msra.mxu0 0
  %2872 = vmatprep.subr.bf16.mxu0 0
  %2873 = vmatpush1.bf16.msra.mxu0 0
  %2874 = vmatprep.subr.bf16.mxu0 0
  %2875 = vmatpush1.bf16.msra.mxu0 0
  %2876 = vmatprep.subr.bf16.mxu0 0
  %2877 = vmatpush1.bf16.msra.mxu0 0
  %2878 = vmatprep.subr.bf16.mxu0 0
  %2879 = vmatpush1.bf16.msra.mxu0 %v2674
  %2880 = vmatprep.subr.bf16.mxu0 0
  %2881 = vmatpush1.bf16.msra.mxu0 %v2673
  %2882 = vmatprep.subr.bf16.mxu0 0
  %2883 = vmatpush1.bf16.msra.mxu0 %v2672
  %2884 = vmatprep.subr.bf16.mxu0 0
  %2885 = vmatpush1.bf16.msra.mxu0 %v2671
  %2886 = vmatprep.subr.bf16.mxu0 0
  %2887 = vmatpush2.bf16.msra.mxu0 0
  %2888 = vmatprep.subr.bf16.mxu0 0
  %2889 = vmatpush2.bf16.msra.mxu0 0
  %2890 = vmatprep.subr.bf16.mxu0 0
  %2891 = vmatpush2.bf16.msra.mxu0 0
  %2892 = vmatprep.subr.bf16.mxu0 0
  %2893 = vmatpush2.bf16.msra.mxu0 0
  %2894 = vmatprep.subr.bf16.mxu0 0
  %2895 = vmatpush2.bf16.msra.mxu0 0
  %2896 = vmatprep.subr.bf16.mxu0 0
  %2897 = vmatpush2.bf16.msra.mxu0 0
  %2898 = vmatprep.subr.bf16.mxu0 0
  %2899 = vmatpush2.bf16.msra.mxu0 0
  %2900 = vmatprep.subr.bf16.mxu0 0
  %2901 = vmatpush2.bf16.msra.mxu0 0
  %2902 = vmatprep.mubr.bf16.mxu0 0
  %2903 = vmatmul.mubr.bf16.gmra.mxu0 %v2712
  %v2904 = vpop.f32.mrf.mxu0
  %v2905 = vadd.f32 %v2833, %v2904
  %v2906 = vpop.f32.mrf.mxu0
  %v2907 = vpop.f32.mrf.mxu0
  %v2908 = vadd.f32 %v2836, %v2907
  %v2909 = vpop.f32.mrf.mxu0
  %2910 = vmatprep.mubr.bf16.mxu0 0
  %2911 = vmatmul.mubr.bf16.gmra.mxu0 %v2715
  %v2912 = vpop.f32.mrf.mxu0
  %v2913 = vadd.f32 %v2841, %v2912
  %v2914 = vpop.f32.mrf.mxu0
  %v2915 = vpop.f32.mrf.mxu0
  %v2916 = vadd.f32 %v2844, %v2915
  %v2917 = vpop.f32.mrf.mxu0
  %2918 = vmatprep.mubr.bf16.mxu0 0
  %2919 = vmatmul.mubr.bf16.gmra.mxu0 %v2718
  %v2920 = vpop.f32.mrf.mxu0
  %v2921 = vadd.f32 %v2849, %v2920
  %v2922 = vpop.f32.mrf.mxu0
  %v2923 = vpop.f32.mrf.mxu0
  %v2924 = vadd.f32 %v2852, %v2923
  %v2925 = vpop.f32.mrf.mxu0
  %2926 = vmatprep.mubr.bf16.mxu0 0
  %2927 = vmatmul.mubr.bf16.gmra.mxu0 %v2721
  %v2928 = vpop.f32.mrf.mxu0
  %v2929 = vadd.f32 %v2857, %v2928
  %v2930 = vpop.f32.mrf.mxu0
  %v2931 = vpop.f32.mrf.mxu0
  %v2932 = vadd.f32 %v2860, %v2931
  %v2933 = vpop.f32.mrf.mxu0
  %2934 = vmatprep.mubr.bf16.mxu0 0
  %2935 = vmatmul.mubr.bf16.gmra.mxu0 %v2724
  %v2936 = vpop.f32.mrf.mxu0
  %v2937 = vadd.f32 %v2865, %v2936
  %v2938 = vpop.f32.mrf.mxu0
  %v2939 = vpop.f32.mrf.mxu0
  %v2940 = vpop.f32.mrf.mxu0
  %2941 = vdwg.mxu0
  %v2942 = vld [vmem:[%s5 + $0x2] ss:$0 sm:$0xff]
  %v2943 = vld [vmem:[%s5 + $0x3] ss:$0 sm:$0xff]
  %v2944 = vadd.f32 %v2905, %v2908
  %v2945 = vadd.f32 %v2944, %v2913
  %v2946 = vadd.f32 %v2945, %v2916
  %v2947 = vadd.f32 %v2946, %v2921
  %v2948 = vadd.f32 %v2947, %v2924
  %v2949 = vadd.f32 %v2948, %v2929
  %v2950 = vadd.f32 %v2949, %v2932
  %v2951 = vadd.f32 %v2950, %v2937
  %v2952 = vrot.slane %v2951, 4
  %v2953 = vadd.f32 %v2951, %v2952
  %v2954 = vrot.slane %v2953, 2
  %v2955 = vadd.f32 %v2953, %v2954
  %v2956 = vrot.slane %v2955, 1
  %v2957 = vadd.f32 %v2955, %v2956
  %v2958 = vmul.f32 %v2905, %v2905
  %v2959 = vmul.f32 %v2908, %v2908
  %v2960 = vmul.f32 %v2913, %v2913
  %v2961 = vmul.f32 %v2916, %v2916
  %v2962 = vmul.f32 %v2921, %v2921
  %v2963 = vmul.f32 %v2924, %v2924
  %v2964 = vmul.f32 %v2929, %v2929
  %v2965 = vmul.f32 %v2932, %v2932
  %v2966 = vmul.f32 %v2937, %v2937
  %v2967 = vadd.f32 %v2958, %v2959
  %v2968 = vadd.f32 %v2967, %v2960
  %v2969 = vadd.f32 %v2968, %v2961
  %v2970 = vadd.f32 %v2969, %v2962
  %v2971 = vadd.f32 %v2970, %v2963
  %v2972 = vadd.f32 %v2971, %v2964
  %v2973 = vadd.f32 %v2972, %v2965
  %v2974 = vadd.f32 %v2973, %v2966
  %v2975 = vrot.slane %v2974, 4
  %v2976 = vadd.f32 %v2974, %v2975
  %v2977 = vrot.slane %v2976, 2
  %v2978 = vadd.f32 %v2976, %v2977
  %v2979 = vrot.slane %v2978, 1
  %v2980 = vadd.f32 %v2978, %v2979
  %v2981 = vmul.f32 %v2957, 0.013888889
  %v2982 = vmul.f32 %v2980, 0.013888889
  %v2983 = vmul.f32 %v2981, %v2981
  %v2984 = vsub.f32 %v2982, %v2983
  %v2985 = vadd.f32 %v2984, 1e-05
  %v2986 = vrsqrt.pop %v2985
  %v2987 = vmul.f32 %v2986, %v2942
  %v2988 = vmul.f32 %v2981, %v2987
  %v2989 = vsub.f32 %v2943, %v2988
  %v2990 = vmul.f32 %v2905, %v2987
  %v2991 = vmul.f32 %v2908, %v2987
  %v2992 = vmul.f32 %v2913, %v2987
  %v2993 = vmul.f32 %v2916, %v2987
  %v2994 = vmul.f32 %v2921, %v2987
  %v2995 = vmul.f32 %v2924, %v2987
  %v2996 = vmul.f32 %v2929, %v2987
  %v2997 = vmul.f32 %v2932, %v2987
  %v2998 = vmul.f32 %v2937, %v2987
  %v2999 = vadd.f32 %v2990, %v2989
  %v3000 = vadd.f32 %v2991, %v2989
  %v3001 = vadd.f32 %v2992, %v2989
  %v3002 = vadd.f32 %v2993, %v2989
  %v3003 = vadd.f32 %v2994, %v2989
  %v3004 = vadd.f32 %v2995, %v2989
  %v3005 = vadd.f32 %v2996, %v2989
  %v3006 = vadd.f32 %v2997, %v2989
  %v3007 = vadd.f32 %v2998, %v2989
  %v3008 = vmax.f32 %v2999, 0.0
  %v3009 = vmax.f32 %v3000, 0.0
  %v3010 = vmax.f32 %v3001, 0.0
  %v3011 = vmax.f32 %v3002, 0.0
  %v3012 = vmax.f32 %v3003, 0.0
  %v3013 = vmax.f32 %v3004, 0.0
  %v3014 = vmax.f32 %v3005, 0.0
  %v3015 = vmax.f32 %v3006, 0.0
  %v3016 = vmax.f32 %v3007, 0.0
  %v3017 = vpack.c.bf16 %v3009, %v3008
  %v3018 = vpack.c.bf16 %v3011, %v3010
  %v3019 = vpack.c.bf16 %v3013, %v3012
  %v3020 = vpack.c.bf16 %v3015, %v3014
  %v3021 = vpack.c.bf16 %v3016, %v3016
  %v3022 = vld [vmem:[%s3] sm:$0xf]
  %v3023 = vld [vmem:[%s3 + $0x4] sm:$0xf]
  %v3024 = vld [vmem:[%s3 + $0x8] sm:$0xf]
  %v3025 = vld [vmem:[%s3 + $0xc] sm:$0xf]
  %v3026 = vld [vmem:[%s3 + $0x10] sm:$0xf]
  %v3027 = vld [vmem:[%s3 + $0x14] sm:$0xf]
  %v3028 = vld [vmem:[%s3 + $0x18] sm:$0xf]
  %v3029 = vld [vmem:[%s3 + $0x1c] sm:$0xf]
  %v3030 = vld [vmem:[%s3 + $0x20] sm:$0xf]
  %v3040 = vunpack.c.l.b16 %v3022
  %v3041 = vunpack.c.l.b16 %v3023
  %v3042 = vunpack.c.l.b16 %v3024
  %v3043 = vunpack.c.l.b16 %v3025
  %v3044 = vunpack.c.l.b16 %v3026
  %v3045 = vunpack.c.l.b16 %v3027
  %v3046 = vunpack.c.l.b16 %v3028
  %v3047 = vunpack.c.l.b16 %v3029
  %v3048 = vunpack.c.l.b16 %v3030
  %v3049 = vpack.c.b16 %v3041, %v3040
  %v3050 = vpack.c.b16 %v3043, %v3042
  %v3051 = vpack.c.b16 %v3045, %v3044
  %v3052 = vpack.c.b16 %v3047, %v3046
  %v3053 = vpack.c.b16 %v3048, %v3048
  %vm3054 = vcmask 588800
  %v3056 = vsel %vm3054, %v3049, 0
  %v3059 = vsel %vm3054, %v3050, 0
  %v3062 = vsel %vm3054, %v3051, 0
  %v3065 = vsel %vm3054, %v3052, 0
  %v3068 = vsel %vm3054, %v3053, 0
  %vm3070 = vcmask 1043456
  %v3072 = vsel %vm3070, %v3021, 0
  %3074 = vmatprep.subr.bf16.mxu0 0
  %3075 = vmatpush1.bf16.msra.mxu0 0
  %3076 = vmatprep.subr.bf16.mxu0 0
  %3077 = vmatpush1.bf16.msra.mxu0 0
  %3078 = vmatprep.subr.bf16.mxu0 0
  %3079 = vmatpush1.bf16.msra.mxu0 0
  %3080 = vmatprep.subr.bf16.mxu0 0
  %3081 = vmatpush1.bf16.msra.mxu0 %v3072
  %3082 = vmatprep.subr.bf16.mxu0 0
  %3083 = vmatpush1.bf16.msra.mxu0 %v3020
  %3084 = vmatprep.subr.bf16.mxu0 0
  %3085 = vmatpush1.bf16.msra.mxu0 %v3019
  %3086 = vmatprep.subr.bf16.mxu0 0
  %3087 = vmatpush1.bf16.msra.mxu0 %v3018
  %3088 = vmatprep.subr.bf16.mxu0 0
  %3089 = vmatpush1.bf16.msra.mxu0 %v3017
  %3090 = vmatprep.subr.bf16.mxu0 0
  %3091 = vmatpush2.bf16.msra.mxu0 0
  %3092 = vmatprep.subr.bf16.mxu0 0
  %3093 = vmatpush2.bf16.msra.mxu0 0
  %3094 = vmatprep.subr.bf16.mxu0 0
  %3095 = vmatpush2.bf16.msra.mxu0 0
  %3096 = vmatprep.subr.bf16.mxu0 0
  %3097 = vmatpush2.bf16.msra.mxu0 0
  %3098 = vmatprep.subr.bf16.mxu0 0
  %3099 = vmatpush2.bf16.msra.mxu0 0
  %3100 = vmatprep.subr.bf16.mxu0 0
  %3101 = vmatpush2.bf16.msra.mxu0 0
  %3102 = vmatprep.subr.bf16.mxu0 0
  %3103 = vmatpush2.bf16.msra.mxu0 0
  %3104 = vmatprep.subr.bf16.mxu0 0
  %3105 = vmatpush2.bf16.msra.mxu0 0
  %3106 = vmatprep.mubr.bf16.mxu0 0
  %3107 = vmatmul.mubr.bf16.gmra.mxu0 %v3056
  %v3108 = vpop.f32.mrf.mxu0
  %v3109 = vadd.f32 0.0, %v3108
  %v3110 = vpop.f32.mrf.mxu0
  %v3111 = vpop.f32.mrf.mxu0
  %v3112 = vadd.f32 0.0, %v3111
  %v3113 = vpop.f32.mrf.mxu0
  %3114 = vmatprep.mubr.bf16.mxu0 0
  %3115 = vmatmul.mubr.bf16.gmra.mxu0 %v3059
  %v3116 = vpop.f32.mrf.mxu0
  %v3117 = vadd.f32 0.0, %v3116
  %v3118 = vpop.f32.mrf.mxu0
  %v3119 = vpop.f32.mrf.mxu0
  %v3120 = vadd.f32 0.0, %v3119
  %v3121 = vpop.f32.mrf.mxu0
  %3122 = vmatprep.mubr.bf16.mxu0 0
  %3123 = vmatmul.mubr.bf16.gmra.mxu0 %v3062
  %v3124 = vpop.f32.mrf.mxu0
  %v3125 = vadd.f32 0.0, %v3124
  %v3126 = vpop.f32.mrf.mxu0
  %v3127 = vpop.f32.mrf.mxu0
  %v3128 = vadd.f32 0.0, %v3127
  %v3129 = vpop.f32.mrf.mxu0
  %3130 = vmatprep.mubr.bf16.mxu0 0
  %3131 = vmatmul.mubr.bf16.gmra.mxu0 %v3065
  %v3132 = vpop.f32.mrf.mxu0
  %v3133 = vadd.f32 0.0, %v3132
  %v3134 = vpop.f32.mrf.mxu0
  %v3135 = vpop.f32.mrf.mxu0
  %v3136 = vadd.f32 0.0, %v3135
  %v3137 = vpop.f32.mrf.mxu0
  %3138 = vmatprep.mubr.bf16.mxu0 0
  %3139 = vmatmul.mubr.bf16.gmra.mxu0 %v3068
  %v3140 = vpop.f32.mrf.mxu0
  %v3141 = vadd.f32 0.0, %v3140
  %v3142 = vpop.f32.mrf.mxu0
  %v3143 = vpop.f32.mrf.mxu0
  %v3144 = vpop.f32.mrf.mxu0
  %3145 = vdwg.mxu0
  %v3146 = vpack.c.bf16 %v3109, %v3109
  %3147 = vst [vmem:[#allocation2] sm:$0xf] %v3146
  %v3148 = vpack.c.bf16 %v3112, %v3112
  %3149 = vst [vmem:[#allocation2 + $0x4] sm:$0xf] %v3148
  %v3150 = vpack.c.bf16 %v3117, %v3117
  %3151 = vst [vmem:[#allocation2 + $0x8] sm:$0xf] %v3150
  %v3152 = vpack.c.bf16 %v3120, %v3120
  %3153 = vst [vmem:[#allocation2 + $0xc] sm:$0xf] %v3152
  %v3154 = vpack.c.bf16 %v3125, %v3125
  %3155 = vst [vmem:[#allocation2 + $0x10] sm:$0xf] %v3154
  %v3156 = vpack.c.bf16 %v3128, %v3128
  %3157 = vst [vmem:[#allocation2 + $0x14] sm:$0xf] %v3156
  %v3158 = vpack.c.bf16 %v3133, %v3133
  %3159 = vst [vmem:[#allocation2 + $0x18] sm:$0xf] %v3158
  %v3160 = vpack.c.bf16 %v3136, %v3136
  %3161 = vst [vmem:[#allocation2 + $0x1c] sm:$0xf] %v3160
  %v3162 = vpack.c.bf16 %v3141, %v3141
  %3163 = vst [vmem:[#allocation2 + $0x20] sm:$0xf] %v3162
  %v3164 = vld [vmem:[#allocation2] sm:$0xff]
  %v3165 = vld [vmem:[#allocation2 + $0x8] sm:$0xff]
  %v3166 = vld [vmem:[#allocation2 + $0x10] sm:$0xff]
  %v3167 = vld [vmem:[#allocation2 + $0x18] sm:$0xff]
  %v3168 = vld [vmem:[#allocation2 + $0x20] sm:$0xf]
  %v3169 = vld [vmem:[%s4] sm:$0xff]
  %v3170 = vld [vmem:[%s4 + $0x8] sm:$0xff]
  %v3171 = vld [vmem:[%s4 + $0x10] sm:$0xff]
  %v3172 = vld [vmem:[%s4 + $0x18] sm:$0xff]
  %v3173 = vld [vmem:[%s4 + $0x20] sm:$0xff]
  %v3174 = vld [vmem:[%s4 + $0x28] sm:$0xff]
  %v3175 = vld [vmem:[%s4 + $0x30] sm:$0xff]
  %v3176 = vld [vmem:[%s4 + $0x38] sm:$0xff]
  %v3177 = vld [vmem:[%s4 + $0x40] sm:$0xff]
  %v3178 = vld [vmem:[%s4 + $0x48] sm:$0xff]
  %v3179 = vld [vmem:[%s4 + $0x50] sm:$0xff]
  %v3180 = vld [vmem:[%s4 + $0x58] sm:$0xff]
  %v3181 = vld [vmem:[%s4 + $0x60] sm:$0xff]
  %v3182 = vld [vmem:[%s4 + $0x68] sm:$0xff]
  %v3183 = vld [vmem:[%s4 + $0x70] sm:$0xff]
  %v3184 = vld [vmem:[%s4 + $0x78] sm:$0xff]
  %v3185 = vld [vmem:[%s4 + $0x80] sm:$0xff]
  %v3186 = vld [vmem:[%s4 + $0x88] sm:$0xff]
  %v3187 = vld [vmem:[%s4 + $0x90] sm:$0xff]
  %v3188 = vld [vmem:[%s4 + $0x98] sm:$0xff]
  %v3189 = vld [vmem:[%s4 + $0xa0] sm:$0xff]
  %v3190 = vld [vmem:[%s4 + $0xa8] sm:$0xff]
  %v3191 = vld [vmem:[%s4 + $0xb0] sm:$0xff]
  %v3192 = vld [vmem:[%s4 + $0xb8] sm:$0xff]
  %v3193 = vld [vmem:[%s4 + $0xc0] sm:$0xff]
  %v3194 = vld [vmem:[%s4 + $0xc8] sm:$0xff]
  %v3195 = vld [vmem:[%s4 + $0xd0] sm:$0xff]
  %v3196 = vld [vmem:[%s4 + $0xd8] sm:$0xff]
  %v3197 = vld [vmem:[%s4 + $0xe0] sm:$0xff]
  %v3198 = vld [vmem:[%s4 + $0xe8] sm:$0xff]
  %v3199 = vld [vmem:[%s4 + $0xf0] sm:$0xff]
  %v3200 = vld [vmem:[%s4 + $0xf8] sm:$0xff]
  %v3201 = vld [vmem:[%s4 + $0x100] sm:$0xff]
  %v3202 = vld [vmem:[%s4 + $0x108] sm:$0xff]
  %v3203 = vld [vmem:[%s4 + $0x110] sm:$0xff]
  %v3204 = vld [vmem:[%s4 + $0x118] sm:$0xff]
  %v3205 = vld [vmem:[%s4 + $0x120] sm:$0xff]
  %v3206 = vld [vmem:[%s4 + $0x128] sm:$0xff]
  %v3207 = vld [vmem:[%s4 + $0x130] sm:$0xff]
  %v3208 = vld [vmem:[%s4 + $0x138] sm:$0xff]
  %v3209 = vld [vmem:[%s4 + $0x140] sm:$0xff]
  %v3210 = vld [vmem:[%s4 + $0x148] sm:$0xff]
  %v3211 = vld [vmem:[%s4 + $0x150] sm:$0xff]
  %v3212 = vld [vmem:[%s4 + $0x158] sm:$0xff]
  %v3213 = vld [vmem:[%s4 + $0x160] sm:$0xff]
  %v3214 = vld [vmem:[%s4 + $0x168] sm:$0xff]
  %v3215 = vld [vmem:[%s4 + $0x170] sm:$0xff]
  %v3216 = vld [vmem:[%s4 + $0x178] sm:$0xff]
  %v3217 = vld [vmem:[%s4 + $0x180] sm:$0xff]
  %v3218 = vld [vmem:[%s4 + $0x188] sm:$0xff]
  %v3219 = vld [vmem:[%s4 + $0x190] sm:$0xff]
  %v3220 = vld [vmem:[%s4 + $0x198] sm:$0xff]
  %v3221 = vld [vmem:[%s4 + $0x1a0] sm:$0xff]
  %v3222 = vld [vmem:[%s4 + $0x1a8] sm:$0xff]
  %v3223 = vld [vmem:[%s4 + $0x1b0] sm:$0xff]
  %v3224 = vld [vmem:[%s4 + $0x1b8] sm:$0xff]
  %v3225 = vld [vmem:[%s4 + $0x1c0] sm:$0xff]
  %v3226 = vld [vmem:[%s4 + $0x1c8] sm:$0xff]
  %v3227 = vld [vmem:[%s4 + $0x1d0] sm:$0xff]
  %v3228 = vld [vmem:[%s4 + $0x1d8] sm:$0xff]
  %v3229 = vld [vmem:[%s4 + $0x1e0] sm:$0xff]
  %v3230 = vld [vmem:[%s4 + $0x1e8] sm:$0xff]
  %v3231 = vld [vmem:[%s4 + $0x1f0] sm:$0xff]
  %v3232 = vld [vmem:[%s4 + $0x1f8] sm:$0xff]
  %v3233 = vld [vmem:[%s4 + $0x200] sm:$0xff]
  %v3234 = vld [vmem:[%s4 + $0x208] sm:$0xff]
  %v3235 = vld [vmem:[%s4 + $0x210] sm:$0xff]
  %v3236 = vld [vmem:[%s4 + $0x218] sm:$0xff]
  %v3237 = vld [vmem:[%s4 + $0x220] sm:$0xff]
  %v3238 = vld [vmem:[%s4 + $0x228] sm:$0xff]
  %v3239 = vld [vmem:[%s4 + $0x230] sm:$0xff]
  %v3240 = vld [vmem:[%s4 + $0x238] sm:$0xff]
  %v3241 = vld [vmem:[%s4 + $0x240] sm:$0xff]
  %v3242 = vld [vmem:[%s4 + $0x248] sm:$0xff]
  %v3243 = vld [vmem:[%s4 + $0x250] sm:$0xff]
  %v3244 = vld [vmem:[%s4 + $0x258] sm:$0xff]
  %v3245 = vld [vmem:[%s4 + $0x260] sm:$0xff]
  %v3246 = vld [vmem:[%s4 + $0x268] sm:$0xff]
  %v3247 = vld [vmem:[%s4 + $0x270] sm:$0xff]
  %v3248 = vld [vmem:[%s4 + $0x278] sm:$0xff]
  %v3249 = vld [vmem:[%s4 + $0x280] sm:$0xff]
  %v3250 = vld [vmem:[%s4 + $0x288] sm:$0xff]
  %v3251 = vld [vmem:[%s4 + $0x290] sm:$0xff]
  %v3252 = vld [vmem:[%s4 + $0x298] sm:$0xff]
  %v3253 = vld [vmem:[%s4 + $0x2a0] sm:$0xff]
  %v3254 = vld [vmem:[%s4 + $0x2a8] sm:$0xff]
  %v3255 = vld [vmem:[%s4 + $0x2b0] sm:$0xff]
  %v3256 = vld [vmem:[%s4 + $0x2b8] sm:$0xff]
  %v3257 = vld [vmem:[%s4 + $0x2c0] sm:$0xff]
  %v3258 = vld [vmem:[%s4 + $0x2c8] sm:$0xff]
  %v3259 = vld [vmem:[%s4 + $0x2d0] sm:$0xff]
  %v3260 = vld [vmem:[%s4 + $0x2d8] sm:$0xff]
  %v3261 = vld [vmem:[%s4 + $0x2e0] sm:$0xff]
  %v3262 = vld [vmem:[%s4 + $0x2e8] sm:$0xff]
  %v3263 = vld [vmem:[%s4 + $0x2f0] sm:$0xff]
  %v3264 = vld [vmem:[%s4 + $0x2f8] sm:$0xff]
  %v3265 = vld [vmem:[%s4 + $0x300] sm:$0xff]
  %v3266 = vld [vmem:[%s4 + $0x308] sm:$0xff]
  %v3267 = vld [vmem:[%s4 + $0x310] sm:$0xff]
  %v3268 = vld [vmem:[%s4 + $0x318] sm:$0xff]
  %v3269 = vld [vmem:[%s4 + $0x320] sm:$0xff]
  %v3270 = vld [vmem:[%s4 + $0x328] sm:$0xff]
  %v3271 = vld [vmem:[%s4 + $0x330] sm:$0xff]
  %v3272 = vld [vmem:[%s4 + $0x338] sm:$0xff]
  %v3273 = vld [vmem:[%s4 + $0x340] sm:$0xff]
  %v3274 = vld [vmem:[%s4 + $0x348] sm:$0xff]
  %v3275 = vld [vmem:[%s4 + $0x350] sm:$0xff]
  %v3276 = vld [vmem:[%s4 + $0x358] sm:$0xff]
  %v3277 = vld [vmem:[%s4 + $0x360] sm:$0xff]
  %v3278 = vld [vmem:[%s4 + $0x368] sm:$0xff]
  %v3279 = vld [vmem:[%s4 + $0x370] sm:$0xff]
  %v3280 = vld [vmem:[%s4 + $0x378] sm:$0xff]
  %v3281 = vld [vmem:[%s4 + $0x380] sm:$0xff]
  %v3282 = vld [vmem:[%s4 + $0x388] sm:$0xff]
  %v3283 = vld [vmem:[%s4 + $0x390] sm:$0xff]
  %v3284 = vld [vmem:[%s4 + $0x398] sm:$0xff]
  %v3285 = vld [vmem:[%s4 + $0x3a0] sm:$0xff]
  %v3286 = vld [vmem:[%s4 + $0x3a8] sm:$0xff]
  %v3287 = vld [vmem:[%s4 + $0x3b0] sm:$0xff]
  %v3288 = vld [vmem:[%s4 + $0x3b8] sm:$0xff]
  %v3289 = vld [vmem:[%s4 + $0x3c0] sm:$0xff]
  %v3290 = vld [vmem:[%s4 + $0x3c8] sm:$0xff]
  %v3291 = vld [vmem:[%s4 + $0x3d0] sm:$0xff]
  %v3292 = vld [vmem:[%s4 + $0x3d8] sm:$0xff]
  %v3293 = vld [vmem:[%s4 + $0x3e0] sm:$0xff]
  %v3294 = vld [vmem:[%s4 + $0x3e8] sm:$0xff]
  %v3295 = vld [vmem:[%s4 + $0x3f0] sm:$0xff]
  %v3296 = vld [vmem:[%s4 + $0x3f8] sm:$0xff]
  %v3297 = vld [vmem:[%s4 + $0x400] sm:$0xff]
  %v3298 = vld [vmem:[%s4 + $0x408] sm:$0xff]
  %v3299 = vld [vmem:[%s4 + $0x410] sm:$0xff]
  %v3300 = vld [vmem:[%s4 + $0x418] sm:$0xff]
  %v3301 = vld [vmem:[%s4 + $0x420] sm:$0xff]
  %v3302 = vld [vmem:[%s4 + $0x428] sm:$0xff]
  %v3303 = vld [vmem:[%s4 + $0x430] sm:$0xff]
  %v3304 = vld [vmem:[%s4 + $0x438] sm:$0xff]
  %v3305 = vld [vmem:[%s4 + $0x440] sm:$0xff]
  %v3306 = vld [vmem:[%s4 + $0x448] sm:$0xff]
  %v3307 = vld [vmem:[%s4 + $0x450] sm:$0xff]
  %v3308 = vld [vmem:[%s4 + $0x458] sm:$0xff]
  %v3309 = vld [vmem:[%s4 + $0x460] sm:$0xff]
  %v3310 = vld [vmem:[%s4 + $0x468] sm:$0xff]
  %v3311 = vld [vmem:[%s4 + $0x470] sm:$0xff]
  %v3312 = vld [vmem:[%s4 + $0x478] sm:$0xff]
  %v3318 = vunpack.c.l.b16 %v3164
  %v3319 = vunpack.c.h.b16 %v3164
  %v3320 = vunpack.c.l.b16 %v3165
  %v3321 = vunpack.c.h.b16 %v3165
  %v3322 = vunpack.c.l.b16 %v3166
  %v3323 = vunpack.c.h.b16 %v3166
  %v3324 = vunpack.c.l.b16 %v3167
  %v3325 = vunpack.c.h.b16 %v3167
  %v3326 = vunpack.c.l.b16 %v3168
  %v3327 = vpack.c.b16 %v3318, %v3318
  %v3328 = vpack.c.b16 %v3319, %v3319
  %v3329 = vpack.c.b16 %v3320, %v3320
  %v3330 = vpack.c.b16 %v3321, %v3321
  %v3331 = vpack.c.b16 %v3322, %v3322
  %v3332 = vpack.c.b16 %v3323, %v3323
  %v3333 = vpack.c.b16 %v3324, %v3324
  %v3334 = vpack.c.b16 %v3325, %v3325
  %v3335 = vpack.c.b16 %v3326, %v3326
  %v3489 = vunpack.c.l.b16 %v3169
  %v3490 = vunpack.c.h.b16 %v3169
  %v3491 = vunpack.c.l.b16 %v3170
  %v3492 = vunpack.c.h.b16 %v3170
  %v3493 = vunpack.c.l.b16 %v3171
  %v3494 = vunpack.c.h.b16 %v3171
  %v3495 = vunpack.c.l.b16 %v3172
  %v3496 = vunpack.c.h.b16 %v3172
  %v3497 = vunpack.c.l.b16 %v3173
  %v3498 = vunpack.c.h.b16 %v3173
  %v3499 = vunpack.c.l.b16 %v3174
  %v3500 = vunpack.c.h.b16 %v3174
  %v3501 = vunpack.c.l.b16 %v3175
  %v3502 = vunpack.c.h.b16 %v3175
  %v3503 = vunpack.c.l.b16 %v3176
  %v3504 = vunpack.c.h.b16 %v3176
  %v3505 = vunpack.c.l.b16 %v3177
  %v3506 = vunpack.c.h.b16 %v3177
  %v3507 = vunpack.c.l.b16 %v3178
  %v3508 = vunpack.c.h.b16 %v3178
  %v3509 = vunpack.c.l.b16 %v3179
  %v3510 = vunpack.c.h.b16 %v3179
  %v3511 = vunpack.c.l.b16 %v3180
  %v3512 = vunpack.c.h.b16 %v3180
  %v3513 = vunpack.c.l.b16 %v3181
  %v3514 = vunpack.c.h.b16 %v3181
  %v3515 = vunpack.c.l.b16 %v3182
  %v3516 = vunpack.c.h.b16 %v3182
  %v3517 = vunpack.c.l.b16 %v3183
  %v3518 = vunpack.c.h.b16 %v3183
  %v3519 = vunpack.c.l.b16 %v3184
  %v3520 = vunpack.c.h.b16 %v3184
  %v3521 = vunpack.c.l.b16 %v3185
  %v3522 = vunpack.c.h.b16 %v3185
  %v3523 = vunpack.c.l.b16 %v3186
  %v3524 = vunpack.c.h.b16 %v3186
  %v3525 = vunpack.c.l.b16 %v3187
  %v3526 = vunpack.c.h.b16 %v3187
  %v3527 = vunpack.c.l.b16 %v3188
  %v3528 = vunpack.c.h.b16 %v3188
  %v3529 = vunpack.c.l.b16 %v3189
  %v3530 = vunpack.c.h.b16 %v3189
  %v3531 = vunpack.c.l.b16 %v3190
  %v3532 = vunpack.c.h.b16 %v3190
  %v3533 = vunpack.c.l.b16 %v3191
  %v3534 = vunpack.c.h.b16 %v3191
  %v3535 = vunpack.c.l.b16 %v3192
  %v3536 = vunpack.c.h.b16 %v3192
  %v3537 = vunpack.c.l.b16 %v3193
  %v3538 = vunpack.c.h.b16 %v3193
  %v3539 = vunpack.c.l.b16 %v3194
  %v3540 = vunpack.c.h.b16 %v3194
  %v3541 = vunpack.c.l.b16 %v3195
  %v3542 = vunpack.c.h.b16 %v3195
  %v3543 = vunpack.c.l.b16 %v3196
  %v3544 = vunpack.c.h.b16 %v3196
  %v3545 = vunpack.c.l.b16 %v3197
  %v3546 = vunpack.c.h.b16 %v3197
  %v3547 = vunpack.c.l.b16 %v3198
  %v3548 = vunpack.c.h.b16 %v3198
  %v3549 = vunpack.c.l.b16 %v3199
  %v3550 = vunpack.c.h.b16 %v3199
  %v3551 = vunpack.c.l.b16 %v3200
  %v3552 = vunpack.c.h.b16 %v3200
  %v3553 = vunpack.c.l.b16 %v3201
  %v3554 = vunpack.c.h.b16 %v3201
  %v3555 = vunpack.c.l.b16 %v3202
  %v3556 = vunpack.c.h.b16 %v3202
  %v3557 = vunpack.c.l.b16 %v3203
  %v3558 = vunpack.c.h.b16 %v3203
  %v3559 = vunpack.c.l.b16 %v3204
  %v3560 = vunpack.c.h.b16 %v3204
  %v3561 = vunpack.c.l.b16 %v3205
  %v3562 = vunpack.c.h.b16 %v3205
  %v3563 = vunpack.c.l.b16 %v3206
  %v3564 = vunpack.c.h.b16 %v3206
  %v3565 = vunpack.c.l.b16 %v3207
  %v3566 = vunpack.c.h.b16 %v3207
  %v3567 = vunpack.c.l.b16 %v3208
  %v3568 = vunpack.c.h.b16 %v3208
  %v3569 = vunpack.c.l.b16 %v3209
  %v3570 = vunpack.c.h.b16 %v3209
  %v3571 = vunpack.c.l.b16 %v3210
  %v3572 = vunpack.c.h.b16 %v3210
  %v3573 = vunpack.c.l.b16 %v3211
  %v3574 = vunpack.c.h.b16 %v3211
  %v3575 = vunpack.c.l.b16 %v3212
  %v3576 = vunpack.c.h.b16 %v3212
  %v3577 = vunpack.c.l.b16 %v3213
  %v3578 = vunpack.c.h.b16 %v3213
  %v3579 = vunpack.c.l.b16 %v3214
  %v3580 = vunpack.c.h.b16 %v3214
  %v3581 = vunpack.c.l.b16 %v3215
  %v3582 = vunpack.c.h.b16 %v3215
  %v3583 = vunpack.c.l.b16 %v3216
  %v3584 = vunpack.c.h.b16 %v3216
  %v3585 = vunpack.c.l.b16 %v3217
  %v3586 = vunpack.c.h.b16 %v3217
  %v3587 = vunpack.c.l.b16 %v3218
  %v3588 = vunpack.c.h.b16 %v3218
  %v3589 = vunpack.c.l.b16 %v3219
  %v3590 = vunpack.c.h.b16 %v3219
  %v3591 = vunpack.c.l.b16 %v3220
  %v3592 = vunpack.c.h.b16 %v3220
  %v3593 = vunpack.c.l.b16 %v3221
  %v3594 = vunpack.c.h.b16 %v3221
  %v3595 = vunpack.c.l.b16 %v3222
  %v3596 = vunpack.c.h.b16 %v3222
  %v3597 = vunpack.c.l.b16 %v3223
  %v3598 = vunpack.c.h.b16 %v3223
  %v3599 = vunpack.c.l.b16 %v3224
  %v3600 = vunpack.c.h.b16 %v3224
  %v3601 = vunpack.c.l.b16 %v3225
  %v3602 = vunpack.c.h.b16 %v3225
  %v3603 = vunpack.c.l.b16 %v3226
  %v3604 = vunpack.c.h.b16 %v3226
  %v3605 = vunpack.c.l.b16 %v3227
  %v3606 = vunpack.c.h.b16 %v3227
  %v3607 = vunpack.c.l.b16 %v3228
  %v3608 = vunpack.c.h.b16 %v3228
  %v3609 = vunpack.c.l.b16 %v3229
  %v3610 = vunpack.c.h.b16 %v3229
  %v3611 = vunpack.c.l.b16 %v3230
  %v3612 = vunpack.c.h.b16 %v3230
  %v3613 = vunpack.c.l.b16 %v3231
  %v3614 = vunpack.c.h.b16 %v3231
  %v3615 = vunpack.c.l.b16 %v3232
  %v3616 = vunpack.c.h.b16 %v3232
  %v3617 = vunpack.c.l.b16 %v3233
  %v3618 = vunpack.c.h.b16 %v3233
  %v3619 = vunpack.c.l.b16 %v3234
  %v3620 = vunpack.c.h.b16 %v3234
  %v3621 = vunpack.c.l.b16 %v3235
  %v3622 = vunpack.c.h.b16 %v3235
  %v3623 = vunpack.c.l.b16 %v3236
  %v3624 = vunpack.c.h.b16 %v3236
  %v3625 = vunpack.c.l.b16 %v3237
  %v3626 = vunpack.c.h.b16 %v3237
  %v3627 = vunpack.c.l.b16 %v3238
  %v3628 = vunpack.c.h.b16 %v3238
  %v3629 = vunpack.c.l.b16 %v3239
  %v3630 = vunpack.c.h.b16 %v3239
  %v3631 = vunpack.c.l.b16 %v3240
  %v3632 = vunpack.c.h.b16 %v3240
  %v3633 = vunpack.c.l.b16 %v3241
  %v3634 = vunpack.c.h.b16 %v3241
  %v3635 = vunpack.c.l.b16 %v3242
  %v3636 = vunpack.c.h.b16 %v3242
  %v3637 = vunpack.c.l.b16 %v3243
  %v3638 = vunpack.c.h.b16 %v3243
  %v3639 = vunpack.c.l.b16 %v3244
  %v3640 = vunpack.c.h.b16 %v3244
  %v3641 = vunpack.c.l.b16 %v3245
  %v3642 = vunpack.c.h.b16 %v3245
  %v3643 = vunpack.c.l.b16 %v3246
  %v3644 = vunpack.c.h.b16 %v3246
  %v3645 = vunpack.c.l.b16 %v3247
  %v3646 = vunpack.c.h.b16 %v3247
  %v3647 = vunpack.c.l.b16 %v3248
  %v3648 = vunpack.c.h.b16 %v3248
  %v3649 = vunpack.c.l.b16 %v3249
  %v3650 = vunpack.c.h.b16 %v3249
  %v3651 = vunpack.c.l.b16 %v3250
  %v3652 = vunpack.c.h.b16 %v3250
  %v3653 = vunpack.c.l.b16 %v3251
  %v3654 = vunpack.c.h.b16 %v3251
  %v3655 = vunpack.c.l.b16 %v3252
  %v3656 = vunpack.c.h.b16 %v3252
  %v3657 = vunpack.c.l.b16 %v3253
  %v3658 = vunpack.c.h.b16 %v3253
  %v3659 = vunpack.c.l.b16 %v3254
  %v3660 = vunpack.c.h.b16 %v3254
  %v3661 = vunpack.c.l.b16 %v3255
  %v3662 = vunpack.c.h.b16 %v3255
  %v3663 = vunpack.c.l.b16 %v3256
  %v3664 = vunpack.c.h.b16 %v3256
  %v3665 = vunpack.c.l.b16 %v3257
  %v3666 = vunpack.c.h.b16 %v3257
  %v3667 = vunpack.c.l.b16 %v3258
  %v3668 = vunpack.c.h.b16 %v3258
  %v3669 = vunpack.c.l.b16 %v3259
  %v3670 = vunpack.c.h.b16 %v3259
  %v3671 = vunpack.c.l.b16 %v3260
  %v3672 = vunpack.c.h.b16 %v3260
  %v3673 = vunpack.c.l.b16 %v3261
  %v3674 = vunpack.c.h.b16 %v3261
  %v3675 = vunpack.c.l.b16 %v3262
  %v3676 = vunpack.c.h.b16 %v3262
  %v3677 = vunpack.c.l.b16 %v3263
  %v3678 = vunpack.c.h.b16 %v3263
  %v3679 = vunpack.c.l.b16 %v3264
  %v3680 = vunpack.c.h.b16 %v3264
  %v3681 = vunpack.c.l.b16 %v3265
  %v3682 = vunpack.c.h.b16 %v3265
  %v3683 = vunpack.c.l.b16 %v3266
  %v3684 = vunpack.c.h.b16 %v3266
  %v3685 = vunpack.c.l.b16 %v3267
  %v3686 = vunpack.c.h.b16 %v3267
  %v3687 = vunpack.c.l.b16 %v3268
  %v3688 = vunpack.c.h.b16 %v3268
  %v3689 = vunpack.c.l.b16 %v3269
  %v3690 = vunpack.c.h.b16 %v3269
  %v3691 = vunpack.c.l.b16 %v3270
  %v3692 = vunpack.c.h.b16 %v3270
  %v3693 = vunpack.c.l.b16 %v3271
  %v3694 = vunpack.c.h.b16 %v3271
  %v3695 = vunpack.c.l.b16 %v3272
  %v3696 = vunpack.c.h.b16 %v3272
  %v3697 = vunpack.c.l.b16 %v3273
  %v3698 = vunpack.c.h.b16 %v3273
  %v3699 = vunpack.c.l.b16 %v3274
  %v3700 = vunpack.c.h.b16 %v3274
  %v3701 = vunpack.c.l.b16 %v3275
  %v3702 = vunpack.c.h.b16 %v3275
  %v3703 = vunpack.c.l.b16 %v3276
  %v3704 = vunpack.c.h.b16 %v3276
  %v3705 = vunpack.c.l.b16 %v3277
  %v3706 = vunpack.c.h.b16 %v3277
  %v3707 = vunpack.c.l.b16 %v3278
  %v3708 = vunpack.c.h.b16 %v3278
  %v3709 = vunpack.c.l.b16 %v3279
  %v3710 = vunpack.c.h.b16 %v3279
  %v3711 = vunpack.c.l.b16 %v3280
  %v3712 = vunpack.c.h.b16 %v3280
  %v3713 = vunpack.c.l.b16 %v3281
  %v3714 = vunpack.c.h.b16 %v3281
  %v3715 = vunpack.c.l.b16 %v3282
  %v3716 = vunpack.c.h.b16 %v3282
  %v3717 = vunpack.c.l.b16 %v3283
  %v3718 = vunpack.c.h.b16 %v3283
  %v3719 = vunpack.c.l.b16 %v3284
  %v3720 = vunpack.c.h.b16 %v3284
  %v3721 = vunpack.c.l.b16 %v3285
  %v3722 = vunpack.c.h.b16 %v3285
  %v3723 = vunpack.c.l.b16 %v3286
  %v3724 = vunpack.c.h.b16 %v3286
  %v3725 = vunpack.c.l.b16 %v3287
  %v3726 = vunpack.c.h.b16 %v3287
  %v3727 = vunpack.c.l.b16 %v3288
  %v3728 = vunpack.c.h.b16 %v3288
  %v3729 = vunpack.c.l.b16 %v3289
  %v3730 = vunpack.c.h.b16 %v3289
  %v3731 = vunpack.c.l.b16 %v3290
  %v3732 = vunpack.c.h.b16 %v3290
  %v3733 = vunpack.c.l.b16 %v3291
  %v3734 = vunpack.c.h.b16 %v3291
  %v3735 = vunpack.c.l.b16 %v3292
  %v3736 = vunpack.c.h.b16 %v3292
  %v3737 = vunpack.c.l.b16 %v3293
  %v3738 = vunpack.c.h.b16 %v3293
  %v3739 = vunpack.c.l.b16 %v3294
  %v3740 = vunpack.c.h.b16 %v3294
  %v3741 = vunpack.c.l.b16 %v3295
  %v3742 = vunpack.c.h.b16 %v3295
  %v3743 = vunpack.c.l.b16 %v3296
  %v3744 = vunpack.c.h.b16 %v3296
  %v3745 = vunpack.c.l.b16 %v3297
  %v3746 = vunpack.c.h.b16 %v3297
  %v3747 = vunpack.c.l.b16 %v3298
  %v3748 = vunpack.c.h.b16 %v3298
  %v3749 = vunpack.c.l.b16 %v3299
  %v3750 = vunpack.c.h.b16 %v3299
  %v3751 = vunpack.c.l.b16 %v3300
  %v3752 = vunpack.c.h.b16 %v3300
  %v3753 = vunpack.c.l.b16 %v3301
  %v3754 = vunpack.c.h.b16 %v3301
  %v3755 = vunpack.c.l.b16 %v3302
  %v3756 = vunpack.c.h.b16 %v3302
  %v3757 = vunpack.c.l.b16 %v3303
  %v3758 = vunpack.c.h.b16 %v3303
  %v3759 = vunpack.c.l.b16 %v3304
  %v3760 = vunpack.c.h.b16 %v3304
  %v3761 = vunpack.c.l.b16 %v3305
  %v3762 = vunpack.c.h.b16 %v3305
  %v3763 = vunpack.c.l.b16 %v3306
  %v3764 = vunpack.c.h.b16 %v3306
  %v3765 = vunpack.c.l.b16 %v3307
  %v3766 = vunpack.c.h.b16 %v3307
  %v3767 = vunpack.c.l.b16 %v3308
  %v3768 = vunpack.c.h.b16 %v3308
  %v3769 = vunpack.c.l.b16 %v3309
  %v3770 = vunpack.c.h.b16 %v3309
  %v3771 = vunpack.c.l.b16 %v3310
  %v3772 = vunpack.c.h.b16 %v3310
  %v3773 = vunpack.c.l.b16 %v3311
  %v3774 = vunpack.c.h.b16 %v3311
  %v3775 = vunpack.c.l.b16 %v3312
  %v3776 = vunpack.c.h.b16 %v3312
  %v3777 = vpack.c.b16 %v3491, %v3489
  %v3778 = vpack.c.b16 %v3492, %v3490
  %v3779 = vpack.c.b16 %v3495, %v3493
  %v3780 = vpack.c.b16 %v3496, %v3494
  %v3781 = vpack.c.b16 %v3499, %v3497
  %v3782 = vpack.c.b16 %v3500, %v3498
  %v3783 = vpack.c.b16 %v3503, %v3501
  %v3784 = vpack.c.b16 %v3504, %v3502
  %v3785 = vpack.c.b16 %v3507, %v3505
  %v3786 = vpack.c.b16 %v3508, %v3506
  %v3787 = vpack.c.b16 %v3511, %v3509
  %v3788 = vpack.c.b16 %v3512, %v3510
  %v3789 = vpack.c.b16 %v3515, %v3513
  %v3790 = vpack.c.b16 %v3516, %v3514
  %v3791 = vpack.c.b16 %v3519, %v3517
  %v3792 = vpack.c.b16 %v3520, %v3518
  %v3793 = vpack.c.b16 %v3523, %v3521
  %v3794 = vpack.c.b16 %v3524, %v3522
  %v3795 = vpack.c.b16 %v3527, %v3525
  %v3796 = vpack.c.b16 %v3528, %v3526
  %v3797 = vpack.c.b16 %v3531, %v3529
  %v3798 = vpack.c.b16 %v3532, %v3530
  %v3799 = vpack.c.b16 %v3535, %v3533
  %v3800 = vpack.c.b16 %v3536, %v3534
  %v3801 = vpack.c.b16 %v3539, %v3537
  %v3802 = vpack.c.b16 %v3540, %v3538
  %v3803 = vpack.c.b16 %v3543, %v3541
  %v3804 = vpack.c.b16 %v3544, %v3542
  %v3805 = vpack.c.b16 %v3547, %v3545
  %v3806 = vpack.c.b16 %v3548, %v3546
  %v3807 = vpack.c.b16 %v3551, %v3549
  %v3808 = vpack.c.b16 %v3552, %v3550
  %v3809 = vpack.c.b16 %v3555, %v3553
  %v3810 = vpack.c.b16 %v3556, %v3554
  %v3811 = vpack.c.b16 %v3559, %v3557
  %v3812 = vpack.c.b16 %v3560, %v3558
  %v3813 = vpack.c.b16 %v3563, %v3561
  %v3814 = vpack.c.b16 %v3564, %v3562
  %v3815 = vpack.c.b16 %v3567, %v3565
  %v3816 = vpack.c.b16 %v3568, %v3566
  %v3817 = vpack.c.b16 %v3571, %v3569
  %v3818 = vpack.c.b16 %v3572, %v3570
  %v3819 = vpack.c.b16 %v3575, %v3573
  %v3820 = vpack.c.b16 %v3576, %v3574
  %v3821 = vpack.c.b16 %v3579, %v3577
  %v3822 = vpack.c.b16 %v3580, %v3578
  %v3823 = vpack.c.b16 %v3583, %v3581
  %v3824 = vpack.c.b16 %v3584, %v3582
  %v3825 = vpack.c.b16 %v3587, %v3585
  %v3826 = vpack.c.b16 %v3588, %v3586
  %v3827 = vpack.c.b16 %v3591, %v3589
  %v3828 = vpack.c.b16 %v3592, %v3590
  %v3829 = vpack.c.b16 %v3595, %v3593
  %v3830 = vpack.c.b16 %v3596, %v3594
  %v3831 = vpack.c.b16 %v3599, %v3597
  %v3832 = vpack.c.b16 %v3600, %v3598
  %v3833 = vpack.c.b16 %v3603, %v3601
  %v3834 = vpack.c.b16 %v3604, %v3602
  %v3835 = vpack.c.b16 %v3607, %v3605
  %v3836 = vpack.c.b16 %v3608, %v3606
  %v3837 = vpack.c.b16 %v3611, %v3609
  %v3838 = vpack.c.b16 %v3612, %v3610
  %v3839 = vpack.c.b16 %v3615, %v3613
  %v3840 = vpack.c.b16 %v3616, %v3614
  %v3841 = vpack.c.b16 %v3619, %v3617
  %v3842 = vpack.c.b16 %v3620, %v3618
  %v3843 = vpack.c.b16 %v3623, %v3621
  %v3844 = vpack.c.b16 %v3624, %v3622
  %v3845 = vpack.c.b16 %v3627, %v3625
  %v3846 = vpack.c.b16 %v3628, %v3626
  %v3847 = vpack.c.b16 %v3631, %v3629
  %v3848 = vpack.c.b16 %v3632, %v3630
  %v3849 = vpack.c.b16 %v3635, %v3633
  %v3850 = vpack.c.b16 %v3636, %v3634
  %v3851 = vpack.c.b16 %v3639, %v3637
  %v3852 = vpack.c.b16 %v3640, %v3638
  %v3853 = vpack.c.b16 %v3643, %v3641
  %v3854 = vpack.c.b16 %v3644, %v3642
  %v3855 = vpack.c.b16 %v3647, %v3645
  %v3856 = vpack.c.b16 %v3648, %v3646
  %v3857 = vpack.c.b16 %v3651, %v3649
  %v3858 = vpack.c.b16 %v3652, %v3650
  %v3859 = vpack.c.b16 %v3655, %v3653
  %v3860 = vpack.c.b16 %v3656, %v3654
  %v3861 = vpack.c.b16 %v3659, %v3657
  %v3862 = vpack.c.b16 %v3660, %v3658
  %v3863 = vpack.c.b16 %v3663, %v3661
  %v3864 = vpack.c.b16 %v3664, %v3662
  %v3865 = vpack.c.b16 %v3667, %v3665
  %v3866 = vpack.c.b16 %v3668, %v3666
  %v3867 = vpack.c.b16 %v3671, %v3669
  %v3868 = vpack.c.b16 %v3672, %v3670
  %v3869 = vpack.c.b16 %v3675, %v3673
  %v3870 = vpack.c.b16 %v3676, %v3674
  %v3871 = vpack.c.b16 %v3679, %v3677
  %v3872 = vpack.c.b16 %v3680, %v3678
  %v3873 = vpack.c.b16 %v3683, %v3681
  %v3874 = vpack.c.b16 %v3684, %v3682
  %v3875 = vpack.c.b16 %v3687, %v3685
  %v3876 = vpack.c.b16 %v3688, %v3686
  %v3877 = vpack.c.b16 %v3691, %v3689
  %v3878 = vpack.c.b16 %v3692, %v3690
  %v3879 = vpack.c.b16 %v3695, %v3693
  %v3880 = vpack.c.b16 %v3696, %v3694
  %v3881 = vpack.c.b16 %v3699, %v3697
  %v3882 = vpack.c.b16 %v3700, %v3698
  %v3883 = vpack.c.b16 %v3703, %v3701
  %v3884 = vpack.c.b16 %v3704, %v3702
  %v3885 = vpack.c.b16 %v3707, %v3705
  %v3886 = vpack.c.b16 %v3708, %v3706
  %v3887 = vpack.c.b16 %v3711, %v3709
  %v3888 = vpack.c.b16 %v3712, %v3710
  %v3889 = vpack.c.b16 %v3715, %v3713
  %v3890 = vpack.c.b16 %v3716, %v3714
  %v3891 = vpack.c.b16 %v3719, %v3717
  %v3892 = vpack.c.b16 %v3720, %v3718
  %v3893 = vpack.c.b16 %v3723, %v3721
  %v3894 = vpack.c.b16 %v3724, %v3722
  %v3895 = vpack.c.b16 %v3727, %v3725
  %v3896 = vpack.c.b16 %v3728, %v3726
  %v3897 = vpack.c.b16 %v3731, %v3729
  %v3898 = vpack.c.b16 %v3732, %v3730
  %v3899 = vpack.c.b16 %v3735, %v3733
  %v3900 = vpack.c.b16 %v3736, %v3734
  %v3901 = vpack.c.b16 %v3739, %v3737
  %v3902 = vpack.c.b16 %v3740, %v3738
  %v3903 = vpack.c.b16 %v3743, %v3741
  %v3904 = vpack.c.b16 %v3744, %v3742
  %v3905 = vpack.c.b16 %v3747, %v3745
  %v3906 = vpack.c.b16 %v3748, %v3746
  %v3907 = vpack.c.b16 %v3751, %v3749
  %v3908 = vpack.c.b16 %v3752, %v3750
  %v3909 = vpack.c.b16 %v3755, %v3753
  %v3910 = vpack.c.b16 %v3756, %v3754
  %v3911 = vpack.c.b16 %v3759, %v3757
  %v3912 = vpack.c.b16 %v3760, %v3758
  %v3913 = vpack.c.b16 %v3763, %v3761
  %v3914 = vpack.c.b16 %v3764, %v3762
  %v3915 = vpack.c.b16 %v3767, %v3765
  %v3916 = vpack.c.b16 %v3768, %v3766
  %v3917 = vpack.c.b16 %v3771, %v3769
  %v3918 = vpack.c.b16 %v3772, %v3770
  %v3919 = vpack.c.b16 %v3775, %v3773
  %v3920 = vpack.c.b16 %v3776, %v3774
  %4065 = vmatprep.subr.bf16.mxu0 %v3792
  %4066 = vmatpush1.bf16.msra.mxu0 %v3791
  %4067 = vmatprep.subr.bf16.mxu0 %v3790
  %4068 = vmatpush1.bf16.msra.mxu0 %v3789
  %4069 = vmatprep.subr.bf16.mxu0 %v3788
  %4070 = vmatpush1.bf16.msra.mxu0 %v3787
  %4071 = vmatprep.subr.bf16.mxu0 %v3786
  %4072 = vmatpush1.bf16.msra.mxu0 %v3785
  %4073 = vmatprep.subr.bf16.mxu0 %v3784
  %4074 = vmatpush1.bf16.msra.mxu0 %v3783
  %4075 = vmatprep.subr.bf16.mxu0 %v3782
  %4076 = vmatpush1.bf16.msra.mxu0 %v3781
  %4077 = vmatprep.subr.bf16.mxu0 %v3780
  %4078 = vmatpush1.bf16.msra.mxu0 %v3779
  %4079 = vmatprep.subr.bf16.mxu0 %v3778
  %4080 = vmatpush1.bf16.msra.mxu0 %v3777
  %4081 = vmatprep.subr.bf16.mxu0 %v3808
  %4082 = vmatpush2.bf16.msra.mxu0 %v3807
  %4083 = vmatprep.subr.bf16.mxu0 %v3806
  %4084 = vmatpush2.bf16.msra.mxu0 %v3805
  %4085 = vmatprep.subr.bf16.mxu0 %v3804
  %4086 = vmatpush2.bf16.msra.mxu0 %v3803
  %4087 = vmatprep.subr.bf16.mxu0 %v3802
  %4088 = vmatpush2.bf16.msra.mxu0 %v3801
  %4089 = vmatprep.subr.bf16.mxu0 %v3800
  %4090 = vmatpush2.bf16.msra.mxu0 %v3799
  %4091 = vmatprep.subr.bf16.mxu0 %v3798
  %4092 = vmatpush2.bf16.msra.mxu0 %v3797
  %4093 = vmatprep.subr.bf16.mxu0 %v3796
  %4094 = vmatpush2.bf16.msra.mxu0 %v3795
  %4095 = vmatprep.subr.bf16.mxu0 %v3794
  %4096 = vmatpush2.bf16.msra.mxu0 %v3793
  %4097 = vmatprep.mubr.bf16.mxu0 %v3328
  %4098 = vmatmul.mubr.bf16.gmra.mxu0 %v3327
  %v4099 = vpop.f32.mrf.mxu0
  %v4100 = vadd.f32 0.0, %v4099
  %v4101 = vpop.f32.mrf.mxu0
  %v4102 = vadd.f32 0.0, %v4101
  %v4103 = vpop.f32.mrf.mxu0
  %v4104 = vpop.f32.mrf.mxu0
  %4105 = vdwg.mxu0
  %4106 = vmatprep.subr.bf16.mxu0 %v3824
  %4107 = vmatpush1.bf16.msra.mxu0 %v3823
  %4108 = vmatprep.subr.bf16.mxu0 %v3822
  %4109 = vmatpush1.bf16.msra.mxu0 %v3821
  %4110 = vmatprep.subr.bf16.mxu0 %v3820
  %4111 = vmatpush1.bf16.msra.mxu0 %v3819
  %4112 = vmatprep.subr.bf16.mxu0 %v3818
  %4113 = vmatpush1.bf16.msra.mxu0 %v3817
  %4114 = vmatprep.subr.bf16.mxu0 %v3816
  %4115 = vmatpush1.bf16.msra.mxu0 %v3815
  %4116 = vmatprep.subr.bf16.mxu0 %v3814
  %4117 = vmatpush1.bf16.msra.mxu0 %v3813
  %4118 = vmatprep.subr.bf16.mxu0 %v3812
  %4119 = vmatpush1.bf16.msra.mxu0 %v3811
  %4120 = vmatprep.subr.bf16.mxu0 %v3810
  %4121 = vmatpush1.bf16.msra.mxu0 %v3809
  %4122 = vmatprep.subr.bf16.mxu0 %v3840
  %4123 = vmatpush2.bf16.msra.mxu0 %v3839
  %4124 = vmatprep.subr.bf16.mxu0 %v3838
  %4125 = vmatpush2.bf16.msra.mxu0 %v3837
  %4126 = vmatprep.subr.bf16.mxu0 %v3836
  %4127 = vmatpush2.bf16.msra.mxu0 %v3835
  %4128 = vmatprep.subr.bf16.mxu0 %v3834
  %4129 = vmatpush2.bf16.msra.mxu0 %v3833
  %4130 = vmatprep.subr.bf16.mxu0 %v3832
  %4131 = vmatpush2.bf16.msra.mxu0 %v3831
  %4132 = vmatprep.subr.bf16.mxu0 %v3830
  %4133 = vmatpush2.bf16.msra.mxu0 %v3829
  %4134 = vmatprep.subr.bf16.mxu0 %v3828
  %4135 = vmatpush2.bf16.msra.mxu0 %v3827
  %4136 = vmatprep.subr.bf16.mxu0 %v3826
  %4137 = vmatpush2.bf16.msra.mxu0 %v3825
  %4138 = vmatprep.mubr.bf16.mxu0 %v3330
  %4139 = vmatmul.mubr.bf16.gmra.mxu0 %v3329
  %v4140 = vpop.f32.mrf.mxu0
  %v4141 = vadd.f32 %v4100, %v4140
  %v4142 = vpop.f32.mrf.mxu0
  %v4143 = vadd.f32 %v4102, %v4142
  %v4144 = vpop.f32.mrf.mxu0
  %v4145 = vpop.f32.mrf.mxu0
  %4146 = vdwg.mxu0
  %4147 = vmatprep.subr.bf16.mxu0 %v3856
  %4148 = vmatpush1.bf16.msra.mxu0 %v3855
  %4149 = vmatprep.subr.bf16.mxu0 %v3854
  %4150 = vmatpush1.bf16.msra.mxu0 %v3853
  %4151 = vmatprep.subr.bf16.mxu0 %v3852
  %4152 = vmatpush1.bf16.msra.mxu0 %v3851
  %4153 = vmatprep.subr.bf16.mxu0 %v3850
  %4154 = vmatpush1.bf16.msra.mxu0 %v3849
  %4155 = vmatprep.subr.bf16.mxu0 %v3848
  %4156 = vmatpush1.bf16.msra.mxu0 %v3847
  %4157 = vmatprep.subr.bf16.mxu0 %v3846
  %4158 = vmatpush1.bf16.msra.mxu0 %v3845
  %4159 = vmatprep.subr.bf16.mxu0 %v3844
  %4160 = vmatpush1.bf16.msra.mxu0 %v3843
  %4161 = vmatprep.subr.bf16.mxu0 %v3842
  %4162 = vmatpush1.bf16.msra.mxu0 %v3841
  %4163 = vmatprep.subr.bf16.mxu0 %v3872
  %4164 = vmatpush2.bf16.msra.mxu0 %v3871
  %4165 = vmatprep.subr.bf16.mxu0 %v3870
  %4166 = vmatpush2.bf16.msra.mxu0 %v3869
  %4167 = vmatprep.subr.bf16.mxu0 %v3868
  %4168 = vmatpush2.bf16.msra.mxu0 %v3867
  %4169 = vmatprep.subr.bf16.mxu0 %v3866
  %4170 = vmatpush2.bf16.msra.mxu0 %v3865
  %4171 = vmatprep.subr.bf16.mxu0 %v3864
  %4172 = vmatpush2.bf16.msra.mxu0 %v3863
  %4173 = vmatprep.subr.bf16.mxu0 %v3862
  %4174 = vmatpush2.bf16.msra.mxu0 %v3861
  %4175 = vmatprep.subr.bf16.mxu0 %v3860
  %4176 = vmatpush2.bf16.msra.mxu0 %v3859
  %4177 = vmatprep.subr.bf16.mxu0 %v3858
  %4178 = vmatpush2.bf16.msra.mxu0 %v3857
  %4179 = vmatprep.mubr.bf16.mxu0 %v3332
  %4180 = vmatmul.mubr.bf16.gmra.mxu0 %v3331
  %v4181 = vpop.f32.mrf.mxu0
  %v4182 = vadd.f32 %v4141, %v4181
  %v4183 = vpop.f32.mrf.mxu0
  %v4184 = vadd.f32 %v4143, %v4183
  %v4185 = vpop.f32.mrf.mxu0
  %v4186 = vpop.f32.mrf.mxu0
  %4187 = vdwg.mxu0
  %4188 = vmatprep.subr.bf16.mxu0 %v3888
  %4189 = vmatpush1.bf16.msra.mxu0 %v3887
  %4190 = vmatprep.subr.bf16.mxu0 %v3886
  %4191 = vmatpush1.bf16.msra.mxu0 %v3885
  %4192 = vmatprep.subr.bf16.mxu0 %v3884
  %4193 = vmatpush1.bf16.msra.mxu0 %v3883
  %4194 = vmatprep.subr.bf16.mxu0 %v3882
  %4195 = vmatpush1.bf16.msra.mxu0 %v3881
  %4196 = vmatprep.subr.bf16.mxu0 %v3880
  %4197 = vmatpush1.bf16.msra.mxu0 %v3879
  %4198 = vmatprep.subr.bf16.mxu0 %v3878
  %4199 = vmatpush1.bf16.msra.mxu0 %v3877
  %4200 = vmatprep.subr.bf16.mxu0 %v3876
  %4201 = vmatpush1.bf16.msra.mxu0 %v3875
  %4202 = vmatprep.subr.bf16.mxu0 %v3874
  %4203 = vmatpush1.bf16.msra.mxu0 %v3873
  %4204 = vmatprep.subr.bf16.mxu0 %v3904
  %4205 = vmatpush2.bf16.msra.mxu0 %v3903
  %4206 = vmatprep.subr.bf16.mxu0 %v3902
  %4207 = vmatpush2.bf16.msra.mxu0 %v3901
  %4208 = vmatprep.subr.bf16.mxu0 %v3900
  %4209 = vmatpush2.bf16.msra.mxu0 %v3899
  %4210 = vmatprep.subr.bf16.mxu0 %v3898
  %4211 = vmatpush2.bf16.msra.mxu0 %v3897
  %4212 = vmatprep.subr.bf16.mxu0 %v3896
  %4213 = vmatpush2.bf16.msra.mxu0 %v3895
  %4214 = vmatprep.subr.bf16.mxu0 %v3894
  %4215 = vmatpush2.bf16.msra.mxu0 %v3893
  %4216 = vmatprep.subr.bf16.mxu0 %v3892
  %4217 = vmatpush2.bf16.msra.mxu0 %v3891
  %4218 = vmatprep.subr.bf16.mxu0 %v3890
  %4219 = vmatpush2.bf16.msra.mxu0 %v3889
  %4220 = vmatprep.mubr.bf16.mxu0 %v3334
  %4221 = vmatmul.mubr.bf16.gmra.mxu0 %v3333
  %v4222 = vpop.f32.mrf.mxu0
  %v4223 = vadd.f32 %v4182, %v4222
  %v4224 = vpop.f32.mrf.mxu0
  %v4225 = vadd.f32 %v4184, %v4224
  %v4226 = vpop.f32.mrf.mxu0
  %v4227 = vpop.f32.mrf.mxu0
  %4228 = vdwg.mxu0
  %4229 = vmatprep.subr.bf16.mxu0 %v3920
  %4230 = vmatpush1.bf16.msra.mxu0 %v3919
  %4231 = vmatprep.subr.bf16.mxu0 %v3918
  %4232 = vmatpush1.bf16.msra.mxu0 %v3917
  %4233 = vmatprep.subr.bf16.mxu0 %v3916
  %4234 = vmatpush1.bf16.msra.mxu0 %v3915
  %4235 = vmatprep.subr.bf16.mxu0 %v3914
  %4236 = vmatpush1.bf16.msra.mxu0 %v3913
  %4237 = vmatprep.subr.bf16.mxu0 %v3912
  %4238 = vmatpush1.bf16.msra.mxu0 %v3911
  %4239 = vmatprep.subr.bf16.mxu0 %v3910
  %4240 = vmatpush1.bf16.msra.mxu0 %v3909
  %4241 = vmatprep.subr.bf16.mxu0 %v3908
  %4242 = vmatpush1.bf16.msra.mxu0 %v3907
  %4243 = vmatprep.subr.bf16.mxu0 %v3906
  %4244 = vmatpush1.bf16.msra.mxu0 %v3905
  %4245 = vmatprep.subr.bf16.mxu0 0
  %4246 = vmatpush2.bf16.msra.mxu0 0
  %4247 = vmatprep.subr.bf16.mxu0 0
  %4248 = vmatpush2.bf16.msra.mxu0 0
  %4249 = vmatprep.subr.bf16.mxu0 0
  %4250 = vmatpush2.bf16.msra.mxu0 0
  %4251 = vmatprep.subr.bf16.mxu0 0
  %4252 = vmatpush2.bf16.msra.mxu0 0
  %4253 = vmatprep.subr.bf16.mxu0 0
  %4254 = vmatpush2.bf16.msra.mxu0 0
  %4255 = vmatprep.subr.bf16.mxu0 0
  %4256 = vmatpush2.bf16.msra.mxu0 0
  %4257 = vmatprep.subr.bf16.mxu0 0
  %4258 = vmatpush2.bf16.msra.mxu0 0
  %4259 = vmatprep.subr.bf16.mxu0 0
  %4260 = vmatpush2.bf16.msra.mxu0 0
  %4261 = vmatprep.mubr.bf16.mxu0 0
  %4262 = vmatmul.mubr.bf16.gmra.mxu0 %v3335
  %v4263 = vpop.f32.mrf.mxu0
  %v4264 = vadd.f32 %v4223, %v4263
  %v4265 = vpop.f32.mrf.mxu0
  %v4266 = vadd.f32 %v4225, %v4265
  %v4267 = vpop.f32.mrf.mxu0
  %v4268 = vpop.f32.mrf.mxu0
  %4269 = vdwg.mxu0
  %s4270 = scalar_lea.vmem %s5, 4
  %v4271 = vld [vmem:[%s4270] ss:$8 sm:$0x3]
  %s4272 = scalar_lea.vmem %s5, 5
  %v4273 = vld [vmem:[%s4272] ss:$8 sm:$0x3]
  %v4274 = vrot.slane %v4264, 4
  %v4275 = vadd.f32 %v4264, %v4274
  %v4276 = vrot.slane %v4275, 2
  %v4277 = vadd.f32 %v4275, %v4276
  %v4278 = vrot.slane %v4277, 1
  %v4279 = vadd.f32 %v4277, %v4278
  %v4280 = vrot.slane %v4266, 4
  %v4281 = vadd.f32 %v4266, %v4280
  %v4282 = vrot.slane %v4281, 2
  %v4283 = vadd.f32 %v4281, %v4282
  %v4284 = vrot.slane %v4283, 1
  %v4285 = vadd.f32 %v4283, %v4284
  %v4286 = vmul.f32 %v4264, %v4264
  %v4287 = vmul.f32 %v4266, %v4266
  %v4288 = vrot.slane %v4286, 4
  %v4289 = vadd.f32 %v4286, %v4288
  %v4290 = vrot.slane %v4289, 2
  %v4291 = vadd.f32 %v4289, %v4290
  %v4292 = vrot.slane %v4291, 1
  %v4293 = vadd.f32 %v4291, %v4292
  %v4294 = vrot.slane %v4287, 4
  %v4295 = vadd.f32 %v4287, %v4294
  %v4296 = vrot.slane %v4295, 2
  %v4297 = vadd.f32 %v4295, %v4296
  %v4298 = vrot.slane %v4297, 1
  %v4299 = vadd.f32 %v4297, %v4298
  %v4300 = vmul.f32 %v4279, 0.125
  %v4301 = vmul.f32 %v4285, 0.125
  %v4302 = vmul.f32 %v4293, 0.125
  %v4303 = vmul.f32 %v4299, 0.125
  %v4304 = vmul.f32 %v4300, %v4300
  %v4305 = vmul.f32 %v4301, %v4301
  %v4306 = vsub.f32 %v4302, %v4304
  %v4307 = vsub.f32 %v4303, %v4305
  %v4308 = vadd.f32 %v4306, 1e-05
  %v4309 = vadd.f32 %v4307, 1e-05
  %v4310 = vrsqrt.pop %v4308
  %v4311 = vrsqrt.pop %v4309
  %v4313 = vlaneseq
  %v4314 = vshrl.u32 %v4313, 7
  %v4315 = vsub.s32 0, %v4314
  %v4316 = vrot.slane %v4271, %v4315
  %v4317 = vlaneseq
  %v4318 = vshrl.u32 %v4317, 7
  %v4319 = vsub.s32 1, %v4318
  %v4320 = vrot.slane %v4271, %v4319
  %v4323 = vmul.f32 %v4310, %v4316
  %v4324 = vmul.f32 %v4311, %v4320
  %v4325 = vmul.f32 %v4300, %v4323
  %v4326 = vmul.f32 %v4301, %v4324
  %v4329 = vcombine.low %v4325, %v4326
  %v4331 = vunpack.c.l.s4 1966171168
  %v4332 = vunpack.c.0.s8 %v4331
  %v4333 = vlaneseq
  %v4334 = vshrl.u32 %v4333, 7
  %v4335 = vsub.s32 %v4332, %v4334
  %v4336 = vrot.slane %v4329, %v4335
  %v4338 = vunpack.c.l.s4 1966171168
  %v4339 = vunpack.c.0.s8 %v4338
  %v4340 = vlaneseq
  %v4341 = vshrl.u32 %v4340, 7
  %v4342 = vsub.s32 %v4339, %v4341
  %v4343 = vrot.slane %v4336, %v4342
  %v4345 = vsub.f32 %v4273, %v4343
  %v4346 = vlaneseq
  %v4347 = vshrl.u32 %v4346, 7
  %v4348 = vsub.s32 0, %v4347
  %v4349 = vrot.slane %v4323, %v4348
  %v4350 = vlaneseq
  %v4351 = vshrl.u32 %v4350, 7
  %v4352 = vsub.s32 0, %v4351
  %v4353 = vrot.slane %v4324, %v4352
  %v4354 = vmul.f32 %v4264, %v4349
  %v4355 = vmul.f32 %v4266, %v4353
  %v4357 = vlaneseq
  %v4358 = vshrl.u32 %v4357, 7
  %v4359 = vsub.s32 0, %v4358
  %v4360 = vrot.slane %v4345, %v4359
  %v4361 = vlaneseq
  %v4362 = vshrl.u32 %v4361, 7
  %v4363 = vsub.s32 1, %v4362
  %v4364 = vrot.slane %v4345, %v4363
  %v4367 = vadd.f32 %v4354, %v4360
  %v4368 = vadd.f32 %v4355, %v4364
  %v4369 = vmax.f32 %v4367, 0.0
  %v4370 = vmax.f32 %v4368, 0.0
  %4371 = vst [vmem:[%s6] sm:$0xff] %v4369
  %4372 = vst [vmem:[%s6 + $0x8] sm:$0xff] %v4370
  // Predicated region
  $region26: #{forward.1} parent=0 // pred_check
    _
  $region27: #{forward.1} parent=0 // pred_check_branch
    %4374 = sbr.rel (0) target = $region29
  $region28: #{forward.1} parent=0 // pred_region
    _
  $region29: #{forward.1} parent=0 // pred_fallthru
    _
  // Predicated region
  $region30: #{forward.1} parent=0 // pred_check
    _
  $region31: #{forward.1} parent=0 // pred_check_branch
    %4376 = sbr.rel (0) target = $region33
  $region32: #{forward.1} parent=0 // pred_region
    _
  $region33: #{forward.1} parent=0 // pred_fallthru
    _

</llo_original>
